<compile_context>
chip_gen: v7x
topology: tpu7x:2x2x1
jax: 0.10.0
libtpu: 0.0.40
codegen_flags: <defaults>
</compile_context>

<pallas_src>
import functools
import math

import jax
import jax.numpy as jnp
from jax.experimental import pallas as pl
from jax.experimental.pallas import tpu as pltpu

KSIZE = 7
PAD = KSIZE // 2
LANE = 128
SUB = 8            # f32 sublanes per vreg -> channel-chunk width for both passes


def _round_up(n, m):
    return ((n + m - 1) // m) * m


def _spatial_attention_kernel(w_ref, x_ref, o_ref, pad_ref, *, Bt, C, H, W):
    # w_ref:   SMEM f32[2*7*7]             flattened OIHW conv weight (O=1, no bias)
    # x_ref:   VMEM (Bt, C, H*W)           Bt batch elements, lane-dense last dim
    # o_ref:   VMEM (Bt, C, H*W)
    # pad_ref: VMEM (14, H*W + 2*halo) f32 rows c*7+kw hold the dj-shifted,
    #          column-masked pooled maps with zero halos (vertical "same" pad)
    HW = H * W
    halo = _round_up(PAD * W, LANE)
    nfull = C // SUB
    rem = C - nfull * SUB

    # Zero only the halo columns once per grid step; the data region is fully
    # overwritten per batch element and the halos are never written.
    pad_ref[:, 0:halo] = jnp.zeros((2 * KSIZE, halo), jnp.float32)
    pad_ref[:, halo + HW:halo + HW + halo] = jnp.zeros((2 * KSIZE, halo), jnp.float32)

    # Output-pixel column index (for masking horizontal out-of-bounds taps).
    col = jax.lax.broadcasted_iota(jnp.int32, (1, HW), 1) % W

    for b in range(Bt):                                   # Bt is small & static
        # ---- Pass 1: channel mean & max, 8 channels (sublanes) at a time. ----
        s = jnp.zeros((1, HW), jnp.float32)
        m = jnp.full((1, HW), -jnp.inf, jnp.float32)
        if nfull > 0:
            def p1_body(i, carry):
                s8, m8 = carry
                c0 = pl.multiple_of(i * SUB, SUB)
                slab = x_ref[b, pl.ds(c0, SUB), :].astype(jnp.float32)
                return s8 + slab, jnp.maximum(m8, slab)
            s8 = jnp.zeros((SUB, HW), jnp.float32)
            m8 = jnp.full((SUB, HW), -jnp.inf, jnp.float32)
            s8, m8 = jax.lax.fori_loop(0, nfull, p1_body, (s8, m8))
            s = jnp.sum(s8, axis=0, keepdims=True)        # sublane reduce -> XLU
            m = jnp.max(m8, axis=0, keepdims=True)
        if rem > 0:
            slab = x_ref[b, nfull * SUB:C, :].astype(jnp.float32)
            s = s + jnp.sum(slab, axis=0, keepdims=True)
            m = jnp.maximum(m, jnp.max(slab, axis=0, keepdims=True))
        pooled = (s * (1.0 / C), m)                       # (avg, max), each (1, HW)

        # ---- Stage pooled maps: centre (dj=0) rows first, then 6 dj-shifted,
        # column-masked copies of each (14 rows total, only 12 selects). ----
        for c in range(2):
            r0 = c * KSIZE + PAD
            pad_ref[r0:r0 + 1, halo:halo + HW] = pooled[c]
        for kw in range(KSIZE):
            dj = kw - PAD
            if dj == 0:
                continue
            col_ok = (col >= -dj) & (col < W - dj)        # regenerated per dj
            for c in range(2):
                src = c * KSIZE + PAD
                dst = c * KSIZE + kw
                tap = pad_ref[src:src + 1, halo + dj:halo + dj + HW]
                pad_ref[dst:dst + 1, halo:halo + HW] = jnp.where(col_ok, tap, 0.0)

        # ---- 7x7 "same" conv: 98 taps, pure load + scalar-mul + add. ----
        acc = jnp.zeros((1, HW), jnp.float32)
        for kh in range(KSIZE):
            di = kh - PAD
            start = halo + di * W                         # zero halo = vertical pad
            for c in range(2):
                for kw in range(KSIZE):
                    r = c * KSIZE + kw
                    tap = pad_ref[r:r + 1, start:start + HW]
                    wv = w_ref[c * KSIZE * KSIZE + kh * KSIZE + kw]   # SMEM scalar
                    acc = acc + wv * tap
        attn = jax.nn.sigmoid(acc)                        # (1, HW) f32

        # ---- Pass 2: rescale x by attn, 8-channel slabs, hoisted broadcast. ----
        if nfull > 0:
            attn8 = jnp.broadcast_to(attn, (SUB, HW))     # hoisted out of the loop
            def p2_body(i, carry):
                c0 = pl.multiple_of(i * SUB, SUB)
                slab = x_ref[b, pl.ds(c0, SUB), :].astype(jnp.float32)
                o_ref[b, pl.ds(c0, SUB), :] = (slab * attn8).astype(o_ref.dtype)
                return carry
            jax.lax.fori_loop(0, nfull, p2_body, 0)
        if rem > 0:
            attn_r = jnp.broadcast_to(attn, (rem, HW))
            slab = x_ref[b, nfull * SUB:C, :].astype(jnp.float32)
            o_ref[b, nfull * SUB:C, :] = (slab * attn_r).astype(o_ref.dtype)


def _pick_bt(B, C, HW, itemsize, target_bytes=2 * 1024 * 1024):
    """Largest divisor of B such that one input block stays <= ~2 MiB."""
    per = C * HW * itemsize
    best = 1
    for bt in range(1, B + 1):
        if B % bt == 0 and bt * per <= target_bytes:
            best = bt
    return best


def spatial_attention(x, weight):
    """x: (B, C, H, W); weight: (1, 2, 7, 7) OIHW conv weight, bias-free."""
    B, C, H, W = x.shape
    HW = H * W
    halo = _round_up(PAD * W, LANE)
    Bt = _pick_bt(B, C, HW, x.dtype.itemsize)

    x_flat = x.reshape(B, C, HW)                        # free reshape: lane-dense last dim
    w_flat = weight.reshape(-1).astype(jnp.float32)     # index = c*49 + kh*7 + kw

    kernel = functools.partial(_spatial_attention_kernel, Bt=Bt, C=C, H=H, W=W)

    block_bytes = Bt * C * HW * x.dtype.itemsize
    scratch_bytes = 2 * KSIZE * (HW + 2 * halo) * 4
    # in + out, double-buffered, + scratch + headroom; capped at the v6e/v7x
    # default scoped limit (safe on all generations, raises v5e's 16 MiB default).
    vmem_limit = int(min(32 * 1024 * 1024,
                         max(8 * 1024 * 1024,
                             4 * block_bytes + scratch_bytes + 2 * 1024 * 1024)))

    out_flat = pl.pallas_call(
        kernel,
        out_shape=jax.ShapeDtypeStruct((B, C, HW), x.dtype),
        grid_spec=pltpu.PrefetchScalarGridSpec(
            num_scalar_prefetch=0,
            grid=(B // Bt,),
            in_specs=[
                pl.BlockSpec(memory_space=pltpu.MemorySpace.SMEM),      # conv weight
                pl.BlockSpec((Bt, C, HW), lambda b: (b, 0, 0)),         # x block
            ],
            out_specs=pl.BlockSpec((Bt, C, HW), lambda b: (b, 0, 0)),
            scratch_shapes=[pltpu.VMEM((2 * KSIZE, HW + 2 * halo), jnp.float32)],
        ),
        compiler_params=pltpu.CompilerParams(
            dimension_semantics=("parallel",),          # batch tiles independent
            vmem_limit_bytes=vmem_limit,
        ),
    )(w_flat, x_flat)

    return out_flat.reshape(B, C, H, W)


def reference(x, weight):
    avg = jnp.mean(x, axis=1, keepdims=True)
    mx = jnp.max(x, axis=1, keepdims=True)
    m = jnp.concatenate([avg, mx], axis=1)
    conv = jax.lax.conv_general_dilated(
        m, weight, window_strides=(1, 1), padding=[(PAD, PAD), (PAD, PAD)],
        dimension_numbers=("NCHW", "OIHW", "NCHW"))
    return jax.nn.sigmoid(conv) * x


if __name__ == "__main__":
    key = jax.random.PRNGKey(0)
    kx, kw = jax.random.split(key)

    B, C, H, W = 2, 4, 16, 16
    x = jax.random.normal(kx, (B, C, H, W), dtype=jnp.float32)

    # Deterministic conv weight (mimics PyTorch kaiming-uniform bound 1/sqrt(fan_in)).
    fan_in = 2 * KSIZE * KSIZE
    bound = 1.0 / math.sqrt(fan_in)
    weight = jax.random.uniform(kw, (1, 2, KSIZE, KSIZE),
                                minval=-bound, maxval=bound, dtype=jnp.float32)

    out = spatial_attention(x, weight)
    out = jax.block_until_ready(out)

    ref = reference(x, weight)
    assert out.shape == (B, C, H, W)
    assert jnp.max(jnp.abs(out - ref)) < 1e-4, "mismatch vs reference"

    print("KERNEL_OK")
</pallas_src>

<mosaic_0001>
module attributes {stable_mosaic.version = 11 : i64} {
  func.func @_spatial_attention_kernel(%arg0: i32, %arg1: memref<98xf32, #tpu.memory_space<smem>>, %arg2: memref<2x4x256xf32, #tpu.memory_space<vmem>>, %arg3: memref<2x4x256xf32, #tpu.memory_space<vmem>>, %arg4: memref<14x512xf32, #tpu.memory_space<vmem>>) attributes {dimension_semantics = [#tpu.dimension_semantics<parallel>], iteration_bounds = array<i64: 1>, scalar_prefetch = 0 : i64, scratch_operands = 1 : i64, tpu.core_type = #tpu.core_type<tc>, window_params = [{transform_indices = @transform_0, window_bounds = array<i64: 98>}, {transform_indices = @transform_1, window_bounds = array<i64: 2, 4, 256>}, {transform_indices = @transform_2, window_bounds = array<i64: 2, 4, 256>}]} {
    %cst = arith.constant 0.000000e+00 : f32
    %0 = vector.broadcast %cst : f32 to vector<14x128xf32>
    %c0 = arith.constant 0 : index
    %c0_0 = arith.constant 0 : index
    %1 = vector.load %arg4[%c0, %c0_0] : memref<14x512xf32, #tpu.memory_space<vmem>>, vector<14x128xf32>
    tpu.vector_store %arg4[%c0, %c0_0], %0 {strides = array<i32>} : memref<14x512xf32, #tpu.memory_space<vmem>>, vector<14x128xf32>,
    %cst_1 = arith.constant 0.000000e+00 : f32
    %2 = vector.broadcast %cst_1 : f32 to vector<14x128xf32>
    %c0_2 = arith.constant 0 : index
    %c384 = arith.constant 384 : index
    %3 = vector.load %arg4[%c0_2, %c384] : memref<14x512xf32, #tpu.memory_space<vmem>>, vector<14x128xf32>
    tpu.vector_store %arg4[%c0_2, %c384], %2 {strides = array<i32>} : memref<14x512xf32, #tpu.memory_space<vmem>>, vector<14x128xf32>,
    %4 = tpu.iota {dimensions = array<i32: 1>} : vector<1x256xi32>
    %c16_i32 = arith.constant 16 : i32
    %c0_i32 = arith.constant 0 : i32
    %5 = arith.cmpi eq, %c16_i32, %c0_i32 : i32
    %c1_i32 = arith.constant 1 : i32
    %6 = arith.select %5, %c1_i32, %c16_i32 : i32
    %7 = vector.broadcast %6 : i32 to vector<1x256xi32>
    %8 = arith.remsi %4, %7 : vector<1x256xi32>
    %c0_i32_3 = arith.constant 0 : i32
    %9 = vector.broadcast %c0_i32_3 : i32 to vector<1x256xi32>
    %10 = arith.cmpi ne, %8, %9 : vector<1x256xi32>
    %c0_i32_4 = arith.constant 0 : i32
    %11 = vector.broadcast %c0_i32_4 : i32 to vector<1x256xi32>
    %12 = arith.cmpi slt, %8, %11 : vector<1x256xi32>
    %c0_i32_5 = arith.constant 0 : i32
    %13 = arith.cmpi slt, %6, %c0_i32_5 : i32
    %14 = vector.broadcast %13 : i1 to vector<1x256xi1>
    %15 = vector.broadcast %14 : vector<1x256xi1> to vector<1x256xi1>
    %16 = arith.xori %12, %15 : vector<1x256xi1>
    %17 = arith.andi %16, %10 : vector<1x256xi1>
    %18 = vector.broadcast %6 : i32 to vector<1x256xi32>
    %19 = arith.addi %8, %18 : vector<1x256xi32>
    %20 = arith.select %17, %19, %8 : vector<1x256xi1>, vector<1x256xi32>
    %cst_6 = arith.constant 0.000000e+00 : f32
    %21 = vector.broadcast %cst_6 : f32 to vector<1x256xf32>
    %cst_7 = arith.constant 0xFF800000 : f32
    %22 = vector.broadcast %cst_7 : f32 to vector<1x256xf32>
    %c0_8 = arith.constant 0 : index
    %c0_9 = arith.constant 0 : index
    %c0_10 = arith.constant 0 : index
    %23 = vector.load %arg2[%c0_8, %c0_9, %c0_10] : memref<2x4x256xf32, #tpu.memory_space<vmem>>, vector<1x4x256xf32>
    %24 = vector.shape_cast %23 : vector<1x4x256xf32> to vector<4x256xf32>
    %cst_11 = arith.constant dense<0.000000e+00> : vector<256xf32>
    %25 = vector.multi_reduction <add>, %24, %cst_11 [0] : vector<4x256xf32> to vector<256xf32>
    %26 = vector.shape_cast %25 : vector<256xf32> to vector<1x256xf32>
    %27 = arith.addf %21, %26 : vector<1x256xf32>
    %cst_12 = arith.constant dense<0xFF800000> : vector<256xf32>
    %28 = vector.multi_reduction <maximumf>, %24, %cst_12 [0] : vector<4x256xf32> to vector<256xf32>
    %29 = vector.shape_cast %28 : vector<256xf32> to vector<1x256xf32>
    %30 = arith.maximumf %22, %29 : vector<1x256xf32>
    %cst_13 = arith.constant 2.500000e-01 : f32
    %31 = vector.broadcast %cst_13 : f32 to vector<1x256xf32>
    %32 = arith.mulf %27, %31 : vector<1x256xf32>
    %c3 = arith.constant 3 : index
    %c128 = arith.constant 128 : index
    %33 = vector.load %arg4[%c3, %c128] : memref<14x512xf32, #tpu.memory_space<vmem>>, vector<1x256xf32>
    tpu.vector_store %arg4[%c3, %c128], %32 {strides = array<i32>} : memref<14x512xf32, #tpu.memory_space<vmem>>, vector<1x256xf32>,
    %c10 = arith.constant 10 : index
    %c128_14 = arith.constant 128 : index
    %34 = vector.load %arg4[%c10, %c128_14] : memref<14x512xf32, #tpu.memory_space<vmem>>, vector<1x256xf32>
    tpu.vector_store %arg4[%c10, %c128_14], %30 {strides = array<i32>} : memref<14x512xf32, #tpu.memory_space<vmem>>, vector<1x256xf32>,
    %c3_i32 = arith.constant 3 : i32
    %35 = vector.broadcast %c3_i32 : i32 to vector<1x256xi32>
    %36 = arith.cmpi sge, %20, %35 : vector<1x256xi32>
    %c19_i32 = arith.constant 19 : i32
    %37 = vector.broadcast %c19_i32 : i32 to vector<1x256xi32>
    %38 = arith.cmpi slt, %20, %37 : vector<1x256xi32>
    %39 = arith.andi %36, %38 : vector<1x256xi1>
    %c3_15 = arith.constant 3 : index
    %c125 = arith.constant 125 : index
    %40 = vector.load %arg4[%c3_15, %c125] : memref<14x512xf32, #tpu.memory_space<vmem>>, vector<1x256xf32>
    %cst_16 = arith.constant 0.000000e+00 : f32
    %41 = vector.broadcast %cst_16 : f32 to vector<1x256xf32>
    %42 = arith.select %39, %40, %41 : vector<1x256xi1>, vector<1x256xf32>
    %c0_17 = arith.constant 0 : index
    %c128_18 = arith.constant 128 : index
    %43 = vector.load %arg4[%c0_17, %c128_18] : memref<14x512xf32, #tpu.memory_space<vmem>>, vector<1x256xf32>
    tpu.vector_store %arg4[%c0_17, %c128_18], %42 {strides = array<i32>} : memref<14x512xf32, #tpu.memory_space<vmem>>, vector<1x256xf32>,
    %c10_19 = arith.constant 10 : index
    %c125_20 = arith.constant 125 : index
    %44 = vector.load %arg4[%c10_19, %c125_20] : memref<14x512xf32, #tpu.memory_space<vmem>>, vector<1x256xf32>
    %cst_21 = arith.constant 0.000000e+00 : f32
    %45 = vector.broadcast %cst_21 : f32 to vector<1x256xf32>
    %46 = arith.select %39, %44, %45 : vector<1x256xi1>, vector<1x256xf32>
    %c7 = arith.constant 7 : index
    %c128_22 = arith.constant 128 : index
    %47 = vector.load %arg4[%c7, %c128_22] : memref<14x512xf32, #tpu.memory_space<vmem>>, vector<1x256xf32>
    tpu.vector_store %arg4[%c7, %c128_22], %46 {strides = array<i32>} : memref<14x512xf32, #tpu.memory_space<vmem>>, vector<1x256xf32>,
    %c2_i32 = arith.constant 2 : i32
    %48 = vector.broadcast %c2_i32 : i32 to vector<1x256xi32>
    %49 = arith.cmpi sge, %20, %48 : vector<1x256xi32>
    %c18_i32 = arith.constant 18 : i32
    %50 = vector.broadcast %c18_i32 : i32 to vector<1x256xi32>
    %51 = arith.cmpi slt, %20, %50 : vector<1x256xi32>
    %52 = arith.andi %49, %51 : vector<1x256xi1>
    %c3_23 = arith.constant 3 : index
    %c126 = arith.constant 126 : index
    %53 = vector.load %arg4[%c3_23, %c126] : memref<14x512xf32, #tpu.memory_space<vmem>>, vector<1x256xf32>
    %cst_24 = arith.constant 0.000000e+00 : f32
    %54 = vector.broadcast %cst_24 : f32 to vector<1x256xf32>
    %55 = arith.select %52, %53, %54 : vector<1x256xi1>, vector<1x256xf32>
    %c1 = arith.constant 1 : index
    %c128_25 = arith.constant 128 : index
    %56 = vector.load %arg4[%c1, %c128_25] : memref<14x512xf32, #tpu.memory_space<vmem>>, vector<1x256xf32>
    tpu.vector_store %arg4[%c1, %c128_25], %55 {strides = array<i32>} : memref<14x512xf32, #tpu.memory_space<vmem>>, vector<1x256xf32>,
    %c10_26 = arith.constant 10 : index
    %c126_27 = arith.constant 126 : index
    %57 = vector.load %arg4[%c10_26, %c126_27] : memref<14x512xf32, #tpu.memory_space<vmem>>, vector<1x256xf32>
    %cst_28 = arith.constant 0.000000e+00 : f32
    %58 = vector.broadcast %cst_28 : f32 to vector<1x256xf32>
    %59 = arith.select %52, %57, %58 : vector<1x256xi1>, vector<1x256xf32>
    %c8 = arith.constant 8 : index
    %c128_29 = arith.constant 128 : index
    %60 = vector.load %arg4[%c8, %c128_29] : memref<14x512xf32, #tpu.memory_space<vmem>>, vector<1x256xf32>
    tpu.vector_store %arg4[%c8, %c128_29], %59 {strides = array<i32>} : memref<14x512xf32, #tpu.memory_space<vmem>>, vector<1x256xf32>,
    %c1_i32_30 = arith.constant 1 : i32
    %61 = vector.broadcast %c1_i32_30 : i32 to vector<1x256xi32>
    %62 = arith.cmpi sge, %20, %61 : vector<1x256xi32>
    %c17_i32 = arith.constant 17 : i32
    %63 = vector.broadcast %c17_i32 : i32 to vector<1x256xi32>
    %64 = arith.cmpi slt, %20, %63 : vector<1x256xi32>
    %65 = arith.andi %62, %64 : vector<1x256xi1>
    %c3_31 = arith.constant 3 : index
    %c127 = arith.constant 127 : index
    %66 = vector.load %arg4[%c3_31, %c127] : memref<14x512xf32, #tpu.memory_space<vmem>>, vector<1x256xf32>
    %cst_32 = arith.constant 0.000000e+00 : f32
    %67 = vector.broadcast %cst_32 : f32 to vector<1x256xf32>
    %68 = arith.select %65, %66, %67 : vector<1x256xi1>, vector<1x256xf32>
    %c2 = arith.constant 2 : index
    %c128_33 = arith.constant 128 : index
    %69 = vector.load %arg4[%c2, %c128_33] : memref<14x512xf32, #tpu.memory_space<vmem>>, vector<1x256xf32>
    tpu.vector_store %arg4[%c2, %c128_33], %68 {strides = array<i32>} : memref<14x512xf32, #tpu.memory_space<vmem>>, vector<1x256xf32>,
    %c10_34 = arith.constant 10 : index
    %c127_35 = arith.constant 127 : index
    %70 = vector.load %arg4[%c10_34, %c127_35] : memref<14x512xf32, #tpu.memory_space<vmem>>, vector<1x256xf32>
    %cst_36 = arith.constant 0.000000e+00 : f32
    %71 = vector.broadcast %cst_36 : f32 to vector<1x256xf32>
    %72 = arith.select %65, %70, %71 : vector<1x256xi1>, vector<1x256xf32>
    %c9 = arith.constant 9 : index
    %c128_37 = arith.constant 128 : index
    %73 = vector.load %arg4[%c9, %c128_37] : memref<14x512xf32, #tpu.memory_space<vmem>>, vector<1x256xf32>
    tpu.vector_store %arg4[%c9, %c128_37], %72 {strides = array<i32>} : memref<14x512xf32, #tpu.memory_space<vmem>>, vector<1x256xf32>,
    %c-1_i32 = arith.constant -1 : i32
    %74 = vector.broadcast %c-1_i32 : i32 to vector<1x256xi32>
    %75 = arith.cmpi sge, %20, %74 : vector<1x256xi32>
    %c15_i32 = arith.constant 15 : i32
    %76 = vector.broadcast %c15_i32 : i32 to vector<1x256xi32>
    %77 = arith.cmpi slt, %20, %76 : vector<1x256xi32>
    %78 = arith.andi %75, %77 : vector<1x256xi1>
    %c3_38 = arith.constant 3 : index
    %c129 = arith.constant 129 : index
    %79 = vector.load %arg4[%c3_38, %c129] : memref<14x512xf32, #tpu.memory_space<vmem>>, vector<1x256xf32>
    %cst_39 = arith.constant 0.000000e+00 : f32
    %80 = vector.broadcast %cst_39 : f32 to vector<1x256xf32>
    %81 = arith.select %78, %79, %80 : vector<1x256xi1>, vector<1x256xf32>
    %c4 = arith.constant 4 : index
    %c128_40 = arith.constant 128 : index
    %82 = vector.load %arg4[%c4, %c128_40] : memref<14x512xf32, #tpu.memory_space<vmem>>, vector<1x256xf32>
    tpu.vector_store %arg4[%c4, %c128_40], %81 {strides = array<i32>} : memref<14x512xf32, #tpu.memory_space<vmem>>, vector<1x256xf32>,
    %c10_41 = arith.constant 10 : index
    %c129_42 = arith.constant 129 : index
    %83 = vector.load %arg4[%c10_41, %c129_42] : memref<14x512xf32, #tpu.memory_space<vmem>>, vector<1x256xf32>
    %cst_43 = arith.constant 0.000000e+00 : f32
    %84 = vector.broadcast %cst_43 : f32 to vector<1x256xf32>
    %85 = arith.select %78, %83, %84 : vector<1x256xi1>, vector<1x256xf32>
    %c11 = arith.constant 11 : index
    %c128_44 = arith.constant 128 : index
    %86 = vector.load %arg4[%c11, %c128_44] : memref<14x512xf32, #tpu.memory_space<vmem>>, vector<1x256xf32>
    tpu.vector_store %arg4[%c11, %c128_44], %85 {strides = array<i32>} : memref<14x512xf32, #tpu.memory_space<vmem>>, vector<1x256xf32>,
    %c-2_i32 = arith.constant -2 : i32
    %87 = vector.broadcast %c-2_i32 : i32 to vector<1x256xi32>
    %88 = arith.cmpi sge, %20, %87 : vector<1x256xi32>
    %c14_i32 = arith.constant 14 : i32
    %89 = vector.broadcast %c14_i32 : i32 to vector<1x256xi32>
    %90 = arith.cmpi slt, %20, %89 : vector<1x256xi32>
    %91 = arith.andi %88, %90 : vector<1x256xi1>
    %c3_45 = arith.constant 3 : index
    %c130 = arith.constant 130 : index
    %92 = vector.load %arg4[%c3_45, %c130] : memref<14x512xf32, #tpu.memory_space<vmem>>, vector<1x256xf32>
    %cst_46 = arith.constant 0.000000e+00 : f32
    %93 = vector.broadcast %cst_46 : f32 to vector<1x256xf32>
    %94 = arith.select %91, %92, %93 : vector<1x256xi1>, vector<1x256xf32>
    %c5 = arith.constant 5 : index
    %c128_47 = arith.constant 128 : index
    %95 = vector.load %arg4[%c5, %c128_47] : memref<14x512xf32, #tpu.memory_space<vmem>>, vector<1x256xf32>
    tpu.vector_store %arg4[%c5, %c128_47], %94 {strides = array<i32>} : memref<14x512xf32, #tpu.memory_space<vmem>>, vector<1x256xf32>,
    %c10_48 = arith.constant 10 : index
    %c130_49 = arith.constant 130 : index
    %96 = vector.load %arg4[%c10_48, %c130_49] : memref<14x512xf32, #tpu.memory_space<vmem>>, vector<1x256xf32>
    %cst_50 = arith.constant 0.000000e+00 : f32
    %97 = vector.broadcast %cst_50 : f32 to vector<1x256xf32>
    %98 = arith.select %91, %96, %97 : vector<1x256xi1>, vector<1x256xf32>
    %c12 = arith.constant 12 : index
    %c128_51 = arith.constant 128 : index
    %99 = vector.load %arg4[%c12, %c128_51] : memref<14x512xf32, #tpu.memory_space<vmem>>, vector<1x256xf32>
    tpu.vector_store %arg4[%c12, %c128_51], %98 {strides = array<i32>} : memref<14x512xf32, #tpu.memory_space<vmem>>, vector<1x256xf32>,
    %c-3_i32 = arith.constant -3 : i32
    %100 = vector.broadcast %c-3_i32 : i32 to vector<1x256xi32>
    %101 = arith.cmpi sge, %20, %100 : vector<1x256xi32>
    %c13_i32 = arith.constant 13 : i32
    %102 = vector.broadcast %c13_i32 : i32 to vector<1x256xi32>
    %103 = arith.cmpi slt, %20, %102 : vector<1x256xi32>
    %104 = arith.andi %101, %103 : vector<1x256xi1>
    %c3_52 = arith.constant 3 : index
    %c131 = arith.constant 131 : index
    %105 = vector.load %arg4[%c3_52, %c131] : memref<14x512xf32, #tpu.memory_space<vmem>>, vector<1x256xf32>
    %cst_53 = arith.constant 0.000000e+00 : f32
    %106 = vector.broadcast %cst_53 : f32 to vector<1x256xf32>
    %107 = arith.select %104, %105, %106 : vector<1x256xi1>, vector<1x256xf32>
    %c6 = arith.constant 6 : index
    %c128_54 = arith.constant 128 : index
    %108 = vector.load %arg4[%c6, %c128_54] : memref<14x512xf32, #tpu.memory_space<vmem>>, vector<1x256xf32>
    tpu.vector_store %arg4[%c6, %c128_54], %107 {strides = array<i32>} : memref<14x512xf32, #tpu.memory_space<vmem>>, vector<1x256xf32>,
    %c10_55 = arith.constant 10 : index
    %c131_56 = arith.constant 131 : index
    %109 = vector.load %arg4[%c10_55, %c131_56] : memref<14x512xf32, #tpu.memory_space<vmem>>, vector<1x256xf32>
    %cst_57 = arith.constant 0.000000e+00 : f32
    %110 = vector.broadcast %cst_57 : f32 to vector<1x256xf32>
    %111 = arith.select %104, %109, %110 : vector<1x256xi1>, vector<1x256xf32>
    %c13 = arith.constant 13 : index
    %c128_58 = arith.constant 128 : index
    %112 = vector.load %arg4[%c13, %c128_58] : memref<14x512xf32, #tpu.memory_space<vmem>>, vector<1x256xf32>
    tpu.vector_store %arg4[%c13, %c128_58], %111 {strides = array<i32>} : memref<14x512xf32, #tpu.memory_space<vmem>>, vector<1x256xf32>,
    %cst_59 = arith.constant 0.000000e+00 : f32
    %113 = vector.broadcast %cst_59 : f32 to vector<1x256xf32>
    %c0_60 = arith.constant 0 : index
    %c80 = arith.constant 80 : index
    %114 = vector.load %arg4[%c0_60, %c80] : memref<14x512xf32, #tpu.memory_space<vmem>>, vector<1x256xf32>
    %c0_61 = arith.constant 0 : index
    %115 = memref.load %arg1[%c0_61] : memref<98xf32, #tpu.memory_space<smem>>
    %116 = vector.broadcast %115 : f32 to vector<1x256xf32>
    %117 = arith.mulf %116, %114 : vector<1x256xf32>
    %118 = arith.addf %113, %117 : vector<1x256xf32>
    %c1_62 = arith.constant 1 : index
    %c80_63 = arith.constant 80 : index
    %119 = vector.load %arg4[%c1_62, %c80_63] : memref<14x512xf32, #tpu.memory_space<vmem>>, vector<1x256xf32>
    %c1_64 = arith.constant 1 : index
    %120 = memref.load %arg1[%c1_64] : memref<98xf32, #tpu.memory_space<smem>>
    %121 = vector.broadcast %120 : f32 to vector<1x256xf32>
    %122 = arith.mulf %121, %119 : vector<1x256xf32>
    %123 = arith.addf %118, %122 : vector<1x256xf32>
    %c2_65 = arith.constant 2 : index
    %c80_66 = arith.constant 80 : index
    %124 = vector.load %arg4[%c2_65, %c80_66] : memref<14x512xf32, #tpu.memory_space<vmem>>, vector<1x256xf32>
    %c2_67 = arith.constant 2 : index
    %125 = memref.load %arg1[%c2_67] : memref<98xf32, #tpu.memory_space<smem>>
    %126 = vector.broadcast %125 : f32 to vector<1x256xf32>
    %127 = arith.mulf %126, %124 : vector<1x256xf32>
    %128 = arith.addf %123, %127 : vector<1x256xf32>
    %c3_68 = arith.constant 3 : index
    %c80_69 = arith.constant 80 : index
    %129 = vector.load %arg4[%c3_68, %c80_69] : memref<14x512xf32, #tpu.memory_space<vmem>>, vector<1x256xf32>
    %c3_70 = arith.constant 3 : index
    %130 = memref.load %arg1[%c3_70] : memref<98xf32, #tpu.memory_space<smem>>
    %131 = vector.broadcast %130 : f32 to vector<1x256xf32>
    %132 = arith.mulf %131, %129 : vector<1x256xf32>
    %133 = arith.addf %128, %132 : vector<1x256xf32>
    %c4_71 = arith.constant 4 : index
    %c80_72 = arith.constant 80 : index
    %134 = vector.load %arg4[%c4_71, %c80_72] : memref<14x512xf32, #tpu.memory_space<vmem>>, vector<1x256xf32>
    %c4_73 = arith.constant 4 : index
    %135 = memref.load %arg1[%c4_73] : memref<98xf32, #tpu.memory_space<smem>>
    %136 = vector.broadcast %135 : f32 to vector<1x256xf32>
    %137 = arith.mulf %136, %134 : vector<1x256xf32>
    %138 = arith.addf %133, %137 : vector<1x256xf32>
    %c5_74 = arith.constant 5 : index
    %c80_75 = arith.constant 80 : index
    %139 = vector.load %arg4[%c5_74, %c80_75] : memref<14x512xf32, #tpu.memory_space<vmem>>, vector<1x256xf32>
    %c5_76 = arith.constant 5 : index
    %140 = memref.load %arg1[%c5_76] : memref<98xf32, #tpu.memory_space<smem>>
    %141 = vector.broadcast %140 : f32 to vector<1x256xf32>
    %142 = arith.mulf %141, %139 : vector<1x256xf32>
    %143 = arith.addf %138, %142 : vector<1x256xf32>
    %c6_77 = arith.constant 6 : index
    %c80_78 = arith.constant 80 : index
    %144 = vector.load %arg4[%c6_77, %c80_78] : memref<14x512xf32, #tpu.memory_space<vmem>>, vector<1x256xf32>
    %c6_79 = arith.constant 6 : index
    %145 = memref.load %arg1[%c6_79] : memref<98xf32, #tpu.memory_space<smem>>
    %146 = vector.broadcast %145 : f32 to vector<1x256xf32>
    %147 = arith.mulf %146, %144 : vector<1x256xf32>
    %148 = arith.addf %143, %147 : vector<1x256xf32>
    %c7_80 = arith.constant 7 : index
    %c80_81 = arith.constant 80 : index
    %149 = vector.load %arg4[%c7_80, %c80_81] : memref<14x512xf32, #tpu.memory_space<vmem>>, vector<1x256xf32>
    %c49 = arith.constant 49 : index
    %150 = memref.load %arg1[%c49] : memref<98xf32, #tpu.memory_space<smem>>
    %151 = vector.broadcast %150 : f32 to vector<1x256xf32>
    %152 = arith.mulf %151, %149 : vector<1x256xf32>
    %153 = arith.addf %148, %152 : vector<1x256xf32>
    %c8_82 = arith.constant 8 : index
    %c80_83 = arith.constant 80 : index
    %154 = vector.load %arg4[%c8_82, %c80_83] : memref<14x512xf32, #tpu.memory_space<vmem>>, vector<1x256xf32>
    %c50 = arith.constant 50 : index
    %155 = memref.load %arg1[%c50] : memref<98xf32, #tpu.memory_space<smem>>
    %156 = vector.broadcast %155 : f32 to vector<1x256xf32>
    %157 = arith.mulf %156, %154 : vector<1x256xf32>
    %158 = arith.addf %153, %157 : vector<1x256xf32>
    %c9_84 = arith.constant 9 : index
    %c80_85 = arith.constant 80 : index
    %159 = vector.load %arg4[%c9_84, %c80_85] : memref<14x512xf32, #tpu.memory_space<vmem>>, vector<1x256xf32>
    %c51 = arith.constant 51 : index
    %160 = memref.load %arg1[%c51] : memref<98xf32, #tpu.memory_space<smem>>
    %161 = vector.broadcast %160 : f32 to vector<1x256xf32>
    %162 = arith.mulf %161, %159 : vector<1x256xf32>
    %163 = arith.addf %158, %162 : vector<1x256xf32>
    %c10_86 = arith.constant 10 : index
    %c80_87 = arith.constant 80 : index
    %164 = vector.load %arg4[%c10_86, %c80_87] : memref<14x512xf32, #tpu.memory_space<vmem>>, vector<1x256xf32>
    %c52 = arith.constant 52 : index
    %165 = memref.load %arg1[%c52] : memref<98xf32, #tpu.memory_space<smem>>
    %166 = vector.broadcast %165 : f32 to vector<1x256xf32>
    %167 = arith.mulf %166, %164 : vector<1x256xf32>
    %168 = arith.addf %163, %167 : vector<1x256xf32>
    %c11_88 = arith.constant 11 : index
    %c80_89 = arith.constant 80 : index
    %169 = vector.load %arg4[%c11_88, %c80_89] : memref<14x512xf32, #tpu.memory_space<vmem>>, vector<1x256xf32>
    %c53 = arith.constant 53 : index
    %170 = memref.load %arg1[%c53] : memref<98xf32, #tpu.memory_space<smem>>
    %171 = vector.broadcast %170 : f32 to vector<1x256xf32>
    %172 = arith.mulf %171, %169 : vector<1x256xf32>
    %173 = arith.addf %168, %172 : vector<1x256xf32>
    %c12_90 = arith.constant 12 : index
    %c80_91 = arith.constant 80 : index
    %174 = vector.load %arg4[%c12_90, %c80_91] : memref<14x512xf32, #tpu.memory_space<vmem>>, vector<1x256xf32>
    %c54 = arith.constant 54 : index
    %175 = memref.load %arg1[%c54] : memref<98xf32, #tpu.memory_space<smem>>
    %176 = vector.broadcast %175 : f32 to vector<1x256xf32>
    %177 = arith.mulf %176, %174 : vector<1x256xf32>
    %178 = arith.addf %173, %177 : vector<1x256xf32>
    %c13_92 = arith.constant 13 : index
    %c80_93 = arith.constant 80 : index
    %179 = vector.load %arg4[%c13_92, %c80_93] : memref<14x512xf32, #tpu.memory_space<vmem>>, vector<1x256xf32>
    %c55 = arith.constant 55 : index
    %180 = memref.load %arg1[%c55] : memref<98xf32, #tpu.memory_space<smem>>
    %181 = vector.broadcast %180 : f32 to vector<1x256xf32>
    %182 = arith.mulf %181, %179 : vector<1x256xf32>
    %183 = arith.addf %178, %182 : vector<1x256xf32>
    %c0_94 = arith.constant 0 : index
    %c96 = arith.constant 96 : index
    %184 = vector.load %arg4[%c0_94, %c96] : memref<14x512xf32, #tpu.memory_space<vmem>>, vector<1x256xf32>
    %c7_95 = arith.constant 7 : index
    %185 = memref.load %arg1[%c7_95] : memref<98xf32, #tpu.memory_space<smem>>
    %186 = vector.broadcast %185 : f32 to vector<1x256xf32>
    %187 = arith.mulf %186, %184 : vector<1x256xf32>
    %188 = arith.addf %183, %187 : vector<1x256xf32>
    %c1_96 = arith.constant 1 : index
    %c96_97 = arith.constant 96 : index
    %189 = vector.load %arg4[%c1_96, %c96_97] : memref<14x512xf32, #tpu.memory_space<vmem>>, vector<1x256xf32>
    %c8_98 = arith.constant 8 : index
    %190 = memref.load %arg1[%c8_98] : memref<98xf32, #tpu.memory_space<smem>>
    %191 = vector.broadcast %190 : f32 to vector<1x256xf32>
    %192 = arith.mulf %191, %189 : vector<1x256xf32>
    %193 = arith.addf %188, %192 : vector<1x256xf32>
    %c2_99 = arith.constant 2 : index
    %c96_100 = arith.constant 96 : index
    %194 = vector.load %arg4[%c2_99, %c96_100] : memref<14x512xf32, #tpu.memory_space<vmem>>, vector<1x256xf32>
    %c9_101 = arith.constant 9 : index
    %195 = memref.load %arg1[%c9_101] : memref<98xf32, #tpu.memory_space<smem>>
    %196 = vector.broadcast %195 : f32 to vector<1x256xf32>
    %197 = arith.mulf %196, %194 : vector<1x256xf32>
    %198 = arith.addf %193, %197 : vector<1x256xf32>
    %c3_102 = arith.constant 3 : index
    %c96_103 = arith.constant 96 : index
    %199 = vector.load %arg4[%c3_102, %c96_103] : memref<14x512xf32, #tpu.memory_space<vmem>>, vector<1x256xf32>
    %c10_104 = arith.constant 10 : index
    %200 = memref.load %arg1[%c10_104] : memref<98xf32, #tpu.memory_space<smem>>
    %201 = vector.broadcast %200 : f32 to vector<1x256xf32>
    %202 = arith.mulf %201, %199 : vector<1x256xf32>
    %203 = arith.addf %198, %202 : vector<1x256xf32>
    %c4_105 = arith.constant 4 : index
    %c96_106 = arith.constant 96 : index
    %204 = vector.load %arg4[%c4_105, %c96_106] : memref<14x512xf32, #tpu.memory_space<vmem>>, vector<1x256xf32>
    %c11_107 = arith.constant 11 : index
    %205 = memref.load %arg1[%c11_107] : memref<98xf32, #tpu.memory_space<smem>>
    %206 = vector.broadcast %205 : f32 to vector<1x256xf32>
    %207 = arith.mulf %206, %204 : vector<1x256xf32>
    %208 = arith.addf %203, %207 : vector<1x256xf32>
    %c5_108 = arith.constant 5 : index
    %c96_109 = arith.constant 96 : index
    %209 = vector.load %arg4[%c5_108, %c96_109] : memref<14x512xf32, #tpu.memory_space<vmem>>, vector<1x256xf32>
    %c12_110 = arith.constant 12 : index
    %210 = memref.load %arg1[%c12_110] : memref<98xf32, #tpu.memory_space<smem>>
    %211 = vector.broadcast %210 : f32 to vector<1x256xf32>
    %212 = arith.mulf %211, %209 : vector<1x256xf32>
    %213 = arith.addf %208, %212 : vector<1x256xf32>
    %c6_111 = arith.constant 6 : index
    %c96_112 = arith.constant 96 : index
    %214 = vector.load %arg4[%c6_111, %c96_112] : memref<14x512xf32, #tpu.memory_space<vmem>>, vector<1x256xf32>
    %c13_113 = arith.constant 13 : index
    %215 = memref.load %arg1[%c13_113] : memref<98xf32, #tpu.memory_space<smem>>
    %216 = vector.broadcast %215 : f32 to vector<1x256xf32>
    %217 = arith.mulf %216, %214 : vector<1x256xf32>
    %218 = arith.addf %213, %217 : vector<1x256xf32>
    %c7_114 = arith.constant 7 : index
    %c96_115 = arith.constant 96 : index
    %219 = vector.load %arg4[%c7_114, %c96_115] : memref<14x512xf32, #tpu.memory_space<vmem>>, vector<1x256xf32>
    %c56 = arith.constant 56 : index
    %220 = memref.load %arg1[%c56] : memref<98xf32, #tpu.memory_space<smem>>
    %221 = vector.broadcast %220 : f32 to vector<1x256xf32>
    %222 = arith.mulf %221, %219 : vector<1x256xf32>
    %223 = arith.addf %218, %222 : vector<1x256xf32>
    %c8_116 = arith.constant 8 : index
    %c96_117 = arith.constant 96 : index
    %224 = vector.load %arg4[%c8_116, %c96_117] : memref<14x512xf32, #tpu.memory_space<vmem>>, vector<1x256xf32>
    %c57 = arith.constant 57 : index
    %225 = memref.load %arg1[%c57] : memref<98xf32, #tpu.memory_space<smem>>
    %226 = vector.broadcast %225 : f32 to vector<1x256xf32>
    %227 = arith.mulf %226, %224 : vector<1x256xf32>
    %228 = arith.addf %223, %227 : vector<1x256xf32>
    %c9_118 = arith.constant 9 : index
    %c96_119 = arith.constant 96 : index
    %229 = vector.load %arg4[%c9_118, %c96_119] : memref<14x512xf32, #tpu.memory_space<vmem>>, vector<1x256xf32>
    %c58 = arith.constant 58 : index
    %230 = memref.load %arg1[%c58] : memref<98xf32, #tpu.memory_space<smem>>
    %231 = vector.broadcast %230 : f32 to vector<1x256xf32>
    %232 = arith.mulf %231, %229 : vector<1x256xf32>
    %233 = arith.addf %228, %232 : vector<1x256xf32>
    %c10_120 = arith.constant 10 : index
    %c96_121 = arith.constant 96 : index
    %234 = vector.load %arg4[%c10_120, %c96_121] : memref<14x512xf32, #tpu.memory_space<vmem>>, vector<1x256xf32>
    %c59 = arith.constant 59 : index
    %235 = memref.load %arg1[%c59] : memref<98xf32, #tpu.memory_space<smem>>
    %236 = vector.broadcast %235 : f32 to vector<1x256xf32>
    %237 = arith.mulf %236, %234 : vector<1x256xf32>
    %238 = arith.addf %233, %237 : vector<1x256xf32>
    %c11_122 = arith.constant 11 : index
    %c96_123 = arith.constant 96 : index
    %239 = vector.load %arg4[%c11_122, %c96_123] : memref<14x512xf32, #tpu.memory_space<vmem>>, vector<1x256xf32>
    %c60 = arith.constant 60 : index
    %240 = memref.load %arg1[%c60] : memref<98xf32, #tpu.memory_space<smem>>
    %241 = vector.broadcast %240 : f32 to vector<1x256xf32>
    %242 = arith.mulf %241, %239 : vector<1x256xf32>
    %243 = arith.addf %238, %242 : vector<1x256xf32>
    %c12_124 = arith.constant 12 : index
    %c96_125 = arith.constant 96 : index
    %244 = vector.load %arg4[%c12_124, %c96_125] : memref<14x512xf32, #tpu.memory_space<vmem>>, vector<1x256xf32>
    %c61 = arith.constant 61 : index
    %245 = memref.load %arg1[%c61] : memref<98xf32, #tpu.memory_space<smem>>
    %246 = vector.broadcast %245 : f32 to vector<1x256xf32>
    %247 = arith.mulf %246, %244 : vector<1x256xf32>
    %248 = arith.addf %243, %247 : vector<1x256xf32>
    %c13_126 = arith.constant 13 : index
    %c96_127 = arith.constant 96 : index
    %249 = vector.load %arg4[%c13_126, %c96_127] : memref<14x512xf32, #tpu.memory_space<vmem>>, vector<1x256xf32>
    %c62 = arith.constant 62 : index
    %250 = memref.load %arg1[%c62] : memref<98xf32, #tpu.memory_space<smem>>
    %251 = vector.broadcast %250 : f32 to vector<1x256xf32>
    %252 = arith.mulf %251, %249 : vector<1x256xf32>
    %253 = arith.addf %248, %252 : vector<1x256xf32>
    %c0_128 = arith.constant 0 : index
    %c112 = arith.constant 112 : index
    %254 = vector.load %arg4[%c0_128, %c112] : memref<14x512xf32, #tpu.memory_space<vmem>>, vector<1x256xf32>
    %c14 = arith.constant 14 : index
    %255 = memref.load %arg1[%c14] : memref<98xf32, #tpu.memory_space<smem>>
    %256 = vector.broadcast %255 : f32 to vector<1x256xf32>
    %257 = arith.mulf %256, %254 : vector<1x256xf32>
    %258 = arith.addf %253, %257 : vector<1x256xf32>
    %c1_129 = arith.constant 1 : index
    %c112_130 = arith.constant 112 : index
    %259 = vector.load %arg4[%c1_129, %c112_130] : memref<14x512xf32, #tpu.memory_space<vmem>>, vector<1x256xf32>
    %c15 = arith.constant 15 : index
    %260 = memref.load %arg1[%c15] : memref<98xf32, #tpu.memory_space<smem>>
    %261 = vector.broadcast %260 : f32 to vector<1x256xf32>
    %262 = arith.mulf %261, %259 : vector<1x256xf32>
    %263 = arith.addf %258, %262 : vector<1x256xf32>
    %c2_131 = arith.constant 2 : index
    %c112_132 = arith.constant 112 : index
    %264 = vector.load %arg4[%c2_131, %c112_132] : memref<14x512xf32, #tpu.memory_space<vmem>>, vector<1x256xf32>
    %c16 = arith.constant 16 : index
    %265 = memref.load %arg1[%c16] : memref<98xf32, #tpu.memory_space<smem>>
    %266 = vector.broadcast %265 : f32 to vector<1x256xf32>
    %267 = arith.mulf %266, %264 : vector<1x256xf32>
    %268 = arith.addf %263, %267 : vector<1x256xf32>
    %c3_133 = arith.constant 3 : index
    %c112_134 = arith.constant 112 : index
    %269 = vector.load %arg4[%c3_133, %c112_134] : memref<14x512xf32, #tpu.memory_space<vmem>>, vector<1x256xf32>
    %c17 = arith.constant 17 : index
    %270 = memref.load %arg1[%c17] : memref<98xf32, #tpu.memory_space<smem>>
    %271 = vector.broadcast %270 : f32 to vector<1x256xf32>
    %272 = arith.mulf %271, %269 : vector<1x256xf32>
    %273 = arith.addf %268, %272 : vector<1x256xf32>
    %c4_135 = arith.constant 4 : index
    %c112_136 = arith.constant 112 : index
    %274 = vector.load %arg4[%c4_135, %c112_136] : memref<14x512xf32, #tpu.memory_space<vmem>>, vector<1x256xf32>
    %c18 = arith.constant 18 : index
    %275 = memref.load %arg1[%c18] : memref<98xf32, #tpu.memory_space<smem>>
    %276 = vector.broadcast %275 : f32 to vector<1x256xf32>
    %277 = arith.mulf %276, %274 : vector<1x256xf32>
    %278 = arith.addf %273, %277 : vector<1x256xf32>
    %c5_137 = arith.constant 5 : index
    %c112_138 = arith.constant 112 : index
    %279 = vector.load %arg4[%c5_137, %c112_138] : memref<14x512xf32, #tpu.memory_space<vmem>>, vector<1x256xf32>
    %c19 = arith.constant 19 : index
    %280 = memref.load %arg1[%c19] : memref<98xf32, #tpu.memory_space<smem>>
    %281 = vector.broadcast %280 : f32 to vector<1x256xf32>
    %282 = arith.mulf %281, %279 : vector<1x256xf32>
    %283 = arith.addf %278, %282 : vector<1x256xf32>
    %c6_139 = arith.constant 6 : index
    %c112_140 = arith.constant 112 : index
    %284 = vector.load %arg4[%c6_139, %c112_140] : memref<14x512xf32, #tpu.memory_space<vmem>>, vector<1x256xf32>
    %c20 = arith.constant 20 : index
    %285 = memref.load %arg1[%c20] : memref<98xf32, #tpu.memory_space<smem>>
    %286 = vector.broadcast %285 : f32 to vector<1x256xf32>
    %287 = arith.mulf %286, %284 : vector<1x256xf32>
    %288 = arith.addf %283, %287 : vector<1x256xf32>
    %c7_141 = arith.constant 7 : index
    %c112_142 = arith.constant 112 : index
    %289 = vector.load %arg4[%c7_141, %c112_142] : memref<14x512xf32, #tpu.memory_space<vmem>>, vector<1x256xf32>
    %c63 = arith.constant 63 : index
    %290 = memref.load %arg1[%c63] : memref<98xf32, #tpu.memory_space<smem>>
    %291 = vector.broadcast %290 : f32 to vector<1x256xf32>
    %292 = arith.mulf %291, %289 : vector<1x256xf32>
    %293 = arith.addf %288, %292 : vector<1x256xf32>
    %c8_143 = arith.constant 8 : index
    %c112_144 = arith.constant 112 : index
    %294 = vector.load %arg4[%c8_143, %c112_144] : memref<14x512xf32, #tpu.memory_space<vmem>>, vector<1x256xf32>
    %c64 = arith.constant 64 : index
    %295 = memref.load %arg1[%c64] : memref<98xf32, #tpu.memory_space<smem>>
    %296 = vector.broadcast %295 : f32 to vector<1x256xf32>
    %297 = arith.mulf %296, %294 : vector<1x256xf32>
    %298 = arith.addf %293, %297 : vector<1x256xf32>
    %c9_145 = arith.constant 9 : index
    %c112_146 = arith.constant 112 : index
    %299 = vector.load %arg4[%c9_145, %c112_146] : memref<14x512xf32, #tpu.memory_space<vmem>>, vector<1x256xf32>
    %c65 = arith.constant 65 : index
    %300 = memref.load %arg1[%c65] : memref<98xf32, #tpu.memory_space<smem>>
    %301 = vector.broadcast %300 : f32 to vector<1x256xf32>
    %302 = arith.mulf %301, %299 : vector<1x256xf32>
    %303 = arith.addf %298, %302 : vector<1x256xf32>
    %c10_147 = arith.constant 10 : index
    %c112_148 = arith.constant 112 : index
    %304 = vector.load %arg4[%c10_147, %c112_148] : memref<14x512xf32, #tpu.memory_space<vmem>>, vector<1x256xf32>
    %c66 = arith.constant 66 : index
    %305 = memref.load %arg1[%c66] : memref<98xf32, #tpu.memory_space<smem>>
    %306 = vector.broadcast %305 : f32 to vector<1x256xf32>
    %307 = arith.mulf %306, %304 : vector<1x256xf32>
    %308 = arith.addf %303, %307 : vector<1x256xf32>
    %c11_149 = arith.constant 11 : index
    %c112_150 = arith.constant 112 : index
    %309 = vector.load %arg4[%c11_149, %c112_150] : memref<14x512xf32, #tpu.memory_space<vmem>>, vector<1x256xf32>
    %c67 = arith.constant 67 : index
    %310 = memref.load %arg1[%c67] : memref<98xf32, #tpu.memory_space<smem>>
    %311 = vector.broadcast %310 : f32 to vector<1x256xf32>
    %312 = arith.mulf %311, %309 : vector<1x256xf32>
    %313 = arith.addf %308, %312 : vector<1x256xf32>
    %c12_151 = arith.constant 12 : index
    %c112_152 = arith.constant 112 : index
    %314 = vector.load %arg4[%c12_151, %c112_152] : memref<14x512xf32, #tpu.memory_space<vmem>>, vector<1x256xf32>
    %c68 = arith.constant 68 : index
    %315 = memref.load %arg1[%c68] : memref<98xf32, #tpu.memory_space<smem>>
    %316 = vector.broadcast %315 : f32 to vector<1x256xf32>
    %317 = arith.mulf %316, %314 : vector<1x256xf32>
    %318 = arith.addf %313, %317 : vector<1x256xf32>
    %c13_153 = arith.constant 13 : index
    %c112_154 = arith.constant 112 : index
    %319 = vector.load %arg4[%c13_153, %c112_154] : memref<14x512xf32, #tpu.memory_space<vmem>>, vector<1x256xf32>
    %c69 = arith.constant 69 : index
    %320 = memref.load %arg1[%c69] : memref<98xf32, #tpu.memory_space<smem>>
    %321 = vector.broadcast %320 : f32 to vector<1x256xf32>
    %322 = arith.mulf %321, %319 : vector<1x256xf32>
    %323 = arith.addf %318, %322 : vector<1x256xf32>
    %c0_155 = arith.constant 0 : index
    %c128_156 = arith.constant 128 : index
    %324 = vector.load %arg4[%c0_155, %c128_156] : memref<14x512xf32, #tpu.memory_space<vmem>>, vector<1x256xf32>
    %c21 = arith.constant 21 : index
    %325 = memref.load %arg1[%c21] : memref<98xf32, #tpu.memory_space<smem>>
    %326 = vector.broadcast %325 : f32 to vector<1x256xf32>
    %327 = arith.mulf %326, %324 : vector<1x256xf32>
    %328 = arith.addf %323, %327 : vector<1x256xf32>
    %c1_157 = arith.constant 1 : index
    %c128_158 = arith.constant 128 : index
    %329 = vector.load %arg4[%c1_157, %c128_158] : memref<14x512xf32, #tpu.memory_space<vmem>>, vector<1x256xf32>
    %c22 = arith.constant 22 : index
    %330 = memref.load %arg1[%c22] : memref<98xf32, #tpu.memory_space<smem>>
    %331 = vector.broadcast %330 : f32 to vector<1x256xf32>
    %332 = arith.mulf %331, %329 : vector<1x256xf32>
    %333 = arith.addf %328, %332 : vector<1x256xf32>
    %c2_159 = arith.constant 2 : index
    %c128_160 = arith.constant 128 : index
    %334 = vector.load %arg4[%c2_159, %c128_160] : memref<14x512xf32, #tpu.memory_space<vmem>>, vector<1x256xf32>
    %c23 = arith.constant 23 : index
    %335 = memref.load %arg1[%c23] : memref<98xf32, #tpu.memory_space<smem>>
    %336 = vector.broadcast %335 : f32 to vector<1x256xf32>
    %337 = arith.mulf %336, %334 : vector<1x256xf32>
    %338 = arith.addf %333, %337 : vector<1x256xf32>
    %c3_161 = arith.constant 3 : index
    %c128_162 = arith.constant 128 : index
    %339 = vector.load %arg4[%c3_161, %c128_162] : memref<14x512xf32, #tpu.memory_space<vmem>>, vector<1x256xf32>
    %c24 = arith.constant 24 : index
    %340 = memref.load %arg1[%c24] : memref<98xf32, #tpu.memory_space<smem>>
    %341 = vector.broadcast %340 : f32 to vector<1x256xf32>
    %342 = arith.mulf %341, %339 : vector<1x256xf32>
    %343 = arith.addf %338, %342 : vector<1x256xf32>
    %c4_163 = arith.constant 4 : index
    %c128_164 = arith.constant 128 : index
    %344 = vector.load %arg4[%c4_163, %c128_164] : memref<14x512xf32, #tpu.memory_space<vmem>>, vector<1x256xf32>
    %c25 = arith.constant 25 : index
    %345 = memref.load %arg1[%c25] : memref<98xf32, #tpu.memory_space<smem>>
    %346 = vector.broadcast %345 : f32 to vector<1x256xf32>
    %347 = arith.mulf %346, %344 : vector<1x256xf32>
    %348 = arith.addf %343, %347 : vector<1x256xf32>
    %c5_165 = arith.constant 5 : index
    %c128_166 = arith.constant 128 : index
    %349 = vector.load %arg4[%c5_165, %c128_166] : memref<14x512xf32, #tpu.memory_space<vmem>>, vector<1x256xf32>
    %c26 = arith.constant 26 : index
    %350 = memref.load %arg1[%c26] : memref<98xf32, #tpu.memory_space<smem>>
    %351 = vector.broadcast %350 : f32 to vector<1x256xf32>
    %352 = arith.mulf %351, %349 : vector<1x256xf32>
    %353 = arith.addf %348, %352 : vector<1x256xf32>
    %c6_167 = arith.constant 6 : index
    %c128_168 = arith.constant 128 : index
    %354 = vector.load %arg4[%c6_167, %c128_168] : memref<14x512xf32, #tpu.memory_space<vmem>>, vector<1x256xf32>
    %c27 = arith.constant 27 : index
    %355 = memref.load %arg1[%c27] : memref<98xf32, #tpu.memory_space<smem>>
    %356 = vector.broadcast %355 : f32 to vector<1x256xf32>
    %357 = arith.mulf %356, %354 : vector<1x256xf32>
    %358 = arith.addf %353, %357 : vector<1x256xf32>
    %c7_169 = arith.constant 7 : index
    %c128_170 = arith.constant 128 : index
    %359 = vector.load %arg4[%c7_169, %c128_170] : memref<14x512xf32, #tpu.memory_space<vmem>>, vector<1x256xf32>
    %c70 = arith.constant 70 : index
    %360 = memref.load %arg1[%c70] : memref<98xf32, #tpu.memory_space<smem>>
    %361 = vector.broadcast %360 : f32 to vector<1x256xf32>
    %362 = arith.mulf %361, %359 : vector<1x256xf32>
    %363 = arith.addf %358, %362 : vector<1x256xf32>
    %c8_171 = arith.constant 8 : index
    %c128_172 = arith.constant 128 : index
    %364 = vector.load %arg4[%c8_171, %c128_172] : memref<14x512xf32, #tpu.memory_space<vmem>>, vector<1x256xf32>
    %c71 = arith.constant 71 : index
    %365 = memref.load %arg1[%c71] : memref<98xf32, #tpu.memory_space<smem>>
    %366 = vector.broadcast %365 : f32 to vector<1x256xf32>
    %367 = arith.mulf %366, %364 : vector<1x256xf32>
    %368 = arith.addf %363, %367 : vector<1x256xf32>
    %c9_173 = arith.constant 9 : index
    %c128_174 = arith.constant 128 : index
    %369 = vector.load %arg4[%c9_173, %c128_174] : memref<14x512xf32, #tpu.memory_space<vmem>>, vector<1x256xf32>
    %c72 = arith.constant 72 : index
    %370 = memref.load %arg1[%c72] : memref<98xf32, #tpu.memory_space<smem>>
    %371 = vector.broadcast %370 : f32 to vector<1x256xf32>
    %372 = arith.mulf %371, %369 : vector<1x256xf32>
    %373 = arith.addf %368, %372 : vector<1x256xf32>
    %c10_175 = arith.constant 10 : index
    %c128_176 = arith.constant 128 : index
    %374 = vector.load %arg4[%c10_175, %c128_176] : memref<14x512xf32, #tpu.memory_space<vmem>>, vector<1x256xf32>
    %c73 = arith.constant 73 : index
    %375 = memref.load %arg1[%c73] : memref<98xf32, #tpu.memory_space<smem>>
    %376 = vector.broadcast %375 : f32 to vector<1x256xf32>
    %377 = arith.mulf %376, %374 : vector<1x256xf32>
    %378 = arith.addf %373, %377 : vector<1x256xf32>
    %c11_177 = arith.constant 11 : index
    %c128_178 = arith.constant 128 : index
    %379 = vector.load %arg4[%c11_177, %c128_178] : memref<14x512xf32, #tpu.memory_space<vmem>>, vector<1x256xf32>
    %c74 = arith.constant 74 : index
    %380 = memref.load %arg1[%c74] : memref<98xf32, #tpu.memory_space<smem>>
    %381 = vector.broadcast %380 : f32 to vector<1x256xf32>
    %382 = arith.mulf %381, %379 : vector<1x256xf32>
    %383 = arith.addf %378, %382 : vector<1x256xf32>
    %c12_179 = arith.constant 12 : index
    %c128_180 = arith.constant 128 : index
    %384 = vector.load %arg4[%c12_179, %c128_180] : memref<14x512xf32, #tpu.memory_space<vmem>>, vector<1x256xf32>
    %c75 = arith.constant 75 : index
    %385 = memref.load %arg1[%c75] : memref<98xf32, #tpu.memory_space<smem>>
    %386 = vector.broadcast %385 : f32 to vector<1x256xf32>
    %387 = arith.mulf %386, %384 : vector<1x256xf32>
    %388 = arith.addf %383, %387 : vector<1x256xf32>
    %c13_181 = arith.constant 13 : index
    %c128_182 = arith.constant 128 : index
    %389 = vector.load %arg4[%c13_181, %c128_182] : memref<14x512xf32, #tpu.memory_space<vmem>>, vector<1x256xf32>
    %c76 = arith.constant 76 : index
    %390 = memref.load %arg1[%c76] : memref<98xf32, #tpu.memory_space<smem>>
    %391 = vector.broadcast %390 : f32 to vector<1x256xf32>
    %392 = arith.mulf %391, %389 : vector<1x256xf32>
    %393 = arith.addf %388, %392 : vector<1x256xf32>
    %c0_183 = arith.constant 0 : index
    %c144 = arith.constant 144 : index
    %394 = vector.load %arg4[%c0_183, %c144] : memref<14x512xf32, #tpu.memory_space<vmem>>, vector<1x256xf32>
    %c28 = arith.constant 28 : index
    %395 = memref.load %arg1[%c28] : memref<98xf32, #tpu.memory_space<smem>>
    %396 = vector.broadcast %395 : f32 to vector<1x256xf32>
    %397 = arith.mulf %396, %394 : vector<1x256xf32>
    %398 = arith.addf %393, %397 : vector<1x256xf32>
    %c1_184 = arith.constant 1 : index
    %c144_185 = arith.constant 144 : index
    %399 = vector.load %arg4[%c1_184, %c144_185] : memref<14x512xf32, #tpu.memory_space<vmem>>, vector<1x256xf32>
    %c29 = arith.constant 29 : index
    %400 = memref.load %arg1[%c29] : memref<98xf32, #tpu.memory_space<smem>>
    %401 = vector.broadcast %400 : f32 to vector<1x256xf32>
    %402 = arith.mulf %401, %399 : vector<1x256xf32>
    %403 = arith.addf %398, %402 : vector<1x256xf32>
    %c2_186 = arith.constant 2 : index
    %c144_187 = arith.constant 144 : index
    %404 = vector.load %arg4[%c2_186, %c144_187] : memref<14x512xf32, #tpu.memory_space<vmem>>, vector<1x256xf32>
    %c30 = arith.constant 30 : index
    %405 = memref.load %arg1[%c30] : memref<98xf32, #tpu.memory_space<smem>>
    %406 = vector.broadcast %405 : f32 to vector<1x256xf32>
    %407 = arith.mulf %406, %404 : vector<1x256xf32>
    %408 = arith.addf %403, %407 : vector<1x256xf32>
    %c3_188 = arith.constant 3 : index
    %c144_189 = arith.constant 144 : index
    %409 = vector.load %arg4[%c3_188, %c144_189] : memref<14x512xf32, #tpu.memory_space<vmem>>, vector<1x256xf32>
    %c31 = arith.constant 31 : index
    %410 = memref.load %arg1[%c31] : memref<98xf32, #tpu.memory_space<smem>>
    %411 = vector.broadcast %410 : f32 to vector<1x256xf32>
    %412 = arith.mulf %411, %409 : vector<1x256xf32>
    %413 = arith.addf %408, %412 : vector<1x256xf32>
    %c4_190 = arith.constant 4 : index
    %c144_191 = arith.constant 144 : index
    %414 = vector.load %arg4[%c4_190, %c144_191] : memref<14x512xf32, #tpu.memory_space<vmem>>, vector<1x256xf32>
    %c32 = arith.constant 32 : index
    %415 = memref.load %arg1[%c32] : memref<98xf32, #tpu.memory_space<smem>>
    %416 = vector.broadcast %415 : f32 to vector<1x256xf32>
    %417 = arith.mulf %416, %414 : vector<1x256xf32>
    %418 = arith.addf %413, %417 : vector<1x256xf32>
    %c5_192 = arith.constant 5 : index
    %c144_193 = arith.constant 144 : index
    %419 = vector.load %arg4[%c5_192, %c144_193] : memref<14x512xf32, #tpu.memory_space<vmem>>, vector<1x256xf32>
    %c33 = arith.constant 33 : index
    %420 = memref.load %arg1[%c33] : memref<98xf32, #tpu.memory_space<smem>>
    %421 = vector.broadcast %420 : f32 to vector<1x256xf32>
    %422 = arith.mulf %421, %419 : vector<1x256xf32>
    %423 = arith.addf %418, %422 : vector<1x256xf32>
    %c6_194 = arith.constant 6 : index
    %c144_195 = arith.constant 144 : index
    %424 = vector.load %arg4[%c6_194, %c144_195] : memref<14x512xf32, #tpu.memory_space<vmem>>, vector<1x256xf32>
    %c34 = arith.constant 34 : index
    %425 = memref.load %arg1[%c34] : memref<98xf32, #tpu.memory_space<smem>>
    %426 = vector.broadcast %425 : f32 to vector<1x256xf32>
    %427 = arith.mulf %426, %424 : vector<1x256xf32>
    %428 = arith.addf %423, %427 : vector<1x256xf32>
    %c7_196 = arith.constant 7 : index
    %c144_197 = arith.constant 144 : index
    %429 = vector.load %arg4[%c7_196, %c144_197] : memref<14x512xf32, #tpu.memory_space<vmem>>, vector<1x256xf32>
    %c77 = arith.constant 77 : index
    %430 = memref.load %arg1[%c77] : memref<98xf32, #tpu.memory_space<smem>>
    %431 = vector.broadcast %430 : f32 to vector<1x256xf32>
    %432 = arith.mulf %431, %429 : vector<1x256xf32>
    %433 = arith.addf %428, %432 : vector<1x256xf32>
    %c8_198 = arith.constant 8 : index
    %c144_199 = arith.constant 144 : index
    %434 = vector.load %arg4[%c8_198, %c144_199] : memref<14x512xf32, #tpu.memory_space<vmem>>, vector<1x256xf32>
    %c78 = arith.constant 78 : index
    %435 = memref.load %arg1[%c78] : memref<98xf32, #tpu.memory_space<smem>>
    %436 = vector.broadcast %435 : f32 to vector<1x256xf32>
    %437 = arith.mulf %436, %434 : vector<1x256xf32>
    %438 = arith.addf %433, %437 : vector<1x256xf32>
    %c9_200 = arith.constant 9 : index
    %c144_201 = arith.constant 144 : index
    %439 = vector.load %arg4[%c9_200, %c144_201] : memref<14x512xf32, #tpu.memory_space<vmem>>, vector<1x256xf32>
    %c79 = arith.constant 79 : index
    %440 = memref.load %arg1[%c79] : memref<98xf32, #tpu.memory_space<smem>>
    %441 = vector.broadcast %440 : f32 to vector<1x256xf32>
    %442 = arith.mulf %441, %439 : vector<1x256xf32>
    %443 = arith.addf %438, %442 : vector<1x256xf32>
    %c10_202 = arith.constant 10 : index
    %c144_203 = arith.constant 144 : index
    %444 = vector.load %arg4[%c10_202, %c144_203] : memref<14x512xf32, #tpu.memory_space<vmem>>, vector<1x256xf32>
    %c80_204 = arith.constant 80 : index
    %445 = memref.load %arg1[%c80_204] : memref<98xf32, #tpu.memory_space<smem>>
    %446 = vector.broadcast %445 : f32 to vector<1x256xf32>
    %447 = arith.mulf %446, %444 : vector<1x256xf32>
    %448 = arith.addf %443, %447 : vector<1x256xf32>
    %c11_205 = arith.constant 11 : index
    %c144_206 = arith.constant 144 : index
    %449 = vector.load %arg4[%c11_205, %c144_206] : memref<14x512xf32, #tpu.memory_space<vmem>>, vector<1x256xf32>
    %c81 = arith.constant 81 : index
    %450 = memref.load %arg1[%c81] : memref<98xf32, #tpu.memory_space<smem>>
    %451 = vector.broadcast %450 : f32 to vector<1x256xf32>
    %452 = arith.mulf %451, %449 : vector<1x256xf32>
    %453 = arith.addf %448, %452 : vector<1x256xf32>
    %c12_207 = arith.constant 12 : index
    %c144_208 = arith.constant 144 : index
    %454 = vector.load %arg4[%c12_207, %c144_208] : memref<14x512xf32, #tpu.memory_space<vmem>>, vector<1x256xf32>
    %c82 = arith.constant 82 : index
    %455 = memref.load %arg1[%c82] : memref<98xf32, #tpu.memory_space<smem>>
    %456 = vector.broadcast %455 : f32 to vector<1x256xf32>
    %457 = arith.mulf %456, %454 : vector<1x256xf32>
    %458 = arith.addf %453, %457 : vector<1x256xf32>
    %c13_209 = arith.constant 13 : index
    %c144_210 = arith.constant 144 : index
    %459 = vector.load %arg4[%c13_209, %c144_210] : memref<14x512xf32, #tpu.memory_space<vmem>>, vector<1x256xf32>
    %c83 = arith.constant 83 : index
    %460 = memref.load %arg1[%c83] : memref<98xf32, #tpu.memory_space<smem>>
    %461 = vector.broadcast %460 : f32 to vector<1x256xf32>
    %462 = arith.mulf %461, %459 : vector<1x256xf32>
    %463 = arith.addf %458, %462 : vector<1x256xf32>
    %c0_211 = arith.constant 0 : index
    %c160 = arith.constant 160 : index
    %464 = vector.load %arg4[%c0_211, %c160] : memref<14x512xf32, #tpu.memory_space<vmem>>, vector<1x256xf32>
    %c35 = arith.constant 35 : index
    %465 = memref.load %arg1[%c35] : memref<98xf32, #tpu.memory_space<smem>>
    %466 = vector.broadcast %465 : f32 to vector<1x256xf32>
    %467 = arith.mulf %466, %464 : vector<1x256xf32>
    %468 = arith.addf %463, %467 : vector<1x256xf32>
    %c1_212 = arith.constant 1 : index
    %c160_213 = arith.constant 160 : index
    %469 = vector.load %arg4[%c1_212, %c160_213] : memref<14x512xf32, #tpu.memory_space<vmem>>, vector<1x256xf32>
    %c36 = arith.constant 36 : index
    %470 = memref.load %arg1[%c36] : memref<98xf32, #tpu.memory_space<smem>>
    %471 = vector.broadcast %470 : f32 to vector<1x256xf32>
    %472 = arith.mulf %471, %469 : vector<1x256xf32>
    %473 = arith.addf %468, %472 : vector<1x256xf32>
    %c2_214 = arith.constant 2 : index
    %c160_215 = arith.constant 160 : index
    %474 = vector.load %arg4[%c2_214, %c160_215] : memref<14x512xf32, #tpu.memory_space<vmem>>, vector<1x256xf32>
    %c37 = arith.constant 37 : index
    %475 = memref.load %arg1[%c37] : memref<98xf32, #tpu.memory_space<smem>>
    %476 = vector.broadcast %475 : f32 to vector<1x256xf32>
    %477 = arith.mulf %476, %474 : vector<1x256xf32>
    %478 = arith.addf %473, %477 : vector<1x256xf32>
    %c3_216 = arith.constant 3 : index
    %c160_217 = arith.constant 160 : index
    %479 = vector.load %arg4[%c3_216, %c160_217] : memref<14x512xf32, #tpu.memory_space<vmem>>, vector<1x256xf32>
    %c38 = arith.constant 38 : index
    %480 = memref.load %arg1[%c38] : memref<98xf32, #tpu.memory_space<smem>>
    %481 = vector.broadcast %480 : f32 to vector<1x256xf32>
    %482 = arith.mulf %481, %479 : vector<1x256xf32>
    %483 = arith.addf %478, %482 : vector<1x256xf32>
    %c4_218 = arith.constant 4 : index
    %c160_219 = arith.constant 160 : index
    %484 = vector.load %arg4[%c4_218, %c160_219] : memref<14x512xf32, #tpu.memory_space<vmem>>, vector<1x256xf32>
    %c39 = arith.constant 39 : index
    %485 = memref.load %arg1[%c39] : memref<98xf32, #tpu.memory_space<smem>>
    %486 = vector.broadcast %485 : f32 to vector<1x256xf32>
    %487 = arith.mulf %486, %484 : vector<1x256xf32>
    %488 = arith.addf %483, %487 : vector<1x256xf32>
    %c5_220 = arith.constant 5 : index
    %c160_221 = arith.constant 160 : index
    %489 = vector.load %arg4[%c5_220, %c160_221] : memref<14x512xf32, #tpu.memory_space<vmem>>, vector<1x256xf32>
    %c40 = arith.constant 40 : index
    %490 = memref.load %arg1[%c40] : memref<98xf32, #tpu.memory_space<smem>>
    %491 = vector.broadcast %490 : f32 to vector<1x256xf32>
    %492 = arith.mulf %491, %489 : vector<1x256xf32>
    %493 = arith.addf %488, %492 : vector<1x256xf32>
    %c6_222 = arith.constant 6 : index
    %c160_223 = arith.constant 160 : index
    %494 = vector.load %arg4[%c6_222, %c160_223] : memref<14x512xf32, #tpu.memory_space<vmem>>, vector<1x256xf32>
    %c41 = arith.constant 41 : index
    %495 = memref.load %arg1[%c41] : memref<98xf32, #tpu.memory_space<smem>>
    %496 = vector.broadcast %495 : f32 to vector<1x256xf32>
    %497 = arith.mulf %496, %494 : vector<1x256xf32>
    %498 = arith.addf %493, %497 : vector<1x256xf32>
    %c7_224 = arith.constant 7 : index
    %c160_225 = arith.constant 160 : index
    %499 = vector.load %arg4[%c7_224, %c160_225] : memref<14x512xf32, #tpu.memory_space<vmem>>, vector<1x256xf32>
    %c84 = arith.constant 84 : index
    %500 = memref.load %arg1[%c84] : memref<98xf32, #tpu.memory_space<smem>>
    %501 = vector.broadcast %500 : f32 to vector<1x256xf32>
    %502 = arith.mulf %501, %499 : vector<1x256xf32>
    %503 = arith.addf %498, %502 : vector<1x256xf32>
    %c8_226 = arith.constant 8 : index
    %c160_227 = arith.constant 160 : index
    %504 = vector.load %arg4[%c8_226, %c160_227] : memref<14x512xf32, #tpu.memory_space<vmem>>, vector<1x256xf32>
    %c85 = arith.constant 85 : index
    %505 = memref.load %arg1[%c85] : memref<98xf32, #tpu.memory_space<smem>>
    %506 = vector.broadcast %505 : f32 to vector<1x256xf32>
    %507 = arith.mulf %506, %504 : vector<1x256xf32>
    %508 = arith.addf %503, %507 : vector<1x256xf32>
    %c9_228 = arith.constant 9 : index
    %c160_229 = arith.constant 160 : index
    %509 = vector.load %arg4[%c9_228, %c160_229] : memref<14x512xf32, #tpu.memory_space<vmem>>, vector<1x256xf32>
    %c86 = arith.constant 86 : index
    %510 = memref.load %arg1[%c86] : memref<98xf32, #tpu.memory_space<smem>>
    %511 = vector.broadcast %510 : f32 to vector<1x256xf32>
    %512 = arith.mulf %511, %509 : vector<1x256xf32>
    %513 = arith.addf %508, %512 : vector<1x256xf32>
    %c10_230 = arith.constant 10 : index
    %c160_231 = arith.constant 160 : index
    %514 = vector.load %arg4[%c10_230, %c160_231] : memref<14x512xf32, #tpu.memory_space<vmem>>, vector<1x256xf32>
    %c87 = arith.constant 87 : index
    %515 = memref.load %arg1[%c87] : memref<98xf32, #tpu.memory_space<smem>>
    %516 = vector.broadcast %515 : f32 to vector<1x256xf32>
    %517 = arith.mulf %516, %514 : vector<1x256xf32>
    %518 = arith.addf %513, %517 : vector<1x256xf32>
    %c11_232 = arith.constant 11 : index
    %c160_233 = arith.constant 160 : index
    %519 = vector.load %arg4[%c11_232, %c160_233] : memref<14x512xf32, #tpu.memory_space<vmem>>, vector<1x256xf32>
    %c88 = arith.constant 88 : index
    %520 = memref.load %arg1[%c88] : memref<98xf32, #tpu.memory_space<smem>>
    %521 = vector.broadcast %520 : f32 to vector<1x256xf32>
    %522 = arith.mulf %521, %519 : vector<1x256xf32>
    %523 = arith.addf %518, %522 : vector<1x256xf32>
    %c12_234 = arith.constant 12 : index
    %c160_235 = arith.constant 160 : index
    %524 = vector.load %arg4[%c12_234, %c160_235] : memref<14x512xf32, #tpu.memory_space<vmem>>, vector<1x256xf32>
    %c89 = arith.constant 89 : index
    %525 = memref.load %arg1[%c89] : memref<98xf32, #tpu.memory_space<smem>>
    %526 = vector.broadcast %525 : f32 to vector<1x256xf32>
    %527 = arith.mulf %526, %524 : vector<1x256xf32>
    %528 = arith.addf %523, %527 : vector<1x256xf32>
    %c13_236 = arith.constant 13 : index
    %c160_237 = arith.constant 160 : index
    %529 = vector.load %arg4[%c13_236, %c160_237] : memref<14x512xf32, #tpu.memory_space<vmem>>, vector<1x256xf32>
    %c90 = arith.constant 90 : index
    %530 = memref.load %arg1[%c90] : memref<98xf32, #tpu.memory_space<smem>>
    %531 = vector.broadcast %530 : f32 to vector<1x256xf32>
    %532 = arith.mulf %531, %529 : vector<1x256xf32>
    %533 = arith.addf %528, %532 : vector<1x256xf32>
    %c0_238 = arith.constant 0 : index
    %c176 = arith.constant 176 : index
    %534 = vector.load %arg4[%c0_238, %c176] : memref<14x512xf32, #tpu.memory_space<vmem>>, vector<1x256xf32>
    %c42 = arith.constant 42 : index
    %535 = memref.load %arg1[%c42] : memref<98xf32, #tpu.memory_space<smem>>
    %536 = vector.broadcast %535 : f32 to vector<1x256xf32>
    %537 = arith.mulf %536, %534 : vector<1x256xf32>
    %538 = arith.addf %533, %537 : vector<1x256xf32>
    %c1_239 = arith.constant 1 : index
    %c176_240 = arith.constant 176 : index
    %539 = vector.load %arg4[%c1_239, %c176_240] : memref<14x512xf32, #tpu.memory_space<vmem>>, vector<1x256xf32>
    %c43 = arith.constant 43 : index
    %540 = memref.load %arg1[%c43] : memref<98xf32, #tpu.memory_space<smem>>
    %541 = vector.broadcast %540 : f32 to vector<1x256xf32>
    %542 = arith.mulf %541, %539 : vector<1x256xf32>
    %543 = arith.addf %538, %542 : vector<1x256xf32>
    %c2_241 = arith.constant 2 : index
    %c176_242 = arith.constant 176 : index
    %544 = vector.load %arg4[%c2_241, %c176_242] : memref<14x512xf32, #tpu.memory_space<vmem>>, vector<1x256xf32>
    %c44 = arith.constant 44 : index
    %545 = memref.load %arg1[%c44] : memref<98xf32, #tpu.memory_space<smem>>
    %546 = vector.broadcast %545 : f32 to vector<1x256xf32>
    %547 = arith.mulf %546, %544 : vector<1x256xf32>
    %548 = arith.addf %543, %547 : vector<1x256xf32>
    %c3_243 = arith.constant 3 : index
    %c176_244 = arith.constant 176 : index
    %549 = vector.load %arg4[%c3_243, %c176_244] : memref<14x512xf32, #tpu.memory_space<vmem>>, vector<1x256xf32>
    %c45 = arith.constant 45 : index
    %550 = memref.load %arg1[%c45] : memref<98xf32, #tpu.memory_space<smem>>
    %551 = vector.broadcast %550 : f32 to vector<1x256xf32>
    %552 = arith.mulf %551, %549 : vector<1x256xf32>
    %553 = arith.addf %548, %552 : vector<1x256xf32>
    %c4_245 = arith.constant 4 : index
    %c176_246 = arith.constant 176 : index
    %554 = vector.load %arg4[%c4_245, %c176_246] : memref<14x512xf32, #tpu.memory_space<vmem>>, vector<1x256xf32>
    %c46 = arith.constant 46 : index
    %555 = memref.load %arg1[%c46] : memref<98xf32, #tpu.memory_space<smem>>
    %556 = vector.broadcast %555 : f32 to vector<1x256xf32>
    %557 = arith.mulf %556, %554 : vector<1x256xf32>
    %558 = arith.addf %553, %557 : vector<1x256xf32>
    %c5_247 = arith.constant 5 : index
    %c176_248 = arith.constant 176 : index
    %559 = vector.load %arg4[%c5_247, %c176_248] : memref<14x512xf32, #tpu.memory_space<vmem>>, vector<1x256xf32>
    %c47 = arith.constant 47 : index
    %560 = memref.load %arg1[%c47] : memref<98xf32, #tpu.memory_space<smem>>
    %561 = vector.broadcast %560 : f32 to vector<1x256xf32>
    %562 = arith.mulf %561, %559 : vector<1x256xf32>
    %563 = arith.addf %558, %562 : vector<1x256xf32>
    %c6_249 = arith.constant 6 : index
    %c176_250 = arith.constant 176 : index
    %564 = vector.load %arg4[%c6_249, %c176_250] : memref<14x512xf32, #tpu.memory_space<vmem>>, vector<1x256xf32>
    %c48 = arith.constant 48 : index
    %565 = memref.load %arg1[%c48] : memref<98xf32, #tpu.memory_space<smem>>
    %566 = vector.broadcast %565 : f32 to vector<1x256xf32>
    %567 = arith.mulf %566, %564 : vector<1x256xf32>
    %568 = arith.addf %563, %567 : vector<1x256xf32>
    %c7_251 = arith.constant 7 : index
    %c176_252 = arith.constant 176 : index
    %569 = vector.load %arg4[%c7_251, %c176_252] : memref<14x512xf32, #tpu.memory_space<vmem>>, vector<1x256xf32>
    %c91 = arith.constant 91 : index
    %570 = memref.load %arg1[%c91] : memref<98xf32, #tpu.memory_space<smem>>
    %571 = vector.broadcast %570 : f32 to vector<1x256xf32>
    %572 = arith.mulf %571, %569 : vector<1x256xf32>
    %573 = arith.addf %568, %572 : vector<1x256xf32>
    %c8_253 = arith.constant 8 : index
    %c176_254 = arith.constant 176 : index
    %574 = vector.load %arg4[%c8_253, %c176_254] : memref<14x512xf32, #tpu.memory_space<vmem>>, vector<1x256xf32>
    %c92 = arith.constant 92 : index
    %575 = memref.load %arg1[%c92] : memref<98xf32, #tpu.memory_space<smem>>
    %576 = vector.broadcast %575 : f32 to vector<1x256xf32>
    %577 = arith.mulf %576, %574 : vector<1x256xf32>
    %578 = arith.addf %573, %577 : vector<1x256xf32>
    %c9_255 = arith.constant 9 : index
    %c176_256 = arith.constant 176 : index
    %579 = vector.load %arg4[%c9_255, %c176_256] : memref<14x512xf32, #tpu.memory_space<vmem>>, vector<1x256xf32>
    %c93 = arith.constant 93 : index
    %580 = memref.load %arg1[%c93] : memref<98xf32, #tpu.memory_space<smem>>
    %581 = vector.broadcast %580 : f32 to vector<1x256xf32>
    %582 = arith.mulf %581, %579 : vector<1x256xf32>
    %583 = arith.addf %578, %582 : vector<1x256xf32>
    %c10_257 = arith.constant 10 : index
    %c176_258 = arith.constant 176 : index
    %584 = vector.load %arg4[%c10_257, %c176_258] : memref<14x512xf32, #tpu.memory_space<vmem>>, vector<1x256xf32>
    %c94 = arith.constant 94 : index
    %585 = memref.load %arg1[%c94] : memref<98xf32, #tpu.memory_space<smem>>
    %586 = vector.broadcast %585 : f32 to vector<1x256xf32>
    %587 = arith.mulf %586, %584 : vector<1x256xf32>
    %588 = arith.addf %583, %587 : vector<1x256xf32>
    %c11_259 = arith.constant 11 : index
    %c176_260 = arith.constant 176 : index
    %589 = vector.load %arg4[%c11_259, %c176_260] : memref<14x512xf32, #tpu.memory_space<vmem>>, vector<1x256xf32>
    %c95 = arith.constant 95 : index
    %590 = memref.load %arg1[%c95] : memref<98xf32, #tpu.memory_space<smem>>
    %591 = vector.broadcast %590 : f32 to vector<1x256xf32>
    %592 = arith.mulf %591, %589 : vector<1x256xf32>
    %593 = arith.addf %588, %592 : vector<1x256xf32>
    %c12_261 = arith.constant 12 : index
    %c176_262 = arith.constant 176 : index
    %594 = vector.load %arg4[%c12_261, %c176_262] : memref<14x512xf32, #tpu.memory_space<vmem>>, vector<1x256xf32>
    %c96_263 = arith.constant 96 : index
    %595 = memref.load %arg1[%c96_263] : memref<98xf32, #tpu.memory_space<smem>>
    %596 = vector.broadcast %595 : f32 to vector<1x256xf32>
    %597 = arith.mulf %596, %594 : vector<1x256xf32>
    %598 = arith.addf %593, %597 : vector<1x256xf32>
    %c13_264 = arith.constant 13 : index
    %c176_265 = arith.constant 176 : index
    %599 = vector.load %arg4[%c13_264, %c176_265] : memref<14x512xf32, #tpu.memory_space<vmem>>, vector<1x256xf32>
    %c97 = arith.constant 97 : index
    %600 = memref.load %arg1[%c97] : memref<98xf32, #tpu.memory_space<smem>>
    %601 = vector.broadcast %600 : f32 to vector<1x256xf32>
    %602 = arith.mulf %601, %599 : vector<1x256xf32>
    %603 = arith.addf %598, %602 : vector<1x256xf32>
    %604 = arith.negf %603 : vector<1x256xf32>
    %605 = math.exp %604 : vector<1x256xf32>
    %cst_266 = arith.constant 1.000000e+00 : f32
    %606 = vector.broadcast %cst_266 : f32 to vector<1x256xf32>
    %607 = arith.addf %606, %605 : vector<1x256xf32>
    %608 = arith.divf %606, %607 : vector<1x256xf32>
    %609 = vector.shape_cast %608 : vector<1x256xf32> to vector<1x256xf32>
    %610 = vector.broadcast %609 : vector<1x256xf32> to vector<4x256xf32>
    %c0_267 = arith.constant 0 : index
    %c0_268 = arith.constant 0 : index
    %c0_269 = arith.constant 0 : index
    %611 = vector.load %arg2[%c0_267, %c0_268, %c0_269] : memref<2x4x256xf32, #tpu.memory_space<vmem>>, vector<1x4x256xf32>
    %612 = vector.shape_cast %611 : vector<1x4x256xf32> to vector<4x256xf32>
    %613 = arith.mulf %612, %610 : vector<4x256xf32>
    %c0_270 = arith.constant 0 : index
    %c0_271 = arith.constant 0 : index
    %c0_272 = arith.constant 0 : index
    %614 = vector.load %arg3[%c0_270, %c0_271, %c0_272] : memref<2x4x256xf32, #tpu.memory_space<vmem>>, vector<1x4x256xf32>
    %615 = vector.shape_cast %614 : vector<1x4x256xf32> to vector<4x256xf32>
    %616 = vector.shape_cast %613 : vector<4x256xf32> to vector<1x4x256xf32>
    tpu.vector_store %arg3[%c0_270, %c0_271, %c0_272], %616 {strides = array<i32>} : memref<2x4x256xf32, #tpu.memory_space<vmem>>, vector<1x4x256xf32>,
    %cst_273 = arith.constant 0.000000e+00 : f32
    %617 = vector.broadcast %cst_273 : f32 to vector<1x256xf32>
    %cst_274 = arith.constant 0xFF800000 : f32
    %618 = vector.broadcast %cst_274 : f32 to vector<1x256xf32>
    %c1_275 = arith.constant 1 : index
    %c0_276 = arith.constant 0 : index
    %c0_277 = arith.constant 0 : index
    %619 = vector.load %arg2[%c1_275, %c0_276, %c0_277] : memref<2x4x256xf32, #tpu.memory_space<vmem>>, vector<1x4x256xf32>
    %620 = vector.shape_cast %619 : vector<1x4x256xf32> to vector<4x256xf32>
    %cst_278 = arith.constant dense<0.000000e+00> : vector<256xf32>
    %621 = vector.multi_reduction <add>, %620, %cst_278 [0] : vector<4x256xf32> to vector<256xf32>
    %622 = vector.shape_cast %621 : vector<256xf32> to vector<1x256xf32>
    %623 = arith.addf %617, %622 : vector<1x256xf32>
    %cst_279 = arith.constant dense<0xFF800000> : vector<256xf32>
    %624 = vector.multi_reduction <maximumf>, %620, %cst_279 [0] : vector<4x256xf32> to vector<256xf32>
    %625 = vector.shape_cast %624 : vector<256xf32> to vector<1x256xf32>
    %626 = arith.maximumf %618, %625 : vector<1x256xf32>
    %cst_280 = arith.constant 2.500000e-01 : f32
    %627 = vector.broadcast %cst_280 : f32 to vector<1x256xf32>
    %628 = arith.mulf %623, %627 : vector<1x256xf32>
    %c3_281 = arith.constant 3 : index
    %c128_282 = arith.constant 128 : index
    %629 = vector.load %arg4[%c3_281, %c128_282] : memref<14x512xf32, #tpu.memory_space<vmem>>, vector<1x256xf32>
    tpu.vector_store %arg4[%c3_281, %c128_282], %628 {strides = array<i32>} : memref<14x512xf32, #tpu.memory_space<vmem>>, vector<1x256xf32>,
    %c10_283 = arith.constant 10 : index
    %c128_284 = arith.constant 128 : index
    %630 = vector.load %arg4[%c10_283, %c128_284] : memref<14x512xf32, #tpu.memory_space<vmem>>, vector<1x256xf32>
    tpu.vector_store %arg4[%c10_283, %c128_284], %626 {strides = array<i32>} : memref<14x512xf32, #tpu.memory_space<vmem>>, vector<1x256xf32>,
    %c3_i32_285 = arith.constant 3 : i32
    %631 = vector.broadcast %c3_i32_285 : i32 to vector<1x256xi32>
    %632 = arith.cmpi sge, %20, %631 : vector<1x256xi32>
    %c19_i32_286 = arith.constant 19 : i32
    %633 = vector.broadcast %c19_i32_286 : i32 to vector<1x256xi32>
    %634 = arith.cmpi slt, %20, %633 : vector<1x256xi32>
    %635 = arith.andi %632, %634 : vector<1x256xi1>
    %c3_287 = arith.constant 3 : index
    %c125_288 = arith.constant 125 : index
    %636 = vector.load %arg4[%c3_287, %c125_288] : memref<14x512xf32, #tpu.memory_space<vmem>>, vector<1x256xf32>
    %cst_289 = arith.constant 0.000000e+00 : f32
    %637 = vector.broadcast %cst_289 : f32 to vector<1x256xf32>
    %638 = arith.select %635, %636, %637 : vector<1x256xi1>, vector<1x256xf32>
    %c0_290 = arith.constant 0 : index
    %c128_291 = arith.constant 128 : index
    %639 = vector.load %arg4[%c0_290, %c128_291] : memref<14x512xf32, #tpu.memory_space<vmem>>, vector<1x256xf32>
    tpu.vector_store %arg4[%c0_290, %c128_291], %638 {strides = array<i32>} : memref<14x512xf32, #tpu.memory_space<vmem>>, vector<1x256xf32>,
    %c10_292 = arith.constant 10 : index
    %c125_293 = arith.constant 125 : index
    %640 = vector.load %arg4[%c10_292, %c125_293] : memref<14x512xf32, #tpu.memory_space<vmem>>, vector<1x256xf32>
    %cst_294 = arith.constant 0.000000e+00 : f32
    %641 = vector.broadcast %cst_294 : f32 to vector<1x256xf32>
    %642 = arith.select %635, %640, %641 : vector<1x256xi1>, vector<1x256xf32>
    %c7_295 = arith.constant 7 : index
    %c128_296 = arith.constant 128 : index
    %643 = vector.load %arg4[%c7_295, %c128_296] : memref<14x512xf32, #tpu.memory_space<vmem>>, vector<1x256xf32>
    tpu.vector_store %arg4[%c7_295, %c128_296], %642 {strides = array<i32>} : memref<14x512xf32, #tpu.memory_space<vmem>>, vector<1x256xf32>,
    %c2_i32_297 = arith.constant 2 : i32
    %644 = vector.broadcast %c2_i32_297 : i32 to vector<1x256xi32>
    %645 = arith.cmpi sge, %20, %644 : vector<1x256xi32>
    %c18_i32_298 = arith.constant 18 : i32
    %646 = vector.broadcast %c18_i32_298 : i32 to vector<1x256xi32>
    %647 = arith.cmpi slt, %20, %646 : vector<1x256xi32>
    %648 = arith.andi %645, %647 : vector<1x256xi1>
    %c3_299 = arith.constant 3 : index
    %c126_300 = arith.constant 126 : index
    %649 = vector.load %arg4[%c3_299, %c126_300] : memref<14x512xf32, #tpu.memory_space<vmem>>, vector<1x256xf32>
    %cst_301 = arith.constant 0.000000e+00 : f32
    %650 = vector.broadcast %cst_301 : f32 to vector<1x256xf32>
    %651 = arith.select %648, %649, %650 : vector<1x256xi1>, vector<1x256xf32>
    %c1_302 = arith.constant 1 : index
    %c128_303 = arith.constant 128 : index
    %652 = vector.load %arg4[%c1_302, %c128_303] : memref<14x512xf32, #tpu.memory_space<vmem>>, vector<1x256xf32>
    tpu.vector_store %arg4[%c1_302, %c128_303], %651 {strides = array<i32>} : memref<14x512xf32, #tpu.memory_space<vmem>>, vector<1x256xf32>,
    %c10_304 = arith.constant 10 : index
    %c126_305 = arith.constant 126 : index
    %653 = vector.load %arg4[%c10_304, %c126_305] : memref<14x512xf32, #tpu.memory_space<vmem>>, vector<1x256xf32>
    %cst_306 = arith.constant 0.000000e+00 : f32
    %654 = vector.broadcast %cst_306 : f32 to vector<1x256xf32>
    %655 = arith.select %648, %653, %654 : vector<1x256xi1>, vector<1x256xf32>
    %c8_307 = arith.constant 8 : index
    %c128_308 = arith.constant 128 : index
    %656 = vector.load %arg4[%c8_307, %c128_308] : memref<14x512xf32, #tpu.memory_space<vmem>>, vector<1x256xf32>
    tpu.vector_store %arg4[%c8_307, %c128_308], %655 {strides = array<i32>} : memref<14x512xf32, #tpu.memory_space<vmem>>, vector<1x256xf32>,
    %c1_i32_309 = arith.constant 1 : i32
    %657 = vector.broadcast %c1_i32_309 : i32 to vector<1x256xi32>
    %658 = arith.cmpi sge, %20, %657 : vector<1x256xi32>
    %c17_i32_310 = arith.constant 17 : i32
    %659 = vector.broadcast %c17_i32_310 : i32 to vector<1x256xi32>
    %660 = arith.cmpi slt, %20, %659 : vector<1x256xi32>
    %661 = arith.andi %658, %660 : vector<1x256xi1>
    %c3_311 = arith.constant 3 : index
    %c127_312 = arith.constant 127 : index
    %662 = vector.load %arg4[%c3_311, %c127_312] : memref<14x512xf32, #tpu.memory_space<vmem>>, vector<1x256xf32>
    %cst_313 = arith.constant 0.000000e+00 : f32
    %663 = vector.broadcast %cst_313 : f32 to vector<1x256xf32>
    %664 = arith.select %661, %662, %663 : vector<1x256xi1>, vector<1x256xf32>
    %c2_314 = arith.constant 2 : index
    %c128_315 = arith.constant 128 : index
    %665 = vector.load %arg4[%c2_314, %c128_315] : memref<14x512xf32, #tpu.memory_space<vmem>>, vector<1x256xf32>
    tpu.vector_store %arg4[%c2_314, %c128_315], %664 {strides = array<i32>} : memref<14x512xf32, #tpu.memory_space<vmem>>, vector<1x256xf32>,
    %c10_316 = arith.constant 10 : index
    %c127_317 = arith.constant 127 : index
    %666 = vector.load %arg4[%c10_316, %c127_317] : memref<14x512xf32, #tpu.memory_space<vmem>>, vector<1x256xf32>
    %cst_318 = arith.constant 0.000000e+00 : f32
    %667 = vector.broadcast %cst_318 : f32 to vector<1x256xf32>
    %668 = arith.select %661, %666, %667 : vector<1x256xi1>, vector<1x256xf32>
    %c9_319 = arith.constant 9 : index
    %c128_320 = arith.constant 128 : index
    %669 = vector.load %arg4[%c9_319, %c128_320] : memref<14x512xf32, #tpu.memory_space<vmem>>, vector<1x256xf32>
    tpu.vector_store %arg4[%c9_319, %c128_320], %668 {strides = array<i32>} : memref<14x512xf32, #tpu.memory_space<vmem>>, vector<1x256xf32>,
    %c-1_i32_321 = arith.constant -1 : i32
    %670 = vector.broadcast %c-1_i32_321 : i32 to vector<1x256xi32>
    %671 = arith.cmpi sge, %20, %670 : vector<1x256xi32>
    %c15_i32_322 = arith.constant 15 : i32
    %672 = vector.broadcast %c15_i32_322 : i32 to vector<1x256xi32>
    %673 = arith.cmpi slt, %20, %672 : vector<1x256xi32>
    %674 = arith.andi %671, %673 : vector<1x256xi1>
    %c3_323 = arith.constant 3 : index
    %c129_324 = arith.constant 129 : index
    %675 = vector.load %arg4[%c3_323, %c129_324] : memref<14x512xf32, #tpu.memory_space<vmem>>, vector<1x256xf32>
    %cst_325 = arith.constant 0.000000e+00 : f32
    %676 = vector.broadcast %cst_325 : f32 to vector<1x256xf32>
    %677 = arith.select %674, %675, %676 : vector<1x256xi1>, vector<1x256xf32>
    %c4_326 = arith.constant 4 : index
    %c128_327 = arith.constant 128 : index
    %678 = vector.load %arg4[%c4_326, %c128_327] : memref<14x512xf32, #tpu.memory_space<vmem>>, vector<1x256xf32>
    tpu.vector_store %arg4[%c4_326, %c128_327], %677 {strides = array<i32>} : memref<14x512xf32, #tpu.memory_space<vmem>>, vector<1x256xf32>,
    %c10_328 = arith.constant 10 : index
    %c129_329 = arith.constant 129 : index
    %679 = vector.load %arg4[%c10_328, %c129_329] : memref<14x512xf32, #tpu.memory_space<vmem>>, vector<1x256xf32>
    %cst_330 = arith.constant 0.000000e+00 : f32
    %680 = vector.broadcast %cst_330 : f32 to vector<1x256xf32>
    %681 = arith.select %674, %679, %680 : vector<1x256xi1>, vector<1x256xf32>
    %c11_331 = arith.constant 11 : index
    %c128_332 = arith.constant 128 : index
    %682 = vector.load %arg4[%c11_331, %c128_332] : memref<14x512xf32, #tpu.memory_space<vmem>>, vector<1x256xf32>
    tpu.vector_store %arg4[%c11_331, %c128_332], %681 {strides = array<i32>} : memref<14x512xf32, #tpu.memory_space<vmem>>, vector<1x256xf32>,
    %c-2_i32_333 = arith.constant -2 : i32
    %683 = vector.broadcast %c-2_i32_333 : i32 to vector<1x256xi32>
    %684 = arith.cmpi sge, %20, %683 : vector<1x256xi32>
    %c14_i32_334 = arith.constant 14 : i32
    %685 = vector.broadcast %c14_i32_334 : i32 to vector<1x256xi32>
    %686 = arith.cmpi slt, %20, %685 : vector<1x256xi32>
    %687 = arith.andi %684, %686 : vector<1x256xi1>
    %c3_335 = arith.constant 3 : index
    %c130_336 = arith.constant 130 : index
    %688 = vector.load %arg4[%c3_335, %c130_336] : memref<14x512xf32, #tpu.memory_space<vmem>>, vector<1x256xf32>
    %cst_337 = arith.constant 0.000000e+00 : f32
    %689 = vector.broadcast %cst_337 : f32 to vector<1x256xf32>
    %690 = arith.select %687, %688, %689 : vector<1x256xi1>, vector<1x256xf32>
    %c5_338 = arith.constant 5 : index
    %c128_339 = arith.constant 128 : index
    %691 = vector.load %arg4[%c5_338, %c128_339] : memref<14x512xf32, #tpu.memory_space<vmem>>, vector<1x256xf32>
    tpu.vector_store %arg4[%c5_338, %c128_339], %690 {strides = array<i32>} : memref<14x512xf32, #tpu.memory_space<vmem>>, vector<1x256xf32>,
    %c10_340 = arith.constant 10 : index
    %c130_341 = arith.constant 130 : index
    %692 = vector.load %arg4[%c10_340, %c130_341] : memref<14x512xf32, #tpu.memory_space<vmem>>, vector<1x256xf32>
    %cst_342 = arith.constant 0.000000e+00 : f32
    %693 = vector.broadcast %cst_342 : f32 to vector<1x256xf32>
    %694 = arith.select %687, %692, %693 : vector<1x256xi1>, vector<1x256xf32>
    %c12_343 = arith.constant 12 : index
    %c128_344 = arith.constant 128 : index
    %695 = vector.load %arg4[%c12_343, %c128_344] : memref<14x512xf32, #tpu.memory_space<vmem>>, vector<1x256xf32>
    tpu.vector_store %arg4[%c12_343, %c128_344], %694 {strides = array<i32>} : memref<14x512xf32, #tpu.memory_space<vmem>>, vector<1x256xf32>,
    %c-3_i32_345 = arith.constant -3 : i32
    %696 = vector.broadcast %c-3_i32_345 : i32 to vector<1x256xi32>
    %697 = arith.cmpi sge, %20, %696 : vector<1x256xi32>
    %c13_i32_346 = arith.constant 13 : i32
    %698 = vector.broadcast %c13_i32_346 : i32 to vector<1x256xi32>
    %699 = arith.cmpi slt, %20, %698 : vector<1x256xi32>
    %700 = arith.andi %697, %699 : vector<1x256xi1>
    %c3_347 = arith.constant 3 : index
    %c131_348 = arith.constant 131 : index
    %701 = vector.load %arg4[%c3_347, %c131_348] : memref<14x512xf32, #tpu.memory_space<vmem>>, vector<1x256xf32>
    %cst_349 = arith.constant 0.000000e+00 : f32
    %702 = vector.broadcast %cst_349 : f32 to vector<1x256xf32>
    %703 = arith.select %700, %701, %702 : vector<1x256xi1>, vector<1x256xf32>
    %c6_350 = arith.constant 6 : index
    %c128_351 = arith.constant 128 : index
    %704 = vector.load %arg4[%c6_350, %c128_351] : memref<14x512xf32, #tpu.memory_space<vmem>>, vector<1x256xf32>
    tpu.vector_store %arg4[%c6_350, %c128_351], %703 {strides = array<i32>} : memref<14x512xf32, #tpu.memory_space<vmem>>, vector<1x256xf32>,
    %c10_352 = arith.constant 10 : index
    %c131_353 = arith.constant 131 : index
    %705 = vector.load %arg4[%c10_352, %c131_353] : memref<14x512xf32, #tpu.memory_space<vmem>>, vector<1x256xf32>
    %cst_354 = arith.constant 0.000000e+00 : f32
    %706 = vector.broadcast %cst_354 : f32 to vector<1x256xf32>
    %707 = arith.select %700, %705, %706 : vector<1x256xi1>, vector<1x256xf32>
    %c13_355 = arith.constant 13 : index
    %c128_356 = arith.constant 128 : index
    %708 = vector.load %arg4[%c13_355, %c128_356] : memref<14x512xf32, #tpu.memory_space<vmem>>, vector<1x256xf32>
    tpu.vector_store %arg4[%c13_355, %c128_356], %707 {strides = array<i32>} : memref<14x512xf32, #tpu.memory_space<vmem>>, vector<1x256xf32>,
    %cst_357 = arith.constant 0.000000e+00 : f32
    %709 = vector.broadcast %cst_357 : f32 to vector<1x256xf32>
    %c0_358 = arith.constant 0 : index
    %c80_359 = arith.constant 80 : index
    %710 = vector.load %arg4[%c0_358, %c80_359] : memref<14x512xf32, #tpu.memory_space<vmem>>, vector<1x256xf32>
    %c0_360 = arith.constant 0 : index
    %711 = memref.load %arg1[%c0_360] : memref<98xf32, #tpu.memory_space<smem>>
    %712 = vector.broadcast %711 : f32 to vector<1x256xf32>
    %713 = arith.mulf %712, %710 : vector<1x256xf32>
    %714 = arith.addf %709, %713 : vector<1x256xf32>
    %c1_361 = arith.constant 1 : index
    %c80_362 = arith.constant 80 : index
    %715 = vector.load %arg4[%c1_361, %c80_362] : memref<14x512xf32, #tpu.memory_space<vmem>>, vector<1x256xf32>
    %c1_363 = arith.constant 1 : index
    %716 = memref.load %arg1[%c1_363] : memref<98xf32, #tpu.memory_space<smem>>
    %717 = vector.broadcast %716 : f32 to vector<1x256xf32>
    %718 = arith.mulf %717, %715 : vector<1x256xf32>
    %719 = arith.addf %714, %718 : vector<1x256xf32>
    %c2_364 = arith.constant 2 : index
    %c80_365 = arith.constant 80 : index
    %720 = vector.load %arg4[%c2_364, %c80_365] : memref<14x512xf32, #tpu.memory_space<vmem>>, vector<1x256xf32>
    %c2_366 = arith.constant 2 : index
    %721 = memref.load %arg1[%c2_366] : memref<98xf32, #tpu.memory_space<smem>>
    %722 = vector.broadcast %721 : f32 to vector<1x256xf32>
    %723 = arith.mulf %722, %720 : vector<1x256xf32>
    %724 = arith.addf %719, %723 : vector<1x256xf32>
    %c3_367 = arith.constant 3 : index
    %c80_368 = arith.constant 80 : index
    %725 = vector.load %arg4[%c3_367, %c80_368] : memref<14x512xf32, #tpu.memory_space<vmem>>, vector<1x256xf32>
    %c3_369 = arith.constant 3 : index
    %726 = memref.load %arg1[%c3_369] : memref<98xf32, #tpu.memory_space<smem>>
    %727 = vector.broadcast %726 : f32 to vector<1x256xf32>
    %728 = arith.mulf %727, %725 : vector<1x256xf32>
    %729 = arith.addf %724, %728 : vector<1x256xf32>
    %c4_370 = arith.constant 4 : index
    %c80_371 = arith.constant 80 : index
    %730 = vector.load %arg4[%c4_370, %c80_371] : memref<14x512xf32, #tpu.memory_space<vmem>>, vector<1x256xf32>
    %c4_372 = arith.constant 4 : index
    %731 = memref.load %arg1[%c4_372] : memref<98xf32, #tpu.memory_space<smem>>
    %732 = vector.broadcast %731 : f32 to vector<1x256xf32>
    %733 = arith.mulf %732, %730 : vector<1x256xf32>
    %734 = arith.addf %729, %733 : vector<1x256xf32>
    %c5_373 = arith.constant 5 : index
    %c80_374 = arith.constant 80 : index
    %735 = vector.load %arg4[%c5_373, %c80_374] : memref<14x512xf32, #tpu.memory_space<vmem>>, vector<1x256xf32>
    %c5_375 = arith.constant 5 : index
    %736 = memref.load %arg1[%c5_375] : memref<98xf32, #tpu.memory_space<smem>>
    %737 = vector.broadcast %736 : f32 to vector<1x256xf32>
    %738 = arith.mulf %737, %735 : vector<1x256xf32>
    %739 = arith.addf %734, %738 : vector<1x256xf32>
    %c6_376 = arith.constant 6 : index
    %c80_377 = arith.constant 80 : index
    %740 = vector.load %arg4[%c6_376, %c80_377] : memref<14x512xf32, #tpu.memory_space<vmem>>, vector<1x256xf32>
    %c6_378 = arith.constant 6 : index
    %741 = memref.load %arg1[%c6_378] : memref<98xf32, #tpu.memory_space<smem>>
    %742 = vector.broadcast %741 : f32 to vector<1x256xf32>
    %743 = arith.mulf %742, %740 : vector<1x256xf32>
    %744 = arith.addf %739, %743 : vector<1x256xf32>
    %c7_379 = arith.constant 7 : index
    %c80_380 = arith.constant 80 : index
    %745 = vector.load %arg4[%c7_379, %c80_380] : memref<14x512xf32, #tpu.memory_space<vmem>>, vector<1x256xf32>
    %c49_381 = arith.constant 49 : index
    %746 = memref.load %arg1[%c49_381] : memref<98xf32, #tpu.memory_space<smem>>
    %747 = vector.broadcast %746 : f32 to vector<1x256xf32>
    %748 = arith.mulf %747, %745 : vector<1x256xf32>
    %749 = arith.addf %744, %748 : vector<1x256xf32>
    %c8_382 = arith.constant 8 : index
    %c80_383 = arith.constant 80 : index
    %750 = vector.load %arg4[%c8_382, %c80_383] : memref<14x512xf32, #tpu.memory_space<vmem>>, vector<1x256xf32>
    %c50_384 = arith.constant 50 : index
    %751 = memref.load %arg1[%c50_384] : memref<98xf32, #tpu.memory_space<smem>>
    %752 = vector.broadcast %751 : f32 to vector<1x256xf32>
    %753 = arith.mulf %752, %750 : vector<1x256xf32>
    %754 = arith.addf %749, %753 : vector<1x256xf32>
    %c9_385 = arith.constant 9 : index
    %c80_386 = arith.constant 80 : index
    %755 = vector.load %arg4[%c9_385, %c80_386] : memref<14x512xf32, #tpu.memory_space<vmem>>, vector<1x256xf32>
    %c51_387 = arith.constant 51 : index
    %756 = memref.load %arg1[%c51_387] : memref<98xf32, #tpu.memory_space<smem>>
    %757 = vector.broadcast %756 : f32 to vector<1x256xf32>
    %758 = arith.mulf %757, %755 : vector<1x256xf32>
    %759 = arith.addf %754, %758 : vector<1x256xf32>
    %c10_388 = arith.constant 10 : index
    %c80_389 = arith.constant 80 : index
    %760 = vector.load %arg4[%c10_388, %c80_389] : memref<14x512xf32, #tpu.memory_space<vmem>>, vector<1x256xf32>
    %c52_390 = arith.constant 52 : index
    %761 = memref.load %arg1[%c52_390] : memref<98xf32, #tpu.memory_space<smem>>
    %762 = vector.broadcast %761 : f32 to vector<1x256xf32>
    %763 = arith.mulf %762, %760 : vector<1x256xf32>
    %764 = arith.addf %759, %763 : vector<1x256xf32>
    %c11_391 = arith.constant 11 : index
    %c80_392 = arith.constant 80 : index
    %765 = vector.load %arg4[%c11_391, %c80_392] : memref<14x512xf32, #tpu.memory_space<vmem>>, vector<1x256xf32>
    %c53_393 = arith.constant 53 : index
    %766 = memref.load %arg1[%c53_393] : memref<98xf32, #tpu.memory_space<smem>>
    %767 = vector.broadcast %766 : f32 to vector<1x256xf32>
    %768 = arith.mulf %767, %765 : vector<1x256xf32>
    %769 = arith.addf %764, %768 : vector<1x256xf32>
    %c12_394 = arith.constant 12 : index
    %c80_395 = arith.constant 80 : index
    %770 = vector.load %arg4[%c12_394, %c80_395] : memref<14x512xf32, #tpu.memory_space<vmem>>, vector<1x256xf32>
    %c54_396 = arith.constant 54 : index
    %771 = memref.load %arg1[%c54_396] : memref<98xf32, #tpu.memory_space<smem>>
    %772 = vector.broadcast %771 : f32 to vector<1x256xf32>
    %773 = arith.mulf %772, %770 : vector<1x256xf32>
    %774 = arith.addf %769, %773 : vector<1x256xf32>
    %c13_397 = arith.constant 13 : index
    %c80_398 = arith.constant 80 : index
    %775 = vector.load %arg4[%c13_397, %c80_398] : memref<14x512xf32, #tpu.memory_space<vmem>>, vector<1x256xf32>
    %c55_399 = arith.constant 55 : index
    %776 = memref.load %arg1[%c55_399] : memref<98xf32, #tpu.memory_space<smem>>
    %777 = vector.broadcast %776 : f32 to vector<1x256xf32>
    %778 = arith.mulf %777, %775 : vector<1x256xf32>
    %779 = arith.addf %774, %778 : vector<1x256xf32>
    %c0_400 = arith.constant 0 : index
    %c96_401 = arith.constant 96 : index
    %780 = vector.load %arg4[%c0_400, %c96_401] : memref<14x512xf32, #tpu.memory_space<vmem>>, vector<1x256xf32>
    %c7_402 = arith.constant 7 : index
    %781 = memref.load %arg1[%c7_402] : memref<98xf32, #tpu.memory_space<smem>>
    %782 = vector.broadcast %781 : f32 to vector<1x256xf32>
    %783 = arith.mulf %782, %780 : vector<1x256xf32>
    %784 = arith.addf %779, %783 : vector<1x256xf32>
    %c1_403 = arith.constant 1 : index
    %c96_404 = arith.constant 96 : index
    %785 = vector.load %arg4[%c1_403, %c96_404] : memref<14x512xf32, #tpu.memory_space<vmem>>, vector<1x256xf32>
    %c8_405 = arith.constant 8 : index
    %786 = memref.load %arg1[%c8_405] : memref<98xf32, #tpu.memory_space<smem>>
    %787 = vector.broadcast %786 : f32 to vector<1x256xf32>
    %788 = arith.mulf %787, %785 : vector<1x256xf32>
    %789 = arith.addf %784, %788 : vector<1x256xf32>
    %c2_406 = arith.constant 2 : index
    %c96_407 = arith.constant 96 : index
    %790 = vector.load %arg4[%c2_406, %c96_407] : memref<14x512xf32, #tpu.memory_space<vmem>>, vector<1x256xf32>
    %c9_408 = arith.constant 9 : index
    %791 = memref.load %arg1[%c9_408] : memref<98xf32, #tpu.memory_space<smem>>
    %792 = vector.broadcast %791 : f32 to vector<1x256xf32>
    %793 = arith.mulf %792, %790 : vector<1x256xf32>
    %794 = arith.addf %789, %793 : vector<1x256xf32>
    %c3_409 = arith.constant 3 : index
    %c96_410 = arith.constant 96 : index
    %795 = vector.load %arg4[%c3_409, %c96_410] : memref<14x512xf32, #tpu.memory_space<vmem>>, vector<1x256xf32>
    %c10_411 = arith.constant 10 : index
    %796 = memref.load %arg1[%c10_411] : memref<98xf32, #tpu.memory_space<smem>>
    %797 = vector.broadcast %796 : f32 to vector<1x256xf32>
    %798 = arith.mulf %797, %795 : vector<1x256xf32>
    %799 = arith.addf %794, %798 : vector<1x256xf32>
    %c4_412 = arith.constant 4 : index
    %c96_413 = arith.constant 96 : index
    %800 = vector.load %arg4[%c4_412, %c96_413] : memref<14x512xf32, #tpu.memory_space<vmem>>, vector<1x256xf32>
    %c11_414 = arith.constant 11 : index
    %801 = memref.load %arg1[%c11_414] : memref<98xf32, #tpu.memory_space<smem>>
    %802 = vector.broadcast %801 : f32 to vector<1x256xf32>
    %803 = arith.mulf %802, %800 : vector<1x256xf32>
    %804 = arith.addf %799, %803 : vector<1x256xf32>
    %c5_415 = arith.constant 5 : index
    %c96_416 = arith.constant 96 : index
    %805 = vector.load %arg4[%c5_415, %c96_416] : memref<14x512xf32, #tpu.memory_space<vmem>>, vector<1x256xf32>
    %c12_417 = arith.constant 12 : index
    %806 = memref.load %arg1[%c12_417] : memref<98xf32, #tpu.memory_space<smem>>
    %807 = vector.broadcast %806 : f32 to vector<1x256xf32>
    %808 = arith.mulf %807, %805 : vector<1x256xf32>
    %809 = arith.addf %804, %808 : vector<1x256xf32>
    %c6_418 = arith.constant 6 : index
    %c96_419 = arith.constant 96 : index
    %810 = vector.load %arg4[%c6_418, %c96_419] : memref<14x512xf32, #tpu.memory_space<vmem>>, vector<1x256xf32>
    %c13_420 = arith.constant 13 : index
    %811 = memref.load %arg1[%c13_420] : memref<98xf32, #tpu.memory_space<smem>>
    %812 = vector.broadcast %811 : f32 to vector<1x256xf32>
    %813 = arith.mulf %812, %810 : vector<1x256xf32>
    %814 = arith.addf %809, %813 : vector<1x256xf32>
    %c7_421 = arith.constant 7 : index
    %c96_422 = arith.constant 96 : index
    %815 = vector.load %arg4[%c7_421, %c96_422] : memref<14x512xf32, #tpu.memory_space<vmem>>, vector<1x256xf32>
    %c56_423 = arith.constant 56 : index
    %816 = memref.load %arg1[%c56_423] : memref<98xf32, #tpu.memory_space<smem>>
    %817 = vector.broadcast %816 : f32 to vector<1x256xf32>
    %818 = arith.mulf %817, %815 : vector<1x256xf32>
    %819 = arith.addf %814, %818 : vector<1x256xf32>
    %c8_424 = arith.constant 8 : index
    %c96_425 = arith.constant 96 : index
    %820 = vector.load %arg4[%c8_424, %c96_425] : memref<14x512xf32, #tpu.memory_space<vmem>>, vector<1x256xf32>
    %c57_426 = arith.constant 57 : index
    %821 = memref.load %arg1[%c57_426] : memref<98xf32, #tpu.memory_space<smem>>
    %822 = vector.broadcast %821 : f32 to vector<1x256xf32>
    %823 = arith.mulf %822, %820 : vector<1x256xf32>
    %824 = arith.addf %819, %823 : vector<1x256xf32>
    %c9_427 = arith.constant 9 : index
    %c96_428 = arith.constant 96 : index
    %825 = vector.load %arg4[%c9_427, %c96_428] : memref<14x512xf32, #tpu.memory_space<vmem>>, vector<1x256xf32>
    %c58_429 = arith.constant 58 : index
    %826 = memref.load %arg1[%c58_429] : memref<98xf32, #tpu.memory_space<smem>>
    %827 = vector.broadcast %826 : f32 to vector<1x256xf32>
    %828 = arith.mulf %827, %825 : vector<1x256xf32>
    %829 = arith.addf %824, %828 : vector<1x256xf32>
    %c10_430 = arith.constant 10 : index
    %c96_431 = arith.constant 96 : index
    %830 = vector.load %arg4[%c10_430, %c96_431] : memref<14x512xf32, #tpu.memory_space<vmem>>, vector<1x256xf32>
    %c59_432 = arith.constant 59 : index
    %831 = memref.load %arg1[%c59_432] : memref<98xf32, #tpu.memory_space<smem>>
    %832 = vector.broadcast %831 : f32 to vector<1x256xf32>
    %833 = arith.mulf %832, %830 : vector<1x256xf32>
    %834 = arith.addf %829, %833 : vector<1x256xf32>
    %c11_433 = arith.constant 11 : index
    %c96_434 = arith.constant 96 : index
    %835 = vector.load %arg4[%c11_433, %c96_434] : memref<14x512xf32, #tpu.memory_space<vmem>>, vector<1x256xf32>
    %c60_435 = arith.constant 60 : index
    %836 = memref.load %arg1[%c60_435] : memref<98xf32, #tpu.memory_space<smem>>
    %837 = vector.broadcast %836 : f32 to vector<1x256xf32>
    %838 = arith.mulf %837, %835 : vector<1x256xf32>
    %839 = arith.addf %834, %838 : vector<1x256xf32>
    %c12_436 = arith.constant 12 : index
    %c96_437 = arith.constant 96 : index
    %840 = vector.load %arg4[%c12_436, %c96_437] : memref<14x512xf32, #tpu.memory_space<vmem>>, vector<1x256xf32>
    %c61_438 = arith.constant 61 : index
    %841 = memref.load %arg1[%c61_438] : memref<98xf32, #tpu.memory_space<smem>>
    %842 = vector.broadcast %841 : f32 to vector<1x256xf32>
    %843 = arith.mulf %842, %840 : vector<1x256xf32>
    %844 = arith.addf %839, %843 : vector<1x256xf32>
    %c13_439 = arith.constant 13 : index
    %c96_440 = arith.constant 96 : index
    %845 = vector.load %arg4[%c13_439, %c96_440] : memref<14x512xf32, #tpu.memory_space<vmem>>, vector<1x256xf32>
    %c62_441 = arith.constant 62 : index
    %846 = memref.load %arg1[%c62_441] : memref<98xf32, #tpu.memory_space<smem>>
    %847 = vector.broadcast %846 : f32 to vector<1x256xf32>
    %848 = arith.mulf %847, %845 : vector<1x256xf32>
    %849 = arith.addf %844, %848 : vector<1x256xf32>
    %c0_442 = arith.constant 0 : index
    %c112_443 = arith.constant 112 : index
    %850 = vector.load %arg4[%c0_442, %c112_443] : memref<14x512xf32, #tpu.memory_space<vmem>>, vector<1x256xf32>
    %c14_444 = arith.constant 14 : index
    %851 = memref.load %arg1[%c14_444] : memref<98xf32, #tpu.memory_space<smem>>
    %852 = vector.broadcast %851 : f32 to vector<1x256xf32>
    %853 = arith.mulf %852, %850 : vector<1x256xf32>
    %854 = arith.addf %849, %853 : vector<1x256xf32>
    %c1_445 = arith.constant 1 : index
    %c112_446 = arith.constant 112 : index
    %855 = vector.load %arg4[%c1_445, %c112_446] : memref<14x512xf32, #tpu.memory_space<vmem>>, vector<1x256xf32>
    %c15_447 = arith.constant 15 : index
    %856 = memref.load %arg1[%c15_447] : memref<98xf32, #tpu.memory_space<smem>>
    %857 = vector.broadcast %856 : f32 to vector<1x256xf32>
    %858 = arith.mulf %857, %855 : vector<1x256xf32>
    %859 = arith.addf %854, %858 : vector<1x256xf32>
    %c2_448 = arith.constant 2 : index
    %c112_449 = arith.constant 112 : index
    %860 = vector.load %arg4[%c2_448, %c112_449] : memref<14x512xf32, #tpu.memory_space<vmem>>, vector<1x256xf32>
    %c16_450 = arith.constant 16 : index
    %861 = memref.load %arg1[%c16_450] : memref<98xf32, #tpu.memory_space<smem>>
    %862 = vector.broadcast %861 : f32 to vector<1x256xf32>
    %863 = arith.mulf %862, %860 : vector<1x256xf32>
    %864 = arith.addf %859, %863 : vector<1x256xf32>
    %c3_451 = arith.constant 3 : index
    %c112_452 = arith.constant 112 : index
    %865 = vector.load %arg4[%c3_451, %c112_452] : memref<14x512xf32, #tpu.memory_space<vmem>>, vector<1x256xf32>
    %c17_453 = arith.constant 17 : index
    %866 = memref.load %arg1[%c17_453] : memref<98xf32, #tpu.memory_space<smem>>
    %867 = vector.broadcast %866 : f32 to vector<1x256xf32>
    %868 = arith.mulf %867, %865 : vector<1x256xf32>
    %869 = arith.addf %864, %868 : vector<1x256xf32>
    %c4_454 = arith.constant 4 : index
    %c112_455 = arith.constant 112 : index
    %870 = vector.load %arg4[%c4_454, %c112_455] : memref<14x512xf32, #tpu.memory_space<vmem>>, vector<1x256xf32>
    %c18_456 = arith.constant 18 : index
    %871 = memref.load %arg1[%c18_456] : memref<98xf32, #tpu.memory_space<smem>>
    %872 = vector.broadcast %871 : f32 to vector<1x256xf32>
    %873 = arith.mulf %872, %870 : vector<1x256xf32>
    %874 = arith.addf %869, %873 : vector<1x256xf32>
    %c5_457 = arith.constant 5 : index
    %c112_458 = arith.constant 112 : index
    %875 = vector.load %arg4[%c5_457, %c112_458] : memref<14x512xf32, #tpu.memory_space<vmem>>, vector<1x256xf32>
    %c19_459 = arith.constant 19 : index
    %876 = memref.load %arg1[%c19_459] : memref<98xf32, #tpu.memory_space<smem>>
    %877 = vector.broadcast %876 : f32 to vector<1x256xf32>
    %878 = arith.mulf %877, %875 : vector<1x256xf32>
    %879 = arith.addf %874, %878 : vector<1x256xf32>
    %c6_460 = arith.constant 6 : index
    %c112_461 = arith.constant 112 : index
    %880 = vector.load %arg4[%c6_460, %c112_461] : memref<14x512xf32, #tpu.memory_space<vmem>>, vector<1x256xf32>
    %c20_462 = arith.constant 20 : index
    %881 = memref.load %arg1[%c20_462] : memref<98xf32, #tpu.memory_space<smem>>
    %882 = vector.broadcast %881 : f32 to vector<1x256xf32>
    %883 = arith.mulf %882, %880 : vector<1x256xf32>
    %884 = arith.addf %879, %883 : vector<1x256xf32>
    %c7_463 = arith.constant 7 : index
    %c112_464 = arith.constant 112 : index
    %885 = vector.load %arg4[%c7_463, %c112_464] : memref<14x512xf32, #tpu.memory_space<vmem>>, vector<1x256xf32>
    %c63_465 = arith.constant 63 : index
    %886 = memref.load %arg1[%c63_465] : memref<98xf32, #tpu.memory_space<smem>>
    %887 = vector.broadcast %886 : f32 to vector<1x256xf32>
    %888 = arith.mulf %887, %885 : vector<1x256xf32>
    %889 = arith.addf %884, %888 : vector<1x256xf32>
    %c8_466 = arith.constant 8 : index
    %c112_467 = arith.constant 112 : index
    %890 = vector.load %arg4[%c8_466, %c112_467] : memref<14x512xf32, #tpu.memory_space<vmem>>, vector<1x256xf32>
    %c64_468 = arith.constant 64 : index
    %891 = memref.load %arg1[%c64_468] : memref<98xf32, #tpu.memory_space<smem>>
    %892 = vector.broadcast %891 : f32 to vector<1x256xf32>
    %893 = arith.mulf %892, %890 : vector<1x256xf32>
    %894 = arith.addf %889, %893 : vector<1x256xf32>
    %c9_469 = arith.constant 9 : index
    %c112_470 = arith.constant 112 : index
    %895 = vector.load %arg4[%c9_469, %c112_470] : memref<14x512xf32, #tpu.memory_space<vmem>>, vector<1x256xf32>
    %c65_471 = arith.constant 65 : index
    %896 = memref.load %arg1[%c65_471] : memref<98xf32, #tpu.memory_space<smem>>
    %897 = vector.broadcast %896 : f32 to vector<1x256xf32>
    %898 = arith.mulf %897, %895 : vector<1x256xf32>
    %899 = arith.addf %894, %898 : vector<1x256xf32>
    %c10_472 = arith.constant 10 : index
    %c112_473 = arith.constant 112 : index
    %900 = vector.load %arg4[%c10_472, %c112_473] : memref<14x512xf32, #tpu.memory_space<vmem>>, vector<1x256xf32>
    %c66_474 = arith.constant 66 : index
    %901 = memref.load %arg1[%c66_474] : memref<98xf32, #tpu.memory_space<smem>>
    %902 = vector.broadcast %901 : f32 to vector<1x256xf32>
    %903 = arith.mulf %902, %900 : vector<1x256xf32>
    %904 = arith.addf %899, %903 : vector<1x256xf32>
    %c11_475 = arith.constant 11 : index
    %c112_476 = arith.constant 112 : index
    %905 = vector.load %arg4[%c11_475, %c112_476] : memref<14x512xf32, #tpu.memory_space<vmem>>, vector<1x256xf32>
    %c67_477 = arith.constant 67 : index
    %906 = memref.load %arg1[%c67_477] : memref<98xf32, #tpu.memory_space<smem>>
    %907 = vector.broadcast %906 : f32 to vector<1x256xf32>
    %908 = arith.mulf %907, %905 : vector<1x256xf32>
    %909 = arith.addf %904, %908 : vector<1x256xf32>
    %c12_478 = arith.constant 12 : index
    %c112_479 = arith.constant 112 : index
    %910 = vector.load %arg4[%c12_478, %c112_479] : memref<14x512xf32, #tpu.memory_space<vmem>>, vector<1x256xf32>
    %c68_480 = arith.constant 68 : index
    %911 = memref.load %arg1[%c68_480] : memref<98xf32, #tpu.memory_space<smem>>
    %912 = vector.broadcast %911 : f32 to vector<1x256xf32>
    %913 = arith.mulf %912, %910 : vector<1x256xf32>
    %914 = arith.addf %909, %913 : vector<1x256xf32>
    %c13_481 = arith.constant 13 : index
    %c112_482 = arith.constant 112 : index
    %915 = vector.load %arg4[%c13_481, %c112_482] : memref<14x512xf32, #tpu.memory_space<vmem>>, vector<1x256xf32>
    %c69_483 = arith.constant 69 : index
    %916 = memref.load %arg1[%c69_483] : memref<98xf32, #tpu.memory_space<smem>>
    %917 = vector.broadcast %916 : f32 to vector<1x256xf32>
    %918 = arith.mulf %917, %915 : vector<1x256xf32>
    %919 = arith.addf %914, %918 : vector<1x256xf32>
    %c0_484 = arith.constant 0 : index
    %c128_485 = arith.constant 128 : index
    %920 = vector.load %arg4[%c0_484, %c128_485] : memref<14x512xf32, #tpu.memory_space<vmem>>, vector<1x256xf32>
    %c21_486 = arith.constant 21 : index
    %921 = memref.load %arg1[%c21_486] : memref<98xf32, #tpu.memory_space<smem>>
    %922 = vector.broadcast %921 : f32 to vector<1x256xf32>
    %923 = arith.mulf %922, %920 : vector<1x256xf32>
    %924 = arith.addf %919, %923 : vector<1x256xf32>
    %c1_487 = arith.constant 1 : index
    %c128_488 = arith.constant 128 : index
    %925 = vector.load %arg4[%c1_487, %c128_488] : memref<14x512xf32, #tpu.memory_space<vmem>>, vector<1x256xf32>
    %c22_489 = arith.constant 22 : index
    %926 = memref.load %arg1[%c22_489] : memref<98xf32, #tpu.memory_space<smem>>
    %927 = vector.broadcast %926 : f32 to vector<1x256xf32>
    %928 = arith.mulf %927, %925 : vector<1x256xf32>
    %929 = arith.addf %924, %928 : vector<1x256xf32>
    %c2_490 = arith.constant 2 : index
    %c128_491 = arith.constant 128 : index
    %930 = vector.load %arg4[%c2_490, %c128_491] : memref<14x512xf32, #tpu.memory_space<vmem>>, vector<1x256xf32>
    %c23_492 = arith.constant 23 : index
    %931 = memref.load %arg1[%c23_492] : memref<98xf32, #tpu.memory_space<smem>>
    %932 = vector.broadcast %931 : f32 to vector<1x256xf32>
    %933 = arith.mulf %932, %930 : vector<1x256xf32>
    %934 = arith.addf %929, %933 : vector<1x256xf32>
    %c3_493 = arith.constant 3 : index
    %c128_494 = arith.constant 128 : index
    %935 = vector.load %arg4[%c3_493, %c128_494] : memref<14x512xf32, #tpu.memory_space<vmem>>, vector<1x256xf32>
    %c24_495 = arith.constant 24 : index
    %936 = memref.load %arg1[%c24_495] : memref<98xf32, #tpu.memory_space<smem>>
    %937 = vector.broadcast %936 : f32 to vector<1x256xf32>
    %938 = arith.mulf %937, %935 : vector<1x256xf32>
    %939 = arith.addf %934, %938 : vector<1x256xf32>
    %c4_496 = arith.constant 4 : index
    %c128_497 = arith.constant 128 : index
    %940 = vector.load %arg4[%c4_496, %c128_497] : memref<14x512xf32, #tpu.memory_space<vmem>>, vector<1x256xf32>
    %c25_498 = arith.constant 25 : index
    %941 = memref.load %arg1[%c25_498] : memref<98xf32, #tpu.memory_space<smem>>
    %942 = vector.broadcast %941 : f32 to vector<1x256xf32>
    %943 = arith.mulf %942, %940 : vector<1x256xf32>
    %944 = arith.addf %939, %943 : vector<1x256xf32>
    %c5_499 = arith.constant 5 : index
    %c128_500 = arith.constant 128 : index
    %945 = vector.load %arg4[%c5_499, %c128_500] : memref<14x512xf32, #tpu.memory_space<vmem>>, vector<1x256xf32>
    %c26_501 = arith.constant 26 : index
    %946 = memref.load %arg1[%c26_501] : memref<98xf32, #tpu.memory_space<smem>>
    %947 = vector.broadcast %946 : f32 to vector<1x256xf32>
    %948 = arith.mulf %947, %945 : vector<1x256xf32>
    %949 = arith.addf %944, %948 : vector<1x256xf32>
    %c6_502 = arith.constant 6 : index
    %c128_503 = arith.constant 128 : index
    %950 = vector.load %arg4[%c6_502, %c128_503] : memref<14x512xf32, #tpu.memory_space<vmem>>, vector<1x256xf32>
    %c27_504 = arith.constant 27 : index
    %951 = memref.load %arg1[%c27_504] : memref<98xf32, #tpu.memory_space<smem>>
    %952 = vector.broadcast %951 : f32 to vector<1x256xf32>
    %953 = arith.mulf %952, %950 : vector<1x256xf32>
    %954 = arith.addf %949, %953 : vector<1x256xf32>
    %c7_505 = arith.constant 7 : index
    %c128_506 = arith.constant 128 : index
    %955 = vector.load %arg4[%c7_505, %c128_506] : memref<14x512xf32, #tpu.memory_space<vmem>>, vector<1x256xf32>
    %c70_507 = arith.constant 70 : index
    %956 = memref.load %arg1[%c70_507] : memref<98xf32, #tpu.memory_space<smem>>
    %957 = vector.broadcast %956 : f32 to vector<1x256xf32>
    %958 = arith.mulf %957, %955 : vector<1x256xf32>
    %959 = arith.addf %954, %958 : vector<1x256xf32>
    %c8_508 = arith.constant 8 : index
    %c128_509 = arith.constant 128 : index
    %960 = vector.load %arg4[%c8_508, %c128_509] : memref<14x512xf32, #tpu.memory_space<vmem>>, vector<1x256xf32>
    %c71_510 = arith.constant 71 : index
    %961 = memref.load %arg1[%c71_510] : memref<98xf32, #tpu.memory_space<smem>>
    %962 = vector.broadcast %961 : f32 to vector<1x256xf32>
    %963 = arith.mulf %962, %960 : vector<1x256xf32>
    %964 = arith.addf %959, %963 : vector<1x256xf32>
    %c9_511 = arith.constant 9 : index
    %c128_512 = arith.constant 128 : index
    %965 = vector.load %arg4[%c9_511, %c128_512] : memref<14x512xf32, #tpu.memory_space<vmem>>, vector<1x256xf32>
    %c72_513 = arith.constant 72 : index
    %966 = memref.load %arg1[%c72_513] : memref<98xf32, #tpu.memory_space<smem>>
    %967 = vector.broadcast %966 : f32 to vector<1x256xf32>
    %968 = arith.mulf %967, %965 : vector<1x256xf32>
    %969 = arith.addf %964, %968 : vector<1x256xf32>
    %c10_514 = arith.constant 10 : index
    %c128_515 = arith.constant 128 : index
    %970 = vector.load %arg4[%c10_514, %c128_515] : memref<14x512xf32, #tpu.memory_space<vmem>>, vector<1x256xf32>
    %c73_516 = arith.constant 73 : index
    %971 = memref.load %arg1[%c73_516] : memref<98xf32, #tpu.memory_space<smem>>
    %972 = vector.broadcast %971 : f32 to vector<1x256xf32>
    %973 = arith.mulf %972, %970 : vector<1x256xf32>
    %974 = arith.addf %969, %973 : vector<1x256xf32>
    %c11_517 = arith.constant 11 : index
    %c128_518 = arith.constant 128 : index
    %975 = vector.load %arg4[%c11_517, %c128_518] : memref<14x512xf32, #tpu.memory_space<vmem>>, vector<1x256xf32>
    %c74_519 = arith.constant 74 : index
    %976 = memref.load %arg1[%c74_519] : memref<98xf32, #tpu.memory_space<smem>>
    %977 = vector.broadcast %976 : f32 to vector<1x256xf32>
    %978 = arith.mulf %977, %975 : vector<1x256xf32>
    %979 = arith.addf %974, %978 : vector<1x256xf32>
    %c12_520 = arith.constant 12 : index
    %c128_521 = arith.constant 128 : index
    %980 = vector.load %arg4[%c12_520, %c128_521] : memref<14x512xf32, #tpu.memory_space<vmem>>, vector<1x256xf32>
    %c75_522 = arith.constant 75 : index
    %981 = memref.load %arg1[%c75_522] : memref<98xf32, #tpu.memory_space<smem>>
    %982 = vector.broadcast %981 : f32 to vector<1x256xf32>
    %983 = arith.mulf %982, %980 : vector<1x256xf32>
    %984 = arith.addf %979, %983 : vector<1x256xf32>
    %c13_523 = arith.constant 13 : index
    %c128_524 = arith.constant 128 : index
    %985 = vector.load %arg4[%c13_523, %c128_524] : memref<14x512xf32, #tpu.memory_space<vmem>>, vector<1x256xf32>
    %c76_525 = arith.constant 76 : index
    %986 = memref.load %arg1[%c76_525] : memref<98xf32, #tpu.memory_space<smem>>
    %987 = vector.broadcast %986 : f32 to vector<1x256xf32>
    %988 = arith.mulf %987, %985 : vector<1x256xf32>
    %989 = arith.addf %984, %988 : vector<1x256xf32>
    %c0_526 = arith.constant 0 : index
    %c144_527 = arith.constant 144 : index
    %990 = vector.load %arg4[%c0_526, %c144_527] : memref<14x512xf32, #tpu.memory_space<vmem>>, vector<1x256xf32>
    %c28_528 = arith.constant 28 : index
    %991 = memref.load %arg1[%c28_528] : memref<98xf32, #tpu.memory_space<smem>>
    %992 = vector.broadcast %991 : f32 to vector<1x256xf32>
    %993 = arith.mulf %992, %990 : vector<1x256xf32>
    %994 = arith.addf %989, %993 : vector<1x256xf32>
    %c1_529 = arith.constant 1 : index
    %c144_530 = arith.constant 144 : index
    %995 = vector.load %arg4[%c1_529, %c144_530] : memref<14x512xf32, #tpu.memory_space<vmem>>, vector<1x256xf32>
    %c29_531 = arith.constant 29 : index
    %996 = memref.load %arg1[%c29_531] : memref<98xf32, #tpu.memory_space<smem>>
    %997 = vector.broadcast %996 : f32 to vector<1x256xf32>
    %998 = arith.mulf %997, %995 : vector<1x256xf32>
    %999 = arith.addf %994, %998 : vector<1x256xf32>
    %c2_532 = arith.constant 2 : index
    %c144_533 = arith.constant 144 : index
    %1000 = vector.load %arg4[%c2_532, %c144_533] : memref<14x512xf32, #tpu.memory_space<vmem>>, vector<1x256xf32>
    %c30_534 = arith.constant 30 : index
    %1001 = memref.load %arg1[%c30_534] : memref<98xf32, #tpu.memory_space<smem>>
    %1002 = vector.broadcast %1001 : f32 to vector<1x256xf32>
    %1003 = arith.mulf %1002, %1000 : vector<1x256xf32>
    %1004 = arith.addf %999, %1003 : vector<1x256xf32>
    %c3_535 = arith.constant 3 : index
    %c144_536 = arith.constant 144 : index
    %1005 = vector.load %arg4[%c3_535, %c144_536] : memref<14x512xf32, #tpu.memory_space<vmem>>, vector<1x256xf32>
    %c31_537 = arith.constant 31 : index
    %1006 = memref.load %arg1[%c31_537] : memref<98xf32, #tpu.memory_space<smem>>
    %1007 = vector.broadcast %1006 : f32 to vector<1x256xf32>
    %1008 = arith.mulf %1007, %1005 : vector<1x256xf32>
    %1009 = arith.addf %1004, %1008 : vector<1x256xf32>
    %c4_538 = arith.constant 4 : index
    %c144_539 = arith.constant 144 : index
    %1010 = vector.load %arg4[%c4_538, %c144_539] : memref<14x512xf32, #tpu.memory_space<vmem>>, vector<1x256xf32>
    %c32_540 = arith.constant 32 : index
    %1011 = memref.load %arg1[%c32_540] : memref<98xf32, #tpu.memory_space<smem>>
    %1012 = vector.broadcast %1011 : f32 to vector<1x256xf32>
    %1013 = arith.mulf %1012, %1010 : vector<1x256xf32>
    %1014 = arith.addf %1009, %1013 : vector<1x256xf32>
    %c5_541 = arith.constant 5 : index
    %c144_542 = arith.constant 144 : index
    %1015 = vector.load %arg4[%c5_541, %c144_542] : memref<14x512xf32, #tpu.memory_space<vmem>>, vector<1x256xf32>
    %c33_543 = arith.constant 33 : index
    %1016 = memref.load %arg1[%c33_543] : memref<98xf32, #tpu.memory_space<smem>>
    %1017 = vector.broadcast %1016 : f32 to vector<1x256xf32>
    %1018 = arith.mulf %1017, %1015 : vector<1x256xf32>
    %1019 = arith.addf %1014, %1018 : vector<1x256xf32>
    %c6_544 = arith.constant 6 : index
    %c144_545 = arith.constant 144 : index
    %1020 = vector.load %arg4[%c6_544, %c144_545] : memref<14x512xf32, #tpu.memory_space<vmem>>, vector<1x256xf32>
    %c34_546 = arith.constant 34 : index
    %1021 = memref.load %arg1[%c34_546] : memref<98xf32, #tpu.memory_space<smem>>
    %1022 = vector.broadcast %1021 : f32 to vector<1x256xf32>
    %1023 = arith.mulf %1022, %1020 : vector<1x256xf32>
    %1024 = arith.addf %1019, %1023 : vector<1x256xf32>
    %c7_547 = arith.constant 7 : index
    %c144_548 = arith.constant 144 : index
    %1025 = vector.load %arg4[%c7_547, %c144_548] : memref<14x512xf32, #tpu.memory_space<vmem>>, vector<1x256xf32>
    %c77_549 = arith.constant 77 : index
    %1026 = memref.load %arg1[%c77_549] : memref<98xf32, #tpu.memory_space<smem>>
    %1027 = vector.broadcast %1026 : f32 to vector<1x256xf32>
    %1028 = arith.mulf %1027, %1025 : vector<1x256xf32>
    %1029 = arith.addf %1024, %1028 : vector<1x256xf32>
    %c8_550 = arith.constant 8 : index
    %c144_551 = arith.constant 144 : index
    %1030 = vector.load %arg4[%c8_550, %c144_551] : memref<14x512xf32, #tpu.memory_space<vmem>>, vector<1x256xf32>
    %c78_552 = arith.constant 78 : index
    %1031 = memref.load %arg1[%c78_552] : memref<98xf32, #tpu.memory_space<smem>>
    %1032 = vector.broadcast %1031 : f32 to vector<1x256xf32>
    %1033 = arith.mulf %1032, %1030 : vector<1x256xf32>
    %1034 = arith.addf %1029, %1033 : vector<1x256xf32>
    %c9_553 = arith.constant 9 : index
    %c144_554 = arith.constant 144 : index
    %1035 = vector.load %arg4[%c9_553, %c144_554] : memref<14x512xf32, #tpu.memory_space<vmem>>, vector<1x256xf32>
    %c79_555 = arith.constant 79 : index
    %1036 = memref.load %arg1[%c79_555] : memref<98xf32, #tpu.memory_space<smem>>
    %1037 = vector.broadcast %1036 : f32 to vector<1x256xf32>
    %1038 = arith.mulf %1037, %1035 : vector<1x256xf32>
    %1039 = arith.addf %1034, %1038 : vector<1x256xf32>
    %c10_556 = arith.constant 10 : index
    %c144_557 = arith.constant 144 : index
    %1040 = vector.load %arg4[%c10_556, %c144_557] : memref<14x512xf32, #tpu.memory_space<vmem>>, vector<1x256xf32>
    %c80_558 = arith.constant 80 : index
    %1041 = memref.load %arg1[%c80_558] : memref<98xf32, #tpu.memory_space<smem>>
    %1042 = vector.broadcast %1041 : f32 to vector<1x256xf32>
    %1043 = arith.mulf %1042, %1040 : vector<1x256xf32>
    %1044 = arith.addf %1039, %1043 : vector<1x256xf32>
    %c11_559 = arith.constant 11 : index
    %c144_560 = arith.constant 144 : index
    %1045 = vector.load %arg4[%c11_559, %c144_560] : memref<14x512xf32, #tpu.memory_space<vmem>>, vector<1x256xf32>
    %c81_561 = arith.constant 81 : index
    %1046 = memref.load %arg1[%c81_561] : memref<98xf32, #tpu.memory_space<smem>>
    %1047 = vector.broadcast %1046 : f32 to vector<1x256xf32>
    %1048 = arith.mulf %1047, %1045 : vector<1x256xf32>
    %1049 = arith.addf %1044, %1048 : vector<1x256xf32>
    %c12_562 = arith.constant 12 : index
    %c144_563 = arith.constant 144 : index
    %1050 = vector.load %arg4[%c12_562, %c144_563] : memref<14x512xf32, #tpu.memory_space<vmem>>, vector<1x256xf32>
    %c82_564 = arith.constant 82 : index
    %1051 = memref.load %arg1[%c82_564] : memref<98xf32, #tpu.memory_space<smem>>
    %1052 = vector.broadcast %1051 : f32 to vector<1x256xf32>
    %1053 = arith.mulf %1052, %1050 : vector<1x256xf32>
    %1054 = arith.addf %1049, %1053 : vector<1x256xf32>
    %c13_565 = arith.constant 13 : index
    %c144_566 = arith.constant 144 : index
    %1055 = vector.load %arg4[%c13_565, %c144_566] : memref<14x512xf32, #tpu.memory_space<vmem>>, vector<1x256xf32>
    %c83_567 = arith.constant 83 : index
    %1056 = memref.load %arg1[%c83_567] : memref<98xf32, #tpu.memory_space<smem>>
    %1057 = vector.broadcast %1056 : f32 to vector<1x256xf32>
    %1058 = arith.mulf %1057, %1055 : vector<1x256xf32>
    %1059 = arith.addf %1054, %1058 : vector<1x256xf32>
    %c0_568 = arith.constant 0 : index
    %c160_569 = arith.constant 160 : index
    %1060 = vector.load %arg4[%c0_568, %c160_569] : memref<14x512xf32, #tpu.memory_space<vmem>>, vector<1x256xf32>
    %c35_570 = arith.constant 35 : index
    %1061 = memref.load %arg1[%c35_570] : memref<98xf32, #tpu.memory_space<smem>>
    %1062 = vector.broadcast %1061 : f32 to vector<1x256xf32>
    %1063 = arith.mulf %1062, %1060 : vector<1x256xf32>
    %1064 = arith.addf %1059, %1063 : vector<1x256xf32>
    %c1_571 = arith.constant 1 : index
    %c160_572 = arith.constant 160 : index
    %1065 = vector.load %arg4[%c1_571, %c160_572] : memref<14x512xf32, #tpu.memory_space<vmem>>, vector<1x256xf32>
    %c36_573 = arith.constant 36 : index
    %1066 = memref.load %arg1[%c36_573] : memref<98xf32, #tpu.memory_space<smem>>
    %1067 = vector.broadcast %1066 : f32 to vector<1x256xf32>
    %1068 = arith.mulf %1067, %1065 : vector<1x256xf32>
    %1069 = arith.addf %1064, %1068 : vector<1x256xf32>
    %c2_574 = arith.constant 2 : index
    %c160_575 = arith.constant 160 : index
    %1070 = vector.load %arg4[%c2_574, %c160_575] : memref<14x512xf32, #tpu.memory_space<vmem>>, vector<1x256xf32>
    %c37_576 = arith.constant 37 : index
    %1071 = memref.load %arg1[%c37_576] : memref<98xf32, #tpu.memory_space<smem>>
    %1072 = vector.broadcast %1071 : f32 to vector<1x256xf32>
    %1073 = arith.mulf %1072, %1070 : vector<1x256xf32>
    %1074 = arith.addf %1069, %1073 : vector<1x256xf32>
    %c3_577 = arith.constant 3 : index
    %c160_578 = arith.constant 160 : index
    %1075 = vector.load %arg4[%c3_577, %c160_578] : memref<14x512xf32, #tpu.memory_space<vmem>>, vector<1x256xf32>
    %c38_579 = arith.constant 38 : index
    %1076 = memref.load %arg1[%c38_579] : memref<98xf32, #tpu.memory_space<smem>>
    %1077 = vector.broadcast %1076 : f32 to vector<1x256xf32>
    %1078 = arith.mulf %1077, %1075 : vector<1x256xf32>
    %1079 = arith.addf %1074, %1078 : vector<1x256xf32>
    %c4_580 = arith.constant 4 : index
    %c160_581 = arith.constant 160 : index
    %1080 = vector.load %arg4[%c4_580, %c160_581] : memref<14x512xf32, #tpu.memory_space<vmem>>, vector<1x256xf32>
    %c39_582 = arith.constant 39 : index
    %1081 = memref.load %arg1[%c39_582] : memref<98xf32, #tpu.memory_space<smem>>
    %1082 = vector.broadcast %1081 : f32 to vector<1x256xf32>
    %1083 = arith.mulf %1082, %1080 : vector<1x256xf32>
    %1084 = arith.addf %1079, %1083 : vector<1x256xf32>
    %c5_583 = arith.constant 5 : index
    %c160_584 = arith.constant 160 : index
    %1085 = vector.load %arg4[%c5_583, %c160_584] : memref<14x512xf32, #tpu.memory_space<vmem>>, vector<1x256xf32>
    %c40_585 = arith.constant 40 : index
    %1086 = memref.load %arg1[%c40_585] : memref<98xf32, #tpu.memory_space<smem>>
    %1087 = vector.broadcast %1086 : f32 to vector<1x256xf32>
    %1088 = arith.mulf %1087, %1085 : vector<1x256xf32>
    %1089 = arith.addf %1084, %1088 : vector<1x256xf32>
    %c6_586 = arith.constant 6 : index
    %c160_587 = arith.constant 160 : index
    %1090 = vector.load %arg4[%c6_586, %c160_587] : memref<14x512xf32, #tpu.memory_space<vmem>>, vector<1x256xf32>
    %c41_588 = arith.constant 41 : index
    %1091 = memref.load %arg1[%c41_588] : memref<98xf32, #tpu.memory_space<smem>>
    %1092 = vector.broadcast %1091 : f32 to vector<1x256xf32>
    %1093 = arith.mulf %1092, %1090 : vector<1x256xf32>
    %1094 = arith.addf %1089, %1093 : vector<1x256xf32>
    %c7_589 = arith.constant 7 : index
    %c160_590 = arith.constant 160 : index
    %1095 = vector.load %arg4[%c7_589, %c160_590] : memref<14x512xf32, #tpu.memory_space<vmem>>, vector<1x256xf32>
    %c84_591 = arith.constant 84 : index
    %1096 = memref.load %arg1[%c84_591] : memref<98xf32, #tpu.memory_space<smem>>
    %1097 = vector.broadcast %1096 : f32 to vector<1x256xf32>
    %1098 = arith.mulf %1097, %1095 : vector<1x256xf32>
    %1099 = arith.addf %1094, %1098 : vector<1x256xf32>
    %c8_592 = arith.constant 8 : index
    %c160_593 = arith.constant 160 : index
    %1100 = vector.load %arg4[%c8_592, %c160_593] : memref<14x512xf32, #tpu.memory_space<vmem>>, vector<1x256xf32>
    %c85_594 = arith.constant 85 : index
    %1101 = memref.load %arg1[%c85_594] : memref<98xf32, #tpu.memory_space<smem>>
    %1102 = vector.broadcast %1101 : f32 to vector<1x256xf32>
    %1103 = arith.mulf %1102, %1100 : vector<1x256xf32>
    %1104 = arith.addf %1099, %1103 : vector<1x256xf32>
    %c9_595 = arith.constant 9 : index
    %c160_596 = arith.constant 160 : index
    %1105 = vector.load %arg4[%c9_595, %c160_596] : memref<14x512xf32, #tpu.memory_space<vmem>>, vector<1x256xf32>
    %c86_597 = arith.constant 86 : index
    %1106 = memref.load %arg1[%c86_597] : memref<98xf32, #tpu.memory_space<smem>>
    %1107 = vector.broadcast %1106 : f32 to vector<1x256xf32>
    %1108 = arith.mulf %1107, %1105 : vector<1x256xf32>
    %1109 = arith.addf %1104, %1108 : vector<1x256xf32>
    %c10_598 = arith.constant 10 : index
    %c160_599 = arith.constant 160 : index
    %1110 = vector.load %arg4[%c10_598, %c160_599] : memref<14x512xf32, #tpu.memory_space<vmem>>, vector<1x256xf32>
    %c87_600 = arith.constant 87 : index
    %1111 = memref.load %arg1[%c87_600] : memref<98xf32, #tpu.memory_space<smem>>
    %1112 = vector.broadcast %1111 : f32 to vector<1x256xf32>
    %1113 = arith.mulf %1112, %1110 : vector<1x256xf32>
    %1114 = arith.addf %1109, %1113 : vector<1x256xf32>
    %c11_601 = arith.constant 11 : index
    %c160_602 = arith.constant 160 : index
    %1115 = vector.load %arg4[%c11_601, %c160_602] : memref<14x512xf32, #tpu.memory_space<vmem>>, vector<1x256xf32>
    %c88_603 = arith.constant 88 : index
    %1116 = memref.load %arg1[%c88_603] : memref<98xf32, #tpu.memory_space<smem>>
    %1117 = vector.broadcast %1116 : f32 to vector<1x256xf32>
    %1118 = arith.mulf %1117, %1115 : vector<1x256xf32>
    %1119 = arith.addf %1114, %1118 : vector<1x256xf32>
    %c12_604 = arith.constant 12 : index
    %c160_605 = arith.constant 160 : index
    %1120 = vector.load %arg4[%c12_604, %c160_605] : memref<14x512xf32, #tpu.memory_space<vmem>>, vector<1x256xf32>
    %c89_606 = arith.constant 89 : index
    %1121 = memref.load %arg1[%c89_606] : memref<98xf32, #tpu.memory_space<smem>>
    %1122 = vector.broadcast %1121 : f32 to vector<1x256xf32>
    %1123 = arith.mulf %1122, %1120 : vector<1x256xf32>
    %1124 = arith.addf %1119, %1123 : vector<1x256xf32>
    %c13_607 = arith.constant 13 : index
    %c160_608 = arith.constant 160 : index
    %1125 = vector.load %arg4[%c13_607, %c160_608] : memref<14x512xf32, #tpu.memory_space<vmem>>, vector<1x256xf32>
    %c90_609 = arith.constant 90 : index
    %1126 = memref.load %arg1[%c90_609] : memref<98xf32, #tpu.memory_space<smem>>
    %1127 = vector.broadcast %1126 : f32 to vector<1x256xf32>
    %1128 = arith.mulf %1127, %1125 : vector<1x256xf32>
    %1129 = arith.addf %1124, %1128 : vector<1x256xf32>
    %c0_610 = arith.constant 0 : index
    %c176_611 = arith.constant 176 : index
    %1130 = vector.load %arg4[%c0_610, %c176_611] : memref<14x512xf32, #tpu.memory_space<vmem>>, vector<1x256xf32>
    %c42_612 = arith.constant 42 : index
    %1131 = memref.load %arg1[%c42_612] : memref<98xf32, #tpu.memory_space<smem>>
    %1132 = vector.broadcast %1131 : f32 to vector<1x256xf32>
    %1133 = arith.mulf %1132, %1130 : vector<1x256xf32>
    %1134 = arith.addf %1129, %1133 : vector<1x256xf32>
    %c1_613 = arith.constant 1 : index
    %c176_614 = arith.constant 176 : index
    %1135 = vector.load %arg4[%c1_613, %c176_614] : memref<14x512xf32, #tpu.memory_space<vmem>>, vector<1x256xf32>
    %c43_615 = arith.constant 43 : index
    %1136 = memref.load %arg1[%c43_615] : memref<98xf32, #tpu.memory_space<smem>>
    %1137 = vector.broadcast %1136 : f32 to vector<1x256xf32>
    %1138 = arith.mulf %1137, %1135 : vector<1x256xf32>
    %1139 = arith.addf %1134, %1138 : vector<1x256xf32>
    %c2_616 = arith.constant 2 : index
    %c176_617 = arith.constant 176 : index
    %1140 = vector.load %arg4[%c2_616, %c176_617] : memref<14x512xf32, #tpu.memory_space<vmem>>, vector<1x256xf32>
    %c44_618 = arith.constant 44 : index
    %1141 = memref.load %arg1[%c44_618] : memref<98xf32, #tpu.memory_space<smem>>
    %1142 = vector.broadcast %1141 : f32 to vector<1x256xf32>
    %1143 = arith.mulf %1142, %1140 : vector<1x256xf32>
    %1144 = arith.addf %1139, %1143 : vector<1x256xf32>
    %c3_619 = arith.constant 3 : index
    %c176_620 = arith.constant 176 : index
    %1145 = vector.load %arg4[%c3_619, %c176_620] : memref<14x512xf32, #tpu.memory_space<vmem>>, vector<1x256xf32>
    %c45_621 = arith.constant 45 : index
    %1146 = memref.load %arg1[%c45_621] : memref<98xf32, #tpu.memory_space<smem>>
    %1147 = vector.broadcast %1146 : f32 to vector<1x256xf32>
    %1148 = arith.mulf %1147, %1145 : vector<1x256xf32>
    %1149 = arith.addf %1144, %1148 : vector<1x256xf32>
    %c4_622 = arith.constant 4 : index
    %c176_623 = arith.constant 176 : index
    %1150 = vector.load %arg4[%c4_622, %c176_623] : memref<14x512xf32, #tpu.memory_space<vmem>>, vector<1x256xf32>
    %c46_624 = arith.constant 46 : index
    %1151 = memref.load %arg1[%c46_624] : memref<98xf32, #tpu.memory_space<smem>>
    %1152 = vector.broadcast %1151 : f32 to vector<1x256xf32>
    %1153 = arith.mulf %1152, %1150 : vector<1x256xf32>
    %1154 = arith.addf %1149, %1153 : vector<1x256xf32>
    %c5_625 = arith.constant 5 : index
    %c176_626 = arith.constant 176 : index
    %1155 = vector.load %arg4[%c5_625, %c176_626] : memref<14x512xf32, #tpu.memory_space<vmem>>, vector<1x256xf32>
    %c47_627 = arith.constant 47 : index
    %1156 = memref.load %arg1[%c47_627] : memref<98xf32, #tpu.memory_space<smem>>
    %1157 = vector.broadcast %1156 : f32 to vector<1x256xf32>
    %1158 = arith.mulf %1157, %1155 : vector<1x256xf32>
    %1159 = arith.addf %1154, %1158 : vector<1x256xf32>
    %c6_628 = arith.constant 6 : index
    %c176_629 = arith.constant 176 : index
    %1160 = vector.load %arg4[%c6_628, %c176_629] : memref<14x512xf32, #tpu.memory_space<vmem>>, vector<1x256xf32>
    %c48_630 = arith.constant 48 : index
    %1161 = memref.load %arg1[%c48_630] : memref<98xf32, #tpu.memory_space<smem>>
    %1162 = vector.broadcast %1161 : f32 to vector<1x256xf32>
    %1163 = arith.mulf %1162, %1160 : vector<1x256xf32>
    %1164 = arith.addf %1159, %1163 : vector<1x256xf32>
    %c7_631 = arith.constant 7 : index
    %c176_632 = arith.constant 176 : index
    %1165 = vector.load %arg4[%c7_631, %c176_632] : memref<14x512xf32, #tpu.memory_space<vmem>>, vector<1x256xf32>
    %c91_633 = arith.constant 91 : index
    %1166 = memref.load %arg1[%c91_633] : memref<98xf32, #tpu.memory_space<smem>>
    %1167 = vector.broadcast %1166 : f32 to vector<1x256xf32>
    %1168 = arith.mulf %1167, %1165 : vector<1x256xf32>
    %1169 = arith.addf %1164, %1168 : vector<1x256xf32>
    %c8_634 = arith.constant 8 : index
    %c176_635 = arith.constant 176 : index
    %1170 = vector.load %arg4[%c8_634, %c176_635] : memref<14x512xf32, #tpu.memory_space<vmem>>, vector<1x256xf32>
    %c92_636 = arith.constant 92 : index
    %1171 = memref.load %arg1[%c92_636] : memref<98xf32, #tpu.memory_space<smem>>
    %1172 = vector.broadcast %1171 : f32 to vector<1x256xf32>
    %1173 = arith.mulf %1172, %1170 : vector<1x256xf32>
    %1174 = arith.addf %1169, %1173 : vector<1x256xf32>
    %c9_637 = arith.constant 9 : index
    %c176_638 = arith.constant 176 : index
    %1175 = vector.load %arg4[%c9_637, %c176_638] : memref<14x512xf32, #tpu.memory_space<vmem>>, vector<1x256xf32>
    %c93_639 = arith.constant 93 : index
    %1176 = memref.load %arg1[%c93_639] : memref<98xf32, #tpu.memory_space<smem>>
    %1177 = vector.broadcast %1176 : f32 to vector<1x256xf32>
    %1178 = arith.mulf %1177, %1175 : vector<1x256xf32>
    %1179 = arith.addf %1174, %1178 : vector<1x256xf32>
    %c10_640 = arith.constant 10 : index
    %c176_641 = arith.constant 176 : index
    %1180 = vector.load %arg4[%c10_640, %c176_641] : memref<14x512xf32, #tpu.memory_space<vmem>>, vector<1x256xf32>
    %c94_642 = arith.constant 94 : index
    %1181 = memref.load %arg1[%c94_642] : memref<98xf32, #tpu.memory_space<smem>>
    %1182 = vector.broadcast %1181 : f32 to vector<1x256xf32>
    %1183 = arith.mulf %1182, %1180 : vector<1x256xf32>
    %1184 = arith.addf %1179, %1183 : vector<1x256xf32>
    %c11_643 = arith.constant 11 : index
    %c176_644 = arith.constant 176 : index
    %1185 = vector.load %arg4[%c11_643, %c176_644] : memref<14x512xf32, #tpu.memory_space<vmem>>, vector<1x256xf32>
    %c95_645 = arith.constant 95 : index
    %1186 = memref.load %arg1[%c95_645] : memref<98xf32, #tpu.memory_space<smem>>
    %1187 = vector.broadcast %1186 : f32 to vector<1x256xf32>
    %1188 = arith.mulf %1187, %1185 : vector<1x256xf32>
    %1189 = arith.addf %1184, %1188 : vector<1x256xf32>
    %c12_646 = arith.constant 12 : index
    %c176_647 = arith.constant 176 : index
    %1190 = vector.load %arg4[%c12_646, %c176_647] : memref<14x512xf32, #tpu.memory_space<vmem>>, vector<1x256xf32>
    %c96_648 = arith.constant 96 : index
    %1191 = memref.load %arg1[%c96_648] : memref<98xf32, #tpu.memory_space<smem>>
    %1192 = vector.broadcast %1191 : f32 to vector<1x256xf32>
    %1193 = arith.mulf %1192, %1190 : vector<1x256xf32>
    %1194 = arith.addf %1189, %1193 : vector<1x256xf32>
    %c13_649 = arith.constant 13 : index
    %c176_650 = arith.constant 176 : index
    %1195 = vector.load %arg4[%c13_649, %c176_650] : memref<14x512xf32, #tpu.memory_space<vmem>>, vector<1x256xf32>
    %c97_651 = arith.constant 97 : index
    %1196 = memref.load %arg1[%c97_651] : memref<98xf32, #tpu.memory_space<smem>>
    %1197 = vector.broadcast %1196 : f32 to vector<1x256xf32>
    %1198 = arith.mulf %1197, %1195 : vector<1x256xf32>
    %1199 = arith.addf %1194, %1198 : vector<1x256xf32>
    %1200 = arith.negf %1199 : vector<1x256xf32>
    %1201 = math.exp %1200 : vector<1x256xf32>
    %cst_652 = arith.constant 1.000000e+00 : f32
    %1202 = vector.broadcast %cst_652 : f32 to vector<1x256xf32>
    %1203 = arith.addf %1202, %1201 : vector<1x256xf32>
    %1204 = arith.divf %1202, %1203 : vector<1x256xf32>
    %1205 = vector.shape_cast %1204 : vector<1x256xf32> to vector<1x256xf32>
    %1206 = vector.broadcast %1205 : vector<1x256xf32> to vector<4x256xf32>
    %c1_653 = arith.constant 1 : index
    %c0_654 = arith.constant 0 : index
    %c0_655 = arith.constant 0 : index
    %1207 = vector.load %arg2[%c1_653, %c0_654, %c0_655] : memref<2x4x256xf32, #tpu.memory_space<vmem>>, vector<1x4x256xf32>
    %1208 = vector.shape_cast %1207 : vector<1x4x256xf32> to vector<4x256xf32>
    %1209 = arith.mulf %1208, %1206 : vector<4x256xf32>
    %c1_656 = arith.constant 1 : index
    %c0_657 = arith.constant 0 : index
    %c0_658 = arith.constant 0 : index
    %1210 = vector.load %arg3[%c1_656, %c0_657, %c0_658] : memref<2x4x256xf32, #tpu.memory_space<vmem>>, vector<1x4x256xf32>
    %1211 = vector.shape_cast %1210 : vector<1x4x256xf32> to vector<4x256xf32>
    %1212 = vector.shape_cast %1209 : vector<4x256xf32> to vector<1x4x256xf32>
    tpu.vector_store %arg3[%c1_656, %c0_657, %c0_658], %1212 {strides = array<i32>} : memref<2x4x256xf32, #tpu.memory_space<vmem>>, vector<1x4x256xf32>,
    return
  }
  func.func @transform_0(%arg0: i32) -> i32 {
    %c0_i32 = arith.constant 0 : i32
    %c0_i32_0 = arith.constant 0 : i32
    return %c0_i32 : i32
  }
  func.func @transform_1(%arg0: i32) -> (i32, i32, i32) {
    %c0_i32 = arith.constant 0 : i32
    %c0_i32_0 = arith.constant 0 : i32
    %c0_i32_1 = arith.constant 0 : i32
    return %arg0, %c0_i32, %c0_i32_0 : i32, i32, i32
  }
  func.func @transform_2(%arg0: i32) -> (i32, i32, i32) {
    %c0_i32 = arith.constant 0 : i32
    %c0_i32_0 = arith.constant 0 : i32
    %c0_i32_1 = arith.constant 0 : i32
    return %arg0, %c0_i32, %c0_i32_0 : i32, i32, i32
  }
}

</mosaic_0001>

<llo_original>
// kernel: tpu_custom_call.1
$region0: #{tpu_custom_call.1}
  #allocation0 [shape = 'u32[]', space=smem, size = 0x4, offset = 0x4, fixed_abs, tag = 'smem constant byte address 0x4 - core index']
  #allocation1 [shape = 'u32[144,128]{1,0:T(1,128)}', space=vmem, size = 0x12000, scoped, tag = 'internal scratch']
  #allocation2 [shape = 'f32[14,512]{1,0:T(8,128)}', space=vmem, size = 0x8000, scoped, tag = 'scratch operand']
  %s0 = inlined_call_operand.hbm [shape: f32[98], index: 0, kind: input, shape index: {}]
  %s1 = inlined_call_operand.hbm [shape: f32[2,4,256], index: 1, kind: input, shape index: {}]
  %s2 = inlined_call_operand.hbm [shape: f32[2,4,256], index: 2, kind: output, shape index: {}]
  %s3 = sld [smem:[#allocation0]]
  $region26: #{tpu_custom_call.1} parent=0
    _
  %s5 = ssub.s32 1, %s3
  %s6 = scalar_select 0, %s5, %s3
  $region1: #{tpu_custom_call.1} parent=0
    #allocation3 [shape = 'u8[512]{0}', space=smem, size = 0x200, scoped, tag = 'input window, operand 0, single buffered']
    #allocation4 [shape = 's32[1]{0}', space=sflag, size = 0x4, scoped, tag = 'scoped memory for tpu_custom_call.1']
    #allocation5 [shape = 's32[1]{0}', space=sflag, size = 0x4, scoped, tag = 'scoped memory for tpu_custom_call.1']
    #allocation6 [shape = 's32[1]{0}', space=sflag, size = 0x4, scoped, tag = 'scoped memory for tpu_custom_call.1']
    #allocation7 [shape = 'u8[8192]{0}', space=vmem, size = 0x2000, scoped, tag = 'input window, operand 1, single buffered']
    #allocation8 [shape = 'u8[8192]{0}', space=vmem, size = 0x2000, scoped, tag = 'output window, operand 0, single buffered']
    %7 = vsyncpa [#allocation6], 0
    %8 = vsyncpa [#allocation4], 0
    %9 = vsyncpa [#allocation5], 0
    // Predicated region
    $region2: #{tpu_custom_call.1} parent=1 // pred_check
      _
    $region3: #{tpu_custom_call.1} parent=1 // pred_check_branch
      %11 = sbr.rel (0) target = $region5
    $region4: #{tpu_custom_call.1} parent=1 // pred_region
      %s13 = ssub.s32 16, 16
      %14 = vsyncadd [#allocation6], %s13
      %17 = dma.hbm_to_smem %s0, 16, [#allocation3], [#allocation6]
    $region5: #{tpu_custom_call.1} parent=1 // pred_fallthru
      _
    // Predicated region
    $region6: #{tpu_custom_call.1} parent=1 // pred_check
      _
    $region7: #{tpu_custom_call.1} parent=1 // pred_check_branch
      %19 = sbr.rel (0) target = $region9
    $region8: #{tpu_custom_call.1} parent=1 // pred_region
      %s21 = ssub.s32 256, 256
      %22 = vsyncadd [#allocation4], %s21
      %s23 = sshll.u32 [#allocation7], 4
      %s24 = int_to_ptr.vmem [resolvable:$true] %s23
      %29 = dma.hbm_to_vmem [thread:$0]  %s1, 256, %s24, [#allocation4], 128, 128, 8
    $region9: #{tpu_custom_call.1} parent=1 // pred_fallthru
      _
    // Predicated region
    $region10: #{tpu_custom_call.1} parent=1 // pred_check
      _
    $region11: #{tpu_custom_call.1} parent=1 // pred_check_branch
      %31 = sbr.rel (0) target = $region13
    $region12: #{tpu_custom_call.1} parent=1 // pred_region
      %32 = dma.done [#allocation6], 16
    $region13: #{tpu_custom_call.1} parent=1 // pred_fallthru
      _
    // Predicated region
    $region14: #{tpu_custom_call.1} parent=1 // pred_check
      _
    $region15: #{tpu_custom_call.1} parent=1 // pred_check_branch
      %34 = sbr.rel (0) target = $region17
    $region16: #{tpu_custom_call.1} parent=1 // pred_region
      %35 = dma.done [#allocation4], 256
    $region17: #{tpu_custom_call.1} parent=1 // pred_fallthru
      _
    %36 = sfence
    %37 = vst [vmem:[#allocation2] sm:$0xff] 0.0
    %38 = vst [vmem:[#allocation2 + $0x20] sm:$0x3f] 0.0
    %39 = vst [vmem:[#allocation2 + $0x18] sm:$0xff] 0.0
    %40 = vst [vmem:[#allocation2 + $0x38] sm:$0x3f] 0.0
    %v41 = vlaneseq
    %v42 = vand.u32 %v41, 127
    %v43 = vadd.s32 %v42, 128
    %vm44 = vcmp.lt.s32.totalorder %v42, 0
    %v45 = vsub.s32 0, %v42
    %v46 = vsel %vm44, %v45, %v42
    %v47 = vshrl.u32 %v46, 4
    %v48 = vand.u32 %v46, 15
    %v49 = vsub.s32 0, %v48
    %v50 = vsel %vm44, %v49, %v48
    %vm51 = vcmp.lt.s32.totalorder %v43, 0
    %v52 = vsub.s32 0, %v43
    %v53 = vsel %vm51, %v52, %v43
    %v54 = vshrl.u32 %v53, 4
    %v55 = vand.u32 %v53, 15
    %v56 = vsub.s32 0, %v55
    %v57 = vsel %vm51, %v56, %v55
    %vm58 = vcmp.ne.s32.totalorder %v50, 0
    %vm59 = vcmp.ne.s32.totalorder %v57, 0
    %vm60 = vcmp.lt.s32.totalorder %v50, 0
    %vm61 = vcmp.lt.s32.totalorder %v57, 0
    %vm62 = vmand %vm60, %vm58
    %vm63 = vmand %vm61, %vm59
    %v64 = vadd.s32 %v50, 16
    %v65 = vadd.s32 %v57, 16
    %v66 = vsel %vm62, %v64, %v50
    %v67 = vsel %vm63, %v65, %v57
    %v68 = vld [vmem:[#allocation7] sm:$0xff]
    %v70 = vcombine.high %v68, %v68
    %vm72 = vcmask 1043456
    %v73 = vsel %vm72, %v68, 0.0
    %v74 = vrot.slane %v73, 4
    %v75 = vadd.f32 %v73, %v74
    %v76 = vrot.slane %v75, 2
    %v77 = vadd.f32 %v75, %v76
    %v78 = vrot.slane %v77, 1
    %v79 = vadd.f32 %v77, %v78
    %v80 = vsel %vm72, %v70, 0.0
    %v81 = vrot.slane %v80, 4
    %v82 = vadd.f32 %v80, %v81
    %v83 = vrot.slane %v82, 2
    %v84 = vadd.f32 %v82, %v83
    %v85 = vrot.slane %v84, 1
    %v86 = vadd.f32 %v84, %v85
    %v87 = vadd.f32 %v79, 0.0
    %v88 = vadd.f32 %v86, 0.0
    %v89 = vsel %vm72, %v68, -inf
    %v90 = vrot.slane %v89, 4
    %v91 = vmax.f32 %v89, %v90
    %v92 = vrot.slane %v91, 2
    %v93 = vmax.f32 %v91, %v92
    %v94 = vrot.slane %v93, 1
    %v95 = vmax.f32 %v93, %v94
    %v96 = vsel %vm72, %v70, -inf
    %v97 = vrot.slane %v96, 4
    %v98 = vmax.f32 %v96, %v97
    %v99 = vrot.slane %v98, 2
    %v100 = vmax.f32 %v98, %v99
    %v101 = vrot.slane %v100, 1
    %v102 = vmax.f32 %v100, %v101
    %v103 = vmul.f32 %v87, 0.25
    %v104 = vmul.f32 %v88, 0.25
    %v107 = vcombine.low %v103, %v104
    %v109 = vunpack.c.l.s4 1966171168
    %v110 = vunpack.c.0.s8 %v109
    %v111 = vlaneseq
    %v112 = vshrl.u32 %v111, 7
    %v113 = vsub.s32 %v110, %v112
    %v114 = vrot.slane %v107, %v113
    %v116 = vunpack.c.l.s4 1966171168
    %v117 = vunpack.c.0.s8 %v116
    %v118 = vlaneseq
    %v119 = vshrl.u32 %v118, 7
    %v120 = vsub.s32 %v117, %v119
    %v121 = vrot.slane %v114, %v120
    %v123 = vlaneseq
    %vm124 = vcmp.ge.s32.totalorder %v123, 0
    %vm125 = vcmp.lt.s32.totalorder %v123, 256
    %vm126 = vmand %vm124, %vm125
    %s127 = scalar_lea.vmem [#allocation2], 11
    %128 = vst.msk [vmem:[%s127] ss:$8 sm:$0x3] %vm126, %v121
    %129 = vst.msk [vmem:[%s127] ss:$8 sm:$0x0] %vm126, %v121
    %v132 = vcombine.low %v95, %v102
    %v134 = vunpack.c.l.s4 1966171168
    %v135 = vunpack.c.0.s8 %v134
    %v136 = vlaneseq
    %v137 = vshrl.u32 %v136, 7
    %v138 = vsub.s32 %v135, %v137
    %v139 = vrot.slane %v132, %v138
    %v141 = vunpack.c.l.s4 1966171168
    %v142 = vunpack.c.0.s8 %v141
    %v143 = vlaneseq
    %v144 = vshrl.u32 %v143, 7
    %v145 = vsub.s32 %v142, %v144
    %v146 = vrot.slane %v139, %v145
    %s148 = scalar_lea.vmem [#allocation2], 42
    %149 = vst.msk [vmem:[%s148] ss:$8 sm:$0x3] %vm126, %v146
    %150 = vst.msk [vmem:[%s148] ss:$8 sm:$0x0] %vm126, %v146
    %vm151 = vcmp.ge.s32.totalorder %v66, 3
    %vm152 = vcmp.ge.s32.totalorder %v67, 3
    %vm153 = vcmp.lt.s32.totalorder %v66, 19
    %vm154 = vcmp.lt.s32.totalorder %v67, 19
    %vm155 = vmand %vm151, %vm153
    %vm156 = vmand %vm152, %vm154
    %s157 = scalar_lea.vmem [#allocation2], 3
    %v158 = vld [vmem:[%s157] ss:$8 sm:$0x7]
    %v160 = vlaneseq
    %v161 = vshrl.u32 %v160, 7
    %v162 = vsub.s32 0, %v161
    %v163 = vrot.slane %v158, %v162
    %v164 = vlaneseq
    %v165 = vshrl.u32 %v164, 7
    %v166 = vsub.s32 1, %v165
    %v167 = vrot.slane %v158, %v166
    %v168 = vlaneseq
    %v169 = vshrl.u32 %v168, 7
    %v170 = vsub.s32 2, %v169
    %v171 = vrot.slane %v158, %v170
    %172 = vrot.lane.b32.xlu0 %v163, 3
    %v173 = vpop.permute.xlu0 %172
    %174 = vrot.lane.b32.xlu0 %v167, 3
    %v175 = vpop.permute.xlu0 %174
    %176 = vrot.lane.b32.xlu0 %v171, 3
    %v177 = vpop.permute.xlu0 %176
    %vm178 = vcmask 23552
    %v179 = vsel %vm178, %v173, %v175
    %v180 = vsel %vm178, %v175, %v177
    %v183 = vsel %vm155, %v179, 0.0
    %v184 = vsel %vm156, %v180, 0.0
    %v187 = vcombine.low %v183, %v184
    %v189 = vunpack.c.l.s4 1966171168
    %v190 = vunpack.c.0.s8 %v189
    %v191 = vlaneseq
    %v192 = vshrl.u32 %v191, 7
    %v193 = vsub.s32 %v190, %v192
    %v194 = vrot.slane %v187, %v193
    %v196 = vunpack.c.l.s4 1966171168
    %v197 = vunpack.c.0.s8 %v196
    %v198 = vlaneseq
    %v199 = vshrl.u32 %v198, 7
    %v200 = vsub.s32 %v197, %v199
    %v201 = vrot.slane %v194, %v200
    %s203 = scalar_lea.vmem [#allocation2], 8
    %204 = vst.msk [vmem:[%s203] ss:$8 sm:$0x3] %vm126, %v201
    %205 = vst.msk [vmem:[%s203] ss:$8 sm:$0x0] %vm126, %v201
    %s206 = scalar_lea.vmem [#allocation2], 34
    %v207 = vld [vmem:[%s206] ss:$8 sm:$0x7]
    %v209 = vlaneseq
    %v210 = vshrl.u32 %v209, 7
    %v211 = vsub.s32 0, %v210
    %v212 = vrot.slane %v207, %v211
    %v213 = vlaneseq
    %v214 = vshrl.u32 %v213, 7
    %v215 = vsub.s32 1, %v214
    %v216 = vrot.slane %v207, %v215
    %v217 = vlaneseq
    %v218 = vshrl.u32 %v217, 7
    %v219 = vsub.s32 2, %v218
    %v220 = vrot.slane %v207, %v219
    %221 = vrot.lane.b32.xlu0 %v212, 3
    %v222 = vpop.permute.xlu0 %221
    %223 = vrot.lane.b32.xlu0 %v216, 3
    %v224 = vpop.permute.xlu0 %223
    %225 = vrot.lane.b32.xlu0 %v220, 3
    %v226 = vpop.permute.xlu0 %225
    %v227 = vsel %vm178, %v222, %v224
    %v228 = vsel %vm178, %v224, %v226
    %v231 = vsel %vm155, %v227, 0.0
    %v232 = vsel %vm156, %v228, 0.0
    %v235 = vcombine.low %v231, %v232
    %v237 = vunpack.c.l.s4 1966171168
    %v238 = vunpack.c.0.s8 %v237
    %v239 = vlaneseq
    %v240 = vshrl.u32 %v239, 7
    %v241 = vsub.s32 %v238, %v240
    %v242 = vrot.slane %v235, %v241
    %v244 = vunpack.c.l.s4 1966171168
    %v245 = vunpack.c.0.s8 %v244
    %v246 = vlaneseq
    %v247 = vshrl.u32 %v246, 7
    %v248 = vsub.s32 %v245, %v247
    %v249 = vrot.slane %v242, %v248
    %s251 = scalar_lea.vmem [#allocation2], 15
    %252 = vst.msk [vmem:[%s251] ss:$8 sm:$0x3] %vm126, %v249
    %253 = vst.msk [vmem:[%s251] ss:$8 sm:$0x0] %vm126, %v249
    %vm254 = vcmp.ge.s32.totalorder %v66, 2
    %vm255 = vcmp.ge.s32.totalorder %v67, 2
    %vm256 = vcmp.lt.s32.totalorder %v66, 18
    %vm257 = vcmp.lt.s32.totalorder %v67, 18
    %vm258 = vmand %vm254, %vm256
    %vm259 = vmand %vm255, %vm257
    %v260 = vld [vmem:[%s157] ss:$8 sm:$0x7]
    %v262 = vlaneseq
    %v263 = vshrl.u32 %v262, 7
    %v264 = vsub.s32 0, %v263
    %v265 = vrot.slane %v260, %v264
    %v266 = vlaneseq
    %v267 = vshrl.u32 %v266, 7
    %v268 = vsub.s32 1, %v267
    %v269 = vrot.slane %v260, %v268
    %v270 = vlaneseq
    %v271 = vshrl.u32 %v270, 7
    %v272 = vsub.s32 2, %v271
    %v273 = vrot.slane %v260, %v272
    %274 = vrot.lane.b32.xlu0 %v265, 2
    %v275 = vpop.permute.xlu0 %274
    %276 = vrot.lane.b32.xlu0 %v269, 2
    %v277 = vpop.permute.xlu0 %276
    %278 = vrot.lane.b32.xlu0 %v273, 2
    %v279 = vpop.permute.xlu0 %278
    %vm280 = vcmask 15360
    %v281 = vsel %vm280, %v275, %v277
    %v282 = vsel %vm280, %v277, %v279
    %v285 = vsel %vm258, %v281, 0.0
    %v286 = vsel %vm259, %v282, 0.0
    %v289 = vcombine.low %v285, %v286
    %v291 = vunpack.c.l.s4 1966171168
    %v292 = vunpack.c.0.s8 %v291
    %v293 = vlaneseq
    %v294 = vshrl.u32 %v293, 7
    %v295 = vsub.s32 %v292, %v294
    %v296 = vrot.slane %v289, %v295
    %v298 = vunpack.c.l.s4 1966171168
    %v299 = vunpack.c.0.s8 %v298
    %v300 = vlaneseq
    %v301 = vshrl.u32 %v300, 7
    %v302 = vsub.s32 %v299, %v301
    %v303 = vrot.slane %v296, %v302
    %s305 = scalar_lea.vmem [#allocation2], 9
    %306 = vst.msk [vmem:[%s305] ss:$8 sm:$0x3] %vm126, %v303
    %307 = vst.msk [vmem:[%s305] ss:$8 sm:$0x0] %vm126, %v303
    %v308 = vld [vmem:[%s206] ss:$8 sm:$0x7]
    %v310 = vlaneseq
    %v311 = vshrl.u32 %v310, 7
    %v312 = vsub.s32 0, %v311
    %v313 = vrot.slane %v308, %v312
    %v314 = vlaneseq
    %v315 = vshrl.u32 %v314, 7
    %v316 = vsub.s32 1, %v315
    %v317 = vrot.slane %v308, %v316
    %v318 = vlaneseq
    %v319 = vshrl.u32 %v318, 7
    %v320 = vsub.s32 2, %v319
    %v321 = vrot.slane %v308, %v320
    %322 = vrot.lane.b32.xlu0 %v313, 2
    %v323 = vpop.permute.xlu0 %322
    %324 = vrot.lane.b32.xlu0 %v317, 2
    %v325 = vpop.permute.xlu0 %324
    %326 = vrot.lane.b32.xlu0 %v321, 2
    %v327 = vpop.permute.xlu0 %326
    %v328 = vsel %vm280, %v323, %v325
    %v329 = vsel %vm280, %v325, %v327
    %v332 = vsel %vm258, %v328, 0.0
    %v333 = vsel %vm259, %v329, 0.0
    %v336 = vcombine.low %v332, %v333
    %v338 = vunpack.c.l.s4 1966171168
    %v339 = vunpack.c.0.s8 %v338
    %v340 = vlaneseq
    %v341 = vshrl.u32 %v340, 7
    %v342 = vsub.s32 %v339, %v341
    %v343 = vrot.slane %v336, %v342
    %v345 = vunpack.c.l.s4 1966171168
    %v346 = vunpack.c.0.s8 %v345
    %v347 = vlaneseq
    %v348 = vshrl.u32 %v347, 7
    %v349 = vsub.s32 %v346, %v348
    %v350 = vrot.slane %v343, %v349
    %s352 = scalar_lea.vmem [#allocation2], 40
    %353 = vst.msk [vmem:[%s352] ss:$8 sm:$0x3] %vm126, %v350
    %354 = vst.msk [vmem:[%s352] ss:$8 sm:$0x0] %vm126, %v350
    %vm355 = vcmp.ge.s32.totalorder %v66, 1
    %vm356 = vcmp.ge.s32.totalorder %v67, 1
    %vm357 = vcmp.lt.s32.totalorder %v66, 17
    %vm358 = vcmp.lt.s32.totalorder %v67, 17
    %vm359 = vmand %vm355, %vm357
    %vm360 = vmand %vm356, %vm358
    %v361 = vld [vmem:[%s157] ss:$8 sm:$0x7]
    %v363 = vlaneseq
    %v364 = vshrl.u32 %v363, 7
    %v365 = vsub.s32 0, %v364
    %v366 = vrot.slane %v361, %v365
    %v367 = vlaneseq
    %v368 = vshrl.u32 %v367, 7
    %v369 = vsub.s32 1, %v368
    %v370 = vrot.slane %v361, %v369
    %v371 = vlaneseq
    %v372 = vshrl.u32 %v371, 7
    %v373 = vsub.s32 2, %v372
    %v374 = vrot.slane %v361, %v373
    %375 = vrot.lane.b32.xlu0 %v366, 1
    %v376 = vpop.permute.xlu0 %375
    %377 = vrot.lane.b32.xlu0 %v370, 1
    %v378 = vpop.permute.xlu0 %377
    %379 = vrot.lane.b32.xlu0 %v374, 1
    %v380 = vpop.permute.xlu0 %379
    %vm381 = vcmask 7168
    %v382 = vsel %vm381, %v376, %v378
    %v383 = vsel %vm381, %v378, %v380
    %v386 = vsel %vm359, %v382, 0.0
    %v387 = vsel %vm360, %v383, 0.0
    %v390 = vcombine.low %v386, %v387
    %v392 = vunpack.c.l.s4 1966171168
    %v393 = vunpack.c.0.s8 %v392
    %v394 = vlaneseq
    %v395 = vshrl.u32 %v394, 7
    %v396 = vsub.s32 %v393, %v395
    %v397 = vrot.slane %v390, %v396
    %v399 = vunpack.c.l.s4 1966171168
    %v400 = vunpack.c.0.s8 %v399
    %v401 = vlaneseq
    %v402 = vshrl.u32 %v401, 7
    %v403 = vsub.s32 %v400, %v402
    %v404 = vrot.slane %v397, %v403
    %s406 = scalar_lea.vmem [#allocation2], 10
    %407 = vst.msk [vmem:[%s406] ss:$8 sm:$0x3] %vm126, %v404
    %408 = vst.msk [vmem:[%s406] ss:$8 sm:$0x0] %vm126, %v404
    %v409 = vld [vmem:[%s206] ss:$8 sm:$0x7]
    %v411 = vlaneseq
    %v412 = vshrl.u32 %v411, 7
    %v413 = vsub.s32 0, %v412
    %v414 = vrot.slane %v409, %v413
    %v415 = vlaneseq
    %v416 = vshrl.u32 %v415, 7
    %v417 = vsub.s32 1, %v416
    %v418 = vrot.slane %v409, %v417
    %v419 = vlaneseq
    %v420 = vshrl.u32 %v419, 7
    %v421 = vsub.s32 2, %v420
    %v422 = vrot.slane %v409, %v421
    %423 = vrot.lane.b32.xlu0 %v414, 1
    %v424 = vpop.permute.xlu0 %423
    %425 = vrot.lane.b32.xlu0 %v418, 1
    %v426 = vpop.permute.xlu0 %425
    %427 = vrot.lane.b32.xlu0 %v422, 1
    %v428 = vpop.permute.xlu0 %427
    %v429 = vsel %vm381, %v424, %v426
    %v430 = vsel %vm381, %v426, %v428
    %v433 = vsel %vm359, %v429, 0.0
    %v434 = vsel %vm360, %v430, 0.0
    %v437 = vcombine.low %v433, %v434
    %v439 = vunpack.c.l.s4 1966171168
    %v440 = vunpack.c.0.s8 %v439
    %v441 = vlaneseq
    %v442 = vshrl.u32 %v441, 7
    %v443 = vsub.s32 %v440, %v442
    %v444 = vrot.slane %v437, %v443
    %v446 = vunpack.c.l.s4 1966171168
    %v447 = vunpack.c.0.s8 %v446
    %v448 = vlaneseq
    %v449 = vshrl.u32 %v448, 7
    %v450 = vsub.s32 %v447, %v449
    %v451 = vrot.slane %v444, %v450
    %s453 = scalar_lea.vmem [#allocation2], 41
    %454 = vst.msk [vmem:[%s453] ss:$8 sm:$0x3] %vm126, %v451
    %455 = vst.msk [vmem:[%s453] ss:$8 sm:$0x0] %vm126, %v451
    %vm456 = vcmp.ge.s32.totalorder %v66, 4294967295
    %vm457 = vcmp.ge.s32.totalorder %v67, 4294967295
    %vm458 = vcmp.lt.s32.totalorder %v66, 15
    %vm459 = vcmp.lt.s32.totalorder %v67, 15
    %vm460 = vmand %vm456, %vm458
    %vm461 = vmand %vm457, %vm459
    %v462 = vld [vmem:[%s127] ss:$8 sm:$0x7]
    %v464 = vlaneseq
    %v465 = vshrl.u32 %v464, 7
    %v466 = vsub.s32 0, %v465
    %v467 = vrot.slane %v462, %v466
    %v468 = vlaneseq
    %v469 = vshrl.u32 %v468, 7
    %v470 = vsub.s32 1, %v469
    %v471 = vrot.slane %v462, %v470
    %v472 = vlaneseq
    %v473 = vshrl.u32 %v472, 7
    %v474 = vsub.s32 2, %v473
    %v475 = vrot.slane %v462, %v474
    %476 = vrot.lane.b32.xlu0 %v467, 127
    %v477 = vpop.permute.xlu0 %476
    %478 = vrot.lane.b32.xlu0 %v471, 127
    %v479 = vpop.permute.xlu0 %478
    %480 = vrot.lane.b32.xlu0 %v475, 127
    %v481 = vpop.permute.xlu0 %480
    %vm482 = vcmask 1039360
    %v483 = vsel %vm482, %v477, %v479
    %v484 = vsel %vm482, %v479, %v481
    %v487 = vsel %vm460, %v483, 0.0
    %v488 = vsel %vm461, %v484, 0.0
    %v491 = vcombine.low %v487, %v488
    %v493 = vunpack.c.l.s4 1966171168
    %v494 = vunpack.c.0.s8 %v493
    %v495 = vlaneseq
    %v496 = vshrl.u32 %v495, 7
    %v497 = vsub.s32 %v494, %v496
    %v498 = vrot.slane %v491, %v497
    %v500 = vunpack.c.l.s4 1966171168
    %v501 = vunpack.c.0.s8 %v500
    %v502 = vlaneseq
    %v503 = vshrl.u32 %v502, 7
    %v504 = vsub.s32 %v501, %v503
    %v505 = vrot.slane %v498, %v504
    %s507 = scalar_lea.vmem [#allocation2], 12
    %508 = vst.msk [vmem:[%s507] ss:$8 sm:$0x3] %vm126, %v505
    %509 = vst.msk [vmem:[%s507] ss:$8 sm:$0x0] %vm126, %v505
    %v510 = vld [vmem:[%s148] ss:$8 sm:$0x7]
    %v512 = vlaneseq
    %v513 = vshrl.u32 %v512, 7
    %v514 = vsub.s32 0, %v513
    %v515 = vrot.slane %v510, %v514
    %v516 = vlaneseq
    %v517 = vshrl.u32 %v516, 7
    %v518 = vsub.s32 1, %v517
    %v519 = vrot.slane %v510, %v518
    %v520 = vlaneseq
    %v521 = vshrl.u32 %v520, 7
    %v522 = vsub.s32 2, %v521
    %v523 = vrot.slane %v510, %v522
    %524 = vrot.lane.b32.xlu0 %v515, 127
    %v525 = vpop.permute.xlu0 %524
    %526 = vrot.lane.b32.xlu0 %v519, 127
    %v527 = vpop.permute.xlu0 %526
    %528 = vrot.lane.b32.xlu0 %v523, 127
    %v529 = vpop.permute.xlu0 %528
    %v530 = vsel %vm482, %v525, %v527
    %v531 = vsel %vm482, %v527, %v529
    %v534 = vsel %vm460, %v530, 0.0
    %v535 = vsel %vm461, %v531, 0.0
    %v538 = vcombine.low %v534, %v535
    %v540 = vunpack.c.l.s4 1966171168
    %v541 = vunpack.c.0.s8 %v540
    %v542 = vlaneseq
    %v543 = vshrl.u32 %v542, 7
    %v544 = vsub.s32 %v541, %v543
    %v545 = vrot.slane %v538, %v544
    %v547 = vunpack.c.l.s4 1966171168
    %v548 = vunpack.c.0.s8 %v547
    %v549 = vlaneseq
    %v550 = vshrl.u32 %v549, 7
    %v551 = vsub.s32 %v548, %v550
    %v552 = vrot.slane %v545, %v551
    %s554 = scalar_lea.vmem [#allocation2], 43
    %555 = vst.msk [vmem:[%s554] ss:$8 sm:$0x3] %vm126, %v552
    %556 = vst.msk [vmem:[%s554] ss:$8 sm:$0x0] %vm126, %v552
    %vm557 = vcmp.ge.s32.totalorder %v66, 4294967294
    %vm558 = vcmp.ge.s32.totalorder %v67, 4294967294
    %vm559 = vcmp.lt.s32.totalorder %v66, 14
    %vm560 = vcmp.lt.s32.totalorder %v67, 14
    %vm561 = vmand %vm557, %vm559
    %vm562 = vmand %vm558, %vm560
    %v563 = vld [vmem:[%s127] ss:$8 sm:$0x7]
    %v565 = vlaneseq
    %v566 = vshrl.u32 %v565, 7
    %v567 = vsub.s32 0, %v566
    %v568 = vrot.slane %v563, %v567
    %v569 = vlaneseq
    %v570 = vshrl.u32 %v569, 7
    %v571 = vsub.s32 1, %v570
    %v572 = vrot.slane %v563, %v571
    %v573 = vlaneseq
    %v574 = vshrl.u32 %v573, 7
    %v575 = vsub.s32 2, %v574
    %v576 = vrot.slane %v563, %v575
    %577 = vrot.lane.b32.xlu0 %v568, 126
    %v578 = vpop.permute.xlu0 %577
    %579 = vrot.lane.b32.xlu0 %v572, 126
    %v580 = vpop.permute.xlu0 %579
    %581 = vrot.lane.b32.xlu0 %v576, 126
    %v582 = vpop.permute.xlu0 %581
    %vm583 = vcmask 1031168
    %v584 = vsel %vm583, %v578, %v580
    %v585 = vsel %vm583, %v580, %v582
    %v588 = vsel %vm561, %v584, 0.0
    %v589 = vsel %vm562, %v585, 0.0
    %v592 = vcombine.low %v588, %v589
    %v594 = vunpack.c.l.s4 1966171168
    %v595 = vunpack.c.0.s8 %v594
    %v596 = vlaneseq
    %v597 = vshrl.u32 %v596, 7
    %v598 = vsub.s32 %v595, %v597
    %v599 = vrot.slane %v592, %v598
    %v601 = vunpack.c.l.s4 1966171168
    %v602 = vunpack.c.0.s8 %v601
    %v603 = vlaneseq
    %v604 = vshrl.u32 %v603, 7
    %v605 = vsub.s32 %v602, %v604
    %v606 = vrot.slane %v599, %v605
    %s608 = scalar_lea.vmem [#allocation2], 13
    %609 = vst.msk [vmem:[%s608] ss:$8 sm:$0x3] %vm126, %v606
    %610 = vst.msk [vmem:[%s608] ss:$8 sm:$0x0] %vm126, %v606
    %v611 = vld [vmem:[%s148] ss:$8 sm:$0x7]
    %v613 = vlaneseq
    %v614 = vshrl.u32 %v613, 7
    %v615 = vsub.s32 0, %v614
    %v616 = vrot.slane %v611, %v615
    %v617 = vlaneseq
    %v618 = vshrl.u32 %v617, 7
    %v619 = vsub.s32 1, %v618
    %v620 = vrot.slane %v611, %v619
    %v621 = vlaneseq
    %v622 = vshrl.u32 %v621, 7
    %v623 = vsub.s32 2, %v622
    %v624 = vrot.slane %v611, %v623
    %625 = vrot.lane.b32.xlu0 %v616, 126
    %v626 = vpop.permute.xlu0 %625
    %627 = vrot.lane.b32.xlu0 %v620, 126
    %v628 = vpop.permute.xlu0 %627
    %629 = vrot.lane.b32.xlu0 %v624, 126
    %v630 = vpop.permute.xlu0 %629
    %v631 = vsel %vm583, %v626, %v628
    %v632 = vsel %vm583, %v628, %v630
    %v635 = vsel %vm561, %v631, 0.0
    %v636 = vsel %vm562, %v632, 0.0
    %v639 = vcombine.low %v635, %v636
    %v641 = vunpack.c.l.s4 1966171168
    %v642 = vunpack.c.0.s8 %v641
    %v643 = vlaneseq
    %v644 = vshrl.u32 %v643, 7
    %v645 = vsub.s32 %v642, %v644
    %v646 = vrot.slane %v639, %v645
    %v648 = vunpack.c.l.s4 1966171168
    %v649 = vunpack.c.0.s8 %v648
    %v650 = vlaneseq
    %v651 = vshrl.u32 %v650, 7
    %v652 = vsub.s32 %v649, %v651
    %v653 = vrot.slane %v646, %v652
    %s655 = scalar_lea.vmem [#allocation2], 44
    %656 = vst.msk [vmem:[%s655] ss:$8 sm:$0x3] %vm126, %v653
    %657 = vst.msk [vmem:[%s655] ss:$8 sm:$0x0] %vm126, %v653
    %vm658 = vcmp.ge.s32.totalorder %v66, 4294967293
    %vm659 = vcmp.ge.s32.totalorder %v67, 4294967293
    %vm660 = vcmp.lt.s32.totalorder %v66, 13
    %vm661 = vcmp.lt.s32.totalorder %v67, 13
    %vm662 = vmand %vm658, %vm660
    %vm663 = vmand %vm659, %vm661
    %v664 = vld [vmem:[%s127] ss:$8 sm:$0x7]
    %v666 = vlaneseq
    %v667 = vshrl.u32 %v666, 7
    %v668 = vsub.s32 0, %v667
    %v669 = vrot.slane %v664, %v668
    %v670 = vlaneseq
    %v671 = vshrl.u32 %v670, 7
    %v672 = vsub.s32 1, %v671
    %v673 = vrot.slane %v664, %v672
    %v674 = vlaneseq
    %v675 = vshrl.u32 %v674, 7
    %v676 = vsub.s32 2, %v675
    %v677 = vrot.slane %v664, %v676
    %678 = vrot.lane.b32.xlu0 %v669, 125
    %v679 = vpop.permute.xlu0 %678
    %680 = vrot.lane.b32.xlu0 %v673, 125
    %v681 = vpop.permute.xlu0 %680
    %682 = vrot.lane.b32.xlu0 %v677, 125
    %v683 = vpop.permute.xlu0 %682
    %vm684 = vcmask 1022976
    %v685 = vsel %vm684, %v679, %v681
    %v686 = vsel %vm684, %v681, %v683
    %v689 = vsel %vm662, %v685, 0.0
    %v690 = vsel %vm663, %v686, 0.0
    %v693 = vcombine.low %v689, %v690
    %v695 = vunpack.c.l.s4 1966171168
    %v696 = vunpack.c.0.s8 %v695
    %v697 = vlaneseq
    %v698 = vshrl.u32 %v697, 7
    %v699 = vsub.s32 %v696, %v698
    %v700 = vrot.slane %v693, %v699
    %v702 = vunpack.c.l.s4 1966171168
    %v703 = vunpack.c.0.s8 %v702
    %v704 = vlaneseq
    %v705 = vshrl.u32 %v704, 7
    %v706 = vsub.s32 %v703, %v705
    %v707 = vrot.slane %v700, %v706
    %s709 = scalar_lea.vmem [#allocation2], 14
    %710 = vst.msk [vmem:[%s709] ss:$8 sm:$0x3] %vm126, %v707
    %711 = vst.msk [vmem:[%s709] ss:$8 sm:$0x0] %vm126, %v707
    %v712 = vld [vmem:[%s148] ss:$8 sm:$0x7]
    %v714 = vlaneseq
    %v715 = vshrl.u32 %v714, 7
    %v716 = vsub.s32 0, %v715
    %v717 = vrot.slane %v712, %v716
    %v718 = vlaneseq
    %v719 = vshrl.u32 %v718, 7
    %v720 = vsub.s32 1, %v719
    %v721 = vrot.slane %v712, %v720
    %v722 = vlaneseq
    %v723 = vshrl.u32 %v722, 7
    %v724 = vsub.s32 2, %v723
    %v725 = vrot.slane %v712, %v724
    %726 = vrot.lane.b32.xlu0 %v717, 125
    %v727 = vpop.permute.xlu0 %726
    %728 = vrot.lane.b32.xlu0 %v721, 125
    %v729 = vpop.permute.xlu0 %728
    %730 = vrot.lane.b32.xlu0 %v725, 125
    %v731 = vpop.permute.xlu0 %730
    %v732 = vsel %vm684, %v727, %v729
    %v733 = vsel %vm684, %v729, %v731
    %v736 = vsel %vm662, %v732, 0.0
    %v737 = vsel %vm663, %v733, 0.0
    %v740 = vcombine.low %v736, %v737
    %v742 = vunpack.c.l.s4 1966171168
    %v743 = vunpack.c.0.s8 %v742
    %v744 = vlaneseq
    %v745 = vshrl.u32 %v744, 7
    %v746 = vsub.s32 %v743, %v745
    %v747 = vrot.slane %v740, %v746
    %v749 = vunpack.c.l.s4 1966171168
    %v750 = vunpack.c.0.s8 %v749
    %v751 = vlaneseq
    %v752 = vshrl.u32 %v751, 7
    %v753 = vsub.s32 %v750, %v752
    %v754 = vrot.slane %v747, %v753
    %s756 = scalar_lea.vmem [#allocation2], 45
    %757 = vst.msk [vmem:[%s756] ss:$8 sm:$0x3] %vm126, %v754
    %758 = vst.msk [vmem:[%s756] ss:$8 sm:$0x0] %vm126, %v754
    %v759 = vld [vmem:[#allocation2] ss:$8 sm:$0x7]
    %s760 = sld [smem:[#allocation3]]
    %v761 = vstv %s760
    %v762 = vmul.f32 %v761, %v759
    %v763 = vadd.f32 %v762, 0.0
    %s764 = scalar_lea.vmem [#allocation2], 1
    %v765 = vld [vmem:[%s764] ss:$8 sm:$0x7]
    %s766 = sld [smem:[#allocation3 + $0x1]]
    %v767 = vstv %s766
    %v768 = vmul.f32 %v767, %v765
    %v769 = vadd.f32 %v763, %v768
    %s770 = scalar_lea.vmem [#allocation2], 2
    %v771 = vld [vmem:[%s770] ss:$8 sm:$0x7]
    %s772 = sld [smem:[#allocation3 + $0x2]]
    %v773 = vstv %s772
    %v774 = vmul.f32 %v773, %v771
    %v775 = vadd.f32 %v769, %v774
    %v776 = vld [vmem:[%s157] ss:$8 sm:$0x7]
    %s777 = sld [smem:[#allocation3 + $0x3]]
    %v778 = vstv %s777
    %v779 = vmul.f32 %v778, %v776
    %v780 = vadd.f32 %v775, %v779
    %s781 = scalar_lea.vmem [#allocation2], 4
    %v782 = vld [vmem:[%s781] ss:$8 sm:$0x7]
    %s783 = sld [smem:[#allocation3 + $0x4]]
    %v784 = vstv %s783
    %v785 = vmul.f32 %v784, %v782
    %v786 = vadd.f32 %v780, %v785
    %s787 = scalar_lea.vmem [#allocation2], 5
    %v788 = vld [vmem:[%s787] ss:$8 sm:$0x7]
    %s789 = sld [smem:[#allocation3 + $0x5]]
    %v790 = vstv %s789
    %v791 = vmul.f32 %v790, %v788
    %v792 = vadd.f32 %v786, %v791
    %s793 = scalar_lea.vmem [#allocation2], 6
    %v794 = vld [vmem:[%s793] ss:$8 sm:$0x7]
    %s795 = sld [smem:[#allocation3 + $0x6]]
    %v796 = vstv %s795
    %v797 = vmul.f32 %v796, %v794
    %v798 = vadd.f32 %v792, %v797
    %s799 = scalar_lea.vmem [#allocation2], 7
    %v800 = vld [vmem:[%s799] ss:$8 sm:$0x7]
    %s801 = sld [smem:[#allocation3 + $0x31]]
    %v802 = vstv %s801
    %v803 = vmul.f32 %v802, %v800
    %v804 = vadd.f32 %v798, %v803
    %s805 = scalar_lea.vmem [#allocation2], 32
    %v806 = vld [vmem:[%s805] ss:$8 sm:$0x7]
    %s807 = sld [smem:[#allocation3 + $0x32]]
    %v808 = vstv %s807
    %v809 = vmul.f32 %v808, %v806
    %v810 = vadd.f32 %v804, %v809
    %s811 = scalar_lea.vmem [#allocation2], 33
    %v812 = vld [vmem:[%s811] ss:$8 sm:$0x7]
    %s813 = sld [smem:[#allocation3 + $0x33]]
    %v814 = vstv %s813
    %v815 = vmul.f32 %v814, %v812
    %v816 = vadd.f32 %v810, %v815
    %v817 = vld [vmem:[%s206] ss:$8 sm:$0x7]
    %s818 = sld [smem:[#allocation3 + $0x34]]
    %v819 = vstv %s818
    %v820 = vmul.f32 %v819, %v817
    %v821 = vadd.f32 %v816, %v820
    %s822 = scalar_lea.vmem [#allocation2], 35
    %v823 = vld [vmem:[%s822] ss:$8 sm:$0x7]
    %s824 = sld [smem:[#allocation3 + $0x35]]
    %v825 = vstv %s824
    %v826 = vmul.f32 %v825, %v823
    %v827 = vadd.f32 %v821, %v826
    %s828 = scalar_lea.vmem [#allocation2], 36
    %v829 = vld [vmem:[%s828] ss:$8 sm:$0x7]
    %s830 = sld [smem:[#allocation3 + $0x36]]
    %v831 = vstv %s830
    %v832 = vmul.f32 %v831, %v829
    %v833 = vadd.f32 %v827, %v832
    %s834 = scalar_lea.vmem [#allocation2], 37
    %v835 = vld [vmem:[%s834] ss:$8 sm:$0x7]
    %s836 = sld [smem:[#allocation3 + $0x37]]
    %v837 = vstv %s836
    %v838 = vmul.f32 %v837, %v835
    %v839 = vadd.f32 %v833, %v838
    %s840 = sld [smem:[#allocation3 + $0x7]]
    %v841 = vstv %s840
    %v842 = vmul.f32 %v841, %v759
    %844 = vrot.lane.b32.xlu0 %v842, 112
    %v845 = vpop.permute.xlu0 %844
    %v846 = vrot.slane %v845, 1
    %vm847 = vcmask 916480
    %v848 = vsel %vm847, %v845, %v846
    %v850 = vadd.f32 %v839, %v848
    %s851 = sld [smem:[#allocation3 + $0x8]]
    %v852 = vstv %s851
    %v853 = vmul.f32 %v852, %v765
    %855 = vrot.lane.b32.xlu0 %v853, 112
    %v856 = vpop.permute.xlu0 %855
    %v857 = vrot.slane %v856, 1
    %v858 = vsel %vm847, %v856, %v857
    %v860 = vadd.f32 %v850, %v858
    %s861 = sld [smem:[#allocation3 + $0x9]]
    %v862 = vstv %s861
    %v863 = vmul.f32 %v862, %v771
    %865 = vrot.lane.b32.xlu0 %v863, 112
    %v866 = vpop.permute.xlu0 %865
    %v867 = vrot.slane %v866, 1
    %v868 = vsel %vm847, %v866, %v867
    %v870 = vadd.f32 %v860, %v868
    %s871 = sld [smem:[#allocation3 + $0xa]]
    %v872 = vstv %s871
    %v873 = vmul.f32 %v872, %v776
    %875 = vrot.lane.b32.xlu0 %v873, 112
    %v876 = vpop.permute.xlu0 %875
    %v877 = vrot.slane %v876, 1
    %v878 = vsel %vm847, %v876, %v877
    %v880 = vadd.f32 %v870, %v878
    %s881 = sld [smem:[#allocation3 + $0xb]]
    %v882 = vstv %s881
    %v883 = vmul.f32 %v882, %v782
    %885 = vrot.lane.b32.xlu0 %v883, 112
    %v886 = vpop.permute.xlu0 %885
    %v887 = vrot.slane %v886, 1
    %v888 = vsel %vm847, %v886, %v887
    %v890 = vadd.f32 %v880, %v888
    %s891 = sld [smem:[#allocation3 + $0xc]]
    %v892 = vstv %s891
    %v893 = vmul.f32 %v892, %v788
    %895 = vrot.lane.b32.xlu0 %v893, 112
    %v896 = vpop.permute.xlu0 %895
    %v897 = vrot.slane %v896, 1
    %v898 = vsel %vm847, %v896, %v897
    %v900 = vadd.f32 %v890, %v898
    %s901 = sld [smem:[#allocation3 + $0xd]]
    %v902 = vstv %s901
    %v903 = vmul.f32 %v902, %v794
    %905 = vrot.lane.b32.xlu0 %v903, 112
    %v906 = vpop.permute.xlu0 %905
    %v907 = vrot.slane %v906, 1
    %v908 = vsel %vm847, %v906, %v907
    %v910 = vadd.f32 %v900, %v908
    %s911 = sld [smem:[#allocation3 + $0x38]]
    %v912 = vstv %s911
    %v913 = vmul.f32 %v912, %v800
    %915 = vrot.lane.b32.xlu0 %v913, 112
    %v916 = vpop.permute.xlu0 %915
    %v917 = vrot.slane %v916, 1
    %v918 = vsel %vm847, %v916, %v917
    %v920 = vadd.f32 %v910, %v918
    %s921 = sld [smem:[#allocation3 + $0x39]]
    %v922 = vstv %s921
    %v923 = vmul.f32 %v922, %v806
    %925 = vrot.lane.b32.xlu0 %v923, 112
    %v926 = vpop.permute.xlu0 %925
    %v927 = vrot.slane %v926, 1
    %v928 = vsel %vm847, %v926, %v927
    %v930 = vadd.f32 %v920, %v928
    %s931 = sld [smem:[#allocation3 + $0x3a]]
    %v932 = vstv %s931
    %v933 = vmul.f32 %v932, %v812
    %935 = vrot.lane.b32.xlu0 %v933, 112
    %v936 = vpop.permute.xlu0 %935
    %v937 = vrot.slane %v936, 1
    %v938 = vsel %vm847, %v936, %v937
    %v940 = vadd.f32 %v930, %v938
    %s941 = sld [smem:[#allocation3 + $0x3b]]
    %v942 = vstv %s941
    %v943 = vmul.f32 %v942, %v817
    %945 = vrot.lane.b32.xlu0 %v943, 112
    %v946 = vpop.permute.xlu0 %945
    %v947 = vrot.slane %v946, 1
    %v948 = vsel %vm847, %v946, %v947
    %v950 = vadd.f32 %v940, %v948
    %s951 = sld [smem:[#allocation3 + $0x3c]]
    %v952 = vstv %s951
    %v953 = vmul.f32 %v952, %v823
    %955 = vrot.lane.b32.xlu0 %v953, 112
    %v956 = vpop.permute.xlu0 %955
    %v957 = vrot.slane %v956, 1
    %v958 = vsel %vm847, %v956, %v957
    %v960 = vadd.f32 %v950, %v958
    %s961 = sld [smem:[#allocation3 + $0x3d]]
    %v962 = vstv %s961
    %v963 = vmul.f32 %v962, %v829
    %965 = vrot.lane.b32.xlu0 %v963, 112
    %v966 = vpop.permute.xlu0 %965
    %v967 = vrot.slane %v966, 1
    %v968 = vsel %vm847, %v966, %v967
    %v970 = vadd.f32 %v960, %v968
    %s971 = sld [smem:[#allocation3 + $0x3e]]
    %v972 = vstv %s971
    %v973 = vmul.f32 %v972, %v835
    %975 = vrot.lane.b32.xlu0 %v973, 112
    %v976 = vpop.permute.xlu0 %975
    %v977 = vrot.slane %v976, 1
    %v978 = vsel %vm847, %v976, %v977
    %v980 = vadd.f32 %v970, %v978
    %s981 = sld [smem:[#allocation3 + $0xe]]
    %v982 = vstv %s981
    %v983 = vmul.f32 %v982, %v759
    %985 = vrot.lane.b32.xlu0 %v983, 96
    %v986 = vpop.permute.xlu0 %985
    %v987 = vrot.slane %v986, 1
    %vm988 = vcmask 785408
    %v989 = vsel %vm988, %v986, %v987
    %v991 = vadd.f32 %v980, %v989
    %s992 = sld [smem:[#allocation3 + $0xf]]
    %v993 = vstv %s992
    %v994 = vmul.f32 %v993, %v765
    %996 = vrot.lane.b32.xlu0 %v994, 96
    %v997 = vpop.permute.xlu0 %996
    %v998 = vrot.slane %v997, 1
    %v999 = vsel %vm988, %v997, %v998
    %v1001 = vadd.f32 %v991, %v999
    %s1002 = sld [smem:[#allocation3 + $0x10]]
    %v1003 = vstv %s1002
    %v1004 = vmul.f32 %v1003, %v771
    %1006 = vrot.lane.b32.xlu0 %v1004, 96
    %v1007 = vpop.permute.xlu0 %1006
    %v1008 = vrot.slane %v1007, 1
    %v1009 = vsel %vm988, %v1007, %v1008
    %v1011 = vadd.f32 %v1001, %v1009
    %s1012 = sld [smem:[#allocation3 + $0x11]]
    %v1013 = vstv %s1012
    %v1014 = vmul.f32 %v1013, %v776
    %1016 = vrot.lane.b32.xlu0 %v1014, 96
    %v1017 = vpop.permute.xlu0 %1016
    %v1018 = vrot.slane %v1017, 1
    %v1019 = vsel %vm988, %v1017, %v1018
    %v1021 = vadd.f32 %v1011, %v1019
    %s1022 = sld [smem:[#allocation3 + $0x12]]
    %v1023 = vstv %s1022
    %v1024 = vmul.f32 %v1023, %v782
    %1026 = vrot.lane.b32.xlu0 %v1024, 96
    %v1027 = vpop.permute.xlu0 %1026
    %v1028 = vrot.slane %v1027, 1
    %v1029 = vsel %vm988, %v1027, %v1028
    %v1031 = vadd.f32 %v1021, %v1029
    %s1032 = sld [smem:[#allocation3 + $0x13]]
    %v1033 = vstv %s1032
    %v1034 = vmul.f32 %v1033, %v788
    %1036 = vrot.lane.b32.xlu0 %v1034, 96
    %v1037 = vpop.permute.xlu0 %1036
    %v1038 = vrot.slane %v1037, 1
    %v1039 = vsel %vm988, %v1037, %v1038
    %v1041 = vadd.f32 %v1031, %v1039
    %s1042 = sld [smem:[#allocation3 + $0x14]]
    %v1043 = vstv %s1042
    %v1044 = vmul.f32 %v1043, %v794
    %1046 = vrot.lane.b32.xlu0 %v1044, 96
    %v1047 = vpop.permute.xlu0 %1046
    %v1048 = vrot.slane %v1047, 1
    %v1049 = vsel %vm988, %v1047, %v1048
    %v1051 = vadd.f32 %v1041, %v1049
    %s1052 = sld [smem:[#allocation3 + $0x3f]]
    %v1053 = vstv %s1052
    %v1054 = vmul.f32 %v1053, %v800
    %1056 = vrot.lane.b32.xlu0 %v1054, 96
    %v1057 = vpop.permute.xlu0 %1056
    %v1058 = vrot.slane %v1057, 1
    %v1059 = vsel %vm988, %v1057, %v1058
    %v1061 = vadd.f32 %v1051, %v1059
    %s1062 = sld [smem:[#allocation3 + $0x40]]
    %v1063 = vstv %s1062
    %v1064 = vmul.f32 %v1063, %v806
    %1066 = vrot.lane.b32.xlu0 %v1064, 96
    %v1067 = vpop.permute.xlu0 %1066
    %v1068 = vrot.slane %v1067, 1
    %v1069 = vsel %vm988, %v1067, %v1068
    %v1071 = vadd.f32 %v1061, %v1069
    %s1072 = sld [smem:[#allocation3 + $0x41]]
    %v1073 = vstv %s1072
    %v1074 = vmul.f32 %v1073, %v812
    %1076 = vrot.lane.b32.xlu0 %v1074, 96
    %v1077 = vpop.permute.xlu0 %1076
    %v1078 = vrot.slane %v1077, 1
    %v1079 = vsel %vm988, %v1077, %v1078
    %v1081 = vadd.f32 %v1071, %v1079
    %s1082 = sld [smem:[#allocation3 + $0x42]]
    %v1083 = vstv %s1082
    %v1084 = vmul.f32 %v1083, %v817
    %1086 = vrot.lane.b32.xlu0 %v1084, 96
    %v1087 = vpop.permute.xlu0 %1086
    %v1088 = vrot.slane %v1087, 1
    %v1089 = vsel %vm988, %v1087, %v1088
    %v1091 = vadd.f32 %v1081, %v1089
    %s1092 = sld [smem:[#allocation3 + $0x43]]
    %v1093 = vstv %s1092
    %v1094 = vmul.f32 %v1093, %v823
    %1096 = vrot.lane.b32.xlu0 %v1094, 96
    %v1097 = vpop.permute.xlu0 %1096
    %v1098 = vrot.slane %v1097, 1
    %v1099 = vsel %vm988, %v1097, %v1098
    %v1101 = vadd.f32 %v1091, %v1099
    %s1102 = sld [smem:[#allocation3 + $0x44]]
    %v1103 = vstv %s1102
    %v1104 = vmul.f32 %v1103, %v829
    %1106 = vrot.lane.b32.xlu0 %v1104, 96
    %v1107 = vpop.permute.xlu0 %1106
    %v1108 = vrot.slane %v1107, 1
    %v1109 = vsel %vm988, %v1107, %v1108
    %v1111 = vadd.f32 %v1101, %v1109
    %s1112 = sld [smem:[#allocation3 + $0x45]]
    %v1113 = vstv %s1112
    %v1114 = vmul.f32 %v1113, %v835
    %1116 = vrot.lane.b32.xlu0 %v1114, 96
    %v1117 = vpop.permute.xlu0 %1116
    %v1118 = vrot.slane %v1117, 1
    %v1119 = vsel %vm988, %v1117, %v1118
    %v1121 = vadd.f32 %v1111, %v1119
    %v1122 = vld [vmem:[%s203] ss:$8 sm:$0x3]
    %s1123 = sld [smem:[#allocation3 + $0x15]]
    %v1124 = vstv %s1123
    %v1125 = vmul.f32 %v1124, %v1122
    %1127 = vrot.lane.b32.xlu0 %v1125, 80
    %v1128 = vpop.permute.xlu0 %1127
    %v1129 = vrot.slane %v1128, 7
    %vm1130 = vcmask 654336
    %v1131 = vsel %vm1130, %v1129, %v1128
    %v1133 = vadd.f32 %v1121, %v1131
    %v1134 = vld [vmem:[%s305] ss:$8 sm:$0x3]
    %s1135 = sld [smem:[#allocation3 + $0x16]]
    %v1136 = vstv %s1135
    %v1137 = vmul.f32 %v1136, %v1134
    %1139 = vrot.lane.b32.xlu0 %v1137, 80
    %v1140 = vpop.permute.xlu0 %1139
    %v1141 = vrot.slane %v1140, 7
    %v1142 = vsel %vm1130, %v1141, %v1140
    %v1144 = vadd.f32 %v1133, %v1142
    %v1145 = vld [vmem:[%s406] ss:$8 sm:$0x3]
    %s1146 = sld [smem:[#allocation3 + $0x17]]
    %v1147 = vstv %s1146
    %v1148 = vmul.f32 %v1147, %v1145
    %1150 = vrot.lane.b32.xlu0 %v1148, 80
    %v1151 = vpop.permute.xlu0 %1150
    %v1152 = vrot.slane %v1151, 7
    %v1153 = vsel %vm1130, %v1152, %v1151
    %v1155 = vadd.f32 %v1144, %v1153
    %v1156 = vld [vmem:[%s127] ss:$8 sm:$0x3]
    %s1157 = sld [smem:[#allocation3 + $0x18]]
    %v1158 = vstv %s1157
    %v1159 = vmul.f32 %v1158, %v1156
    %1161 = vrot.lane.b32.xlu0 %v1159, 80
    %v1162 = vpop.permute.xlu0 %1161
    %v1163 = vrot.slane %v1162, 7
    %v1164 = vsel %vm1130, %v1163, %v1162
    %v1166 = vadd.f32 %v1155, %v1164
    %v1167 = vld [vmem:[%s507] ss:$8 sm:$0x3]
    %s1168 = sld [smem:[#allocation3 + $0x19]]
    %v1169 = vstv %s1168
    %v1170 = vmul.f32 %v1169, %v1167
    %1172 = vrot.lane.b32.xlu0 %v1170, 80
    %v1173 = vpop.permute.xlu0 %1172
    %v1174 = vrot.slane %v1173, 7
    %v1175 = vsel %vm1130, %v1174, %v1173
    %v1177 = vadd.f32 %v1166, %v1175
    %v1178 = vld [vmem:[%s608] ss:$8 sm:$0x3]
    %s1179 = sld [smem:[#allocation3 + $0x1a]]
    %v1180 = vstv %s1179
    %v1181 = vmul.f32 %v1180, %v1178
    %1183 = vrot.lane.b32.xlu0 %v1181, 80
    %v1184 = vpop.permute.xlu0 %1183
    %v1185 = vrot.slane %v1184, 7
    %v1186 = vsel %vm1130, %v1185, %v1184
    %v1188 = vadd.f32 %v1177, %v1186
    %v1189 = vld [vmem:[%s709] ss:$8 sm:$0x3]
    %s1190 = sld [smem:[#allocation3 + $0x1b]]
    %v1191 = vstv %s1190
    %v1192 = vmul.f32 %v1191, %v1189
    %1194 = vrot.lane.b32.xlu0 %v1192, 80
    %v1195 = vpop.permute.xlu0 %1194
    %v1196 = vrot.slane %v1195, 7
    %v1197 = vsel %vm1130, %v1196, %v1195
    %v1199 = vadd.f32 %v1188, %v1197
    %v1200 = vld [vmem:[%s251] ss:$8 sm:$0x3]
    %s1201 = sld [smem:[#allocation3 + $0x46]]
    %v1202 = vstv %s1201
    %v1203 = vmul.f32 %v1202, %v1200
    %1205 = vrot.lane.b32.xlu0 %v1203, 80
    %v1206 = vpop.permute.xlu0 %1205
    %v1207 = vrot.slane %v1206, 7
    %v1208 = vsel %vm1130, %v1207, %v1206
    %v1210 = vadd.f32 %v1199, %v1208
    %v1211 = vld [vmem:[%s352] ss:$8 sm:$0x3]
    %s1212 = sld [smem:[#allocation3 + $0x47]]
    %v1213 = vstv %s1212
    %v1214 = vmul.f32 %v1213, %v1211
    %1216 = vrot.lane.b32.xlu0 %v1214, 80
    %v1217 = vpop.permute.xlu0 %1216
    %v1218 = vrot.slane %v1217, 7
    %v1219 = vsel %vm1130, %v1218, %v1217
    %v1221 = vadd.f32 %v1210, %v1219
    %v1222 = vld [vmem:[%s453] ss:$8 sm:$0x3]
    %s1223 = sld [smem:[#allocation3 + $0x48]]
    %v1224 = vstv %s1223
    %v1225 = vmul.f32 %v1224, %v1222
    %1227 = vrot.lane.b32.xlu0 %v1225, 80
    %v1228 = vpop.permute.xlu0 %1227
    %v1229 = vrot.slane %v1228, 7
    %v1230 = vsel %vm1130, %v1229, %v1228
    %v1232 = vadd.f32 %v1221, %v1230
    %v1233 = vld [vmem:[%s148] ss:$8 sm:$0x3]
    %s1234 = sld [smem:[#allocation3 + $0x49]]
    %v1235 = vstv %s1234
    %v1236 = vmul.f32 %v1235, %v1233
    %1238 = vrot.lane.b32.xlu0 %v1236, 80
    %v1239 = vpop.permute.xlu0 %1238
    %v1240 = vrot.slane %v1239, 7
    %v1241 = vsel %vm1130, %v1240, %v1239
    %v1243 = vadd.f32 %v1232, %v1241
    %v1244 = vld [vmem:[%s554] ss:$8 sm:$0x3]
    %s1245 = sld [smem:[#allocation3 + $0x4a]]
    %v1246 = vstv %s1245
    %v1247 = vmul.f32 %v1246, %v1244
    %1249 = vrot.lane.b32.xlu0 %v1247, 80
    %v1250 = vpop.permute.xlu0 %1249
    %v1251 = vrot.slane %v1250, 7
    %v1252 = vsel %vm1130, %v1251, %v1250
    %v1254 = vadd.f32 %v1243, %v1252
    %v1255 = vld [vmem:[%s655] ss:$8 sm:$0x3]
    %s1256 = sld [smem:[#allocation3 + $0x4b]]
    %v1257 = vstv %s1256
    %v1258 = vmul.f32 %v1257, %v1255
    %1260 = vrot.lane.b32.xlu0 %v1258, 80
    %v1261 = vpop.permute.xlu0 %1260
    %v1262 = vrot.slane %v1261, 7
    %v1263 = vsel %vm1130, %v1262, %v1261
    %v1265 = vadd.f32 %v1254, %v1263
    %v1266 = vld [vmem:[%s756] ss:$8 sm:$0x3]
    %s1267 = sld [smem:[#allocation3 + $0x4c]]
    %v1268 = vstv %s1267
    %v1269 = vmul.f32 %v1268, %v1266
    %1271 = vrot.lane.b32.xlu0 %v1269, 80
    %v1272 = vpop.permute.xlu0 %1271
    %v1273 = vrot.slane %v1272, 7
    %v1274 = vsel %vm1130, %v1273, %v1272
    %v1276 = vadd.f32 %v1265, %v1274
    %v1277 = vld [vmem:[%s203] ss:$8 sm:$0x7]
    %s1278 = sld [smem:[#allocation3 + $0x1c]]
    %v1279 = vstv %s1278
    %v1280 = vmul.f32 %v1279, %v1277
    %1282 = vrot.lane.b32.xlu0 %v1280, 64
    %v1283 = vpop.permute.xlu0 %1282
    %v1284 = vrot.slane %v1283, 7
    %vm1285 = vcmask 523264
    %v1286 = vsel %vm1285, %v1284, %v1283
    %v1288 = vadd.f32 %v1276, %v1286
    %v1289 = vld [vmem:[%s305] ss:$8 sm:$0x7]
    %s1290 = sld [smem:[#allocation3 + $0x1d]]
    %v1291 = vstv %s1290
    %v1292 = vmul.f32 %v1291, %v1289
    %1294 = vrot.lane.b32.xlu0 %v1292, 64
    %v1295 = vpop.permute.xlu0 %1294
    %v1296 = vrot.slane %v1295, 7
    %v1297 = vsel %vm1285, %v1296, %v1295
    %v1299 = vadd.f32 %v1288, %v1297
    %v1300 = vld [vmem:[%s406] ss:$8 sm:$0x7]
    %s1301 = sld [smem:[#allocation3 + $0x1e]]
    %v1302 = vstv %s1301
    %v1303 = vmul.f32 %v1302, %v1300
    %1305 = vrot.lane.b32.xlu0 %v1303, 64
    %v1306 = vpop.permute.xlu0 %1305
    %v1307 = vrot.slane %v1306, 7
    %v1308 = vsel %vm1285, %v1307, %v1306
    %v1310 = vadd.f32 %v1299, %v1308
    %v1311 = vld [vmem:[%s127] ss:$8 sm:$0x7]
    %s1312 = sld [smem:[#allocation3 + $0x1f]]
    %v1313 = vstv %s1312
    %v1314 = vmul.f32 %v1313, %v1311
    %1316 = vrot.lane.b32.xlu0 %v1314, 64
    %v1317 = vpop.permute.xlu0 %1316
    %v1318 = vrot.slane %v1317, 7
    %v1319 = vsel %vm1285, %v1318, %v1317
    %v1321 = vadd.f32 %v1310, %v1319
    %v1322 = vld [vmem:[%s507] ss:$8 sm:$0x7]
    %s1323 = sld [smem:[#allocation3 + $0x20]]
    %v1324 = vstv %s1323
    %v1325 = vmul.f32 %v1324, %v1322
    %1327 = vrot.lane.b32.xlu0 %v1325, 64
    %v1328 = vpop.permute.xlu0 %1327
    %v1329 = vrot.slane %v1328, 7
    %v1330 = vsel %vm1285, %v1329, %v1328
    %v1332 = vadd.f32 %v1321, %v1330
    %v1333 = vld [vmem:[%s608] ss:$8 sm:$0x7]
    %s1334 = sld [smem:[#allocation3 + $0x21]]
    %v1335 = vstv %s1334
    %v1336 = vmul.f32 %v1335, %v1333
    %1338 = vrot.lane.b32.xlu0 %v1336, 64
    %v1339 = vpop.permute.xlu0 %1338
    %v1340 = vrot.slane %v1339, 7
    %v1341 = vsel %vm1285, %v1340, %v1339
    %v1343 = vadd.f32 %v1332, %v1341
    %v1344 = vld [vmem:[%s709] ss:$8 sm:$0x7]
    %s1345 = sld [smem:[#allocation3 + $0x22]]
    %v1346 = vstv %s1345
    %v1347 = vmul.f32 %v1346, %v1344
    %1349 = vrot.lane.b32.xlu0 %v1347, 64
    %v1350 = vpop.permute.xlu0 %1349
    %v1351 = vrot.slane %v1350, 7
    %v1352 = vsel %vm1285, %v1351, %v1350
    %v1354 = vadd.f32 %v1343, %v1352
    %v1355 = vld [vmem:[%s251] ss:$8 sm:$0x7]
    %s1356 = sld [smem:[#allocation3 + $0x4d]]
    %v1357 = vstv %s1356
    %v1358 = vmul.f32 %v1357, %v1355
    %1360 = vrot.lane.b32.xlu0 %v1358, 64
    %v1361 = vpop.permute.xlu0 %1360
    %v1362 = vrot.slane %v1361, 7
    %v1363 = vsel %vm1285, %v1362, %v1361
    %v1365 = vadd.f32 %v1354, %v1363
    %v1366 = vld [vmem:[%s352] ss:$8 sm:$0x7]
    %s1367 = sld [smem:[#allocation3 + $0x4e]]
    %v1368 = vstv %s1367
    %v1369 = vmul.f32 %v1368, %v1366
    %1371 = vrot.lane.b32.xlu0 %v1369, 64
    %v1372 = vpop.permute.xlu0 %1371
    %v1373 = vrot.slane %v1372, 7
    %v1374 = vsel %vm1285, %v1373, %v1372
    %v1376 = vadd.f32 %v1365, %v1374
    %v1377 = vld [vmem:[%s453] ss:$8 sm:$0x7]
    %s1378 = sld [smem:[#allocation3 + $0x4f]]
    %v1379 = vstv %s1378
    %v1380 = vmul.f32 %v1379, %v1377
    %1382 = vrot.lane.b32.xlu0 %v1380, 64
    %v1383 = vpop.permute.xlu0 %1382
    %v1384 = vrot.slane %v1383, 7
    %v1385 = vsel %vm1285, %v1384, %v1383
    %v1387 = vadd.f32 %v1376, %v1385
    %v1388 = vld [vmem:[%s148] ss:$8 sm:$0x7]
    %s1389 = sld [smem:[#allocation3 + $0x50]]
    %v1390 = vstv %s1389
    %v1391 = vmul.f32 %v1390, %v1388
    %1393 = vrot.lane.b32.xlu0 %v1391, 64
    %v1394 = vpop.permute.xlu0 %1393
    %v1395 = vrot.slane %v1394, 7
    %v1396 = vsel %vm1285, %v1395, %v1394
    %v1398 = vadd.f32 %v1387, %v1396
    %v1399 = vld [vmem:[%s554] ss:$8 sm:$0x7]
    %s1400 = sld [smem:[#allocation3 + $0x51]]
    %v1401 = vstv %s1400
    %v1402 = vmul.f32 %v1401, %v1399
    %1404 = vrot.lane.b32.xlu0 %v1402, 64
    %v1405 = vpop.permute.xlu0 %1404
    %v1406 = vrot.slane %v1405, 7
    %v1407 = vsel %vm1285, %v1406, %v1405
    %v1409 = vadd.f32 %v1398, %v1407
    %v1410 = vld [vmem:[%s655] ss:$8 sm:$0x7]
    %s1411 = sld [smem:[#allocation3 + $0x52]]
    %v1412 = vstv %s1411
    %v1413 = vmul.f32 %v1412, %v1410
    %1415 = vrot.lane.b32.xlu0 %v1413, 64
    %v1416 = vpop.permute.xlu0 %1415
    %v1417 = vrot.slane %v1416, 7
    %v1418 = vsel %vm1285, %v1417, %v1416
    %v1420 = vadd.f32 %v1409, %v1418
    %v1421 = vld [vmem:[%s756] ss:$8 sm:$0x7]
    %s1422 = sld [smem:[#allocation3 + $0x53]]
    %v1423 = vstv %s1422
    %v1424 = vmul.f32 %v1423, %v1421
    %1426 = vrot.lane.b32.xlu0 %v1424, 64
    %v1427 = vpop.permute.xlu0 %1426
    %v1428 = vrot.slane %v1427, 7
    %v1429 = vsel %vm1285, %v1428, %v1427
    %v1431 = vadd.f32 %v1420, %v1429
    %s1432 = sld [smem:[#allocation3 + $0x23]]
    %v1433 = vstv %s1432
    %v1434 = vmul.f32 %v1433, %v1277
    %1436 = vrot.lane.b32.xlu0 %v1434, 48
    %v1437 = vpop.permute.xlu0 %1436
    %v1438 = vrot.slane %v1437, 7
    %vm1439 = vcmask 392192
    %v1440 = vsel %vm1439, %v1438, %v1437
    %v1442 = vadd.f32 %v1431, %v1440
    %s1443 = sld [smem:[#allocation3 + $0x24]]
    %v1444 = vstv %s1443
    %v1445 = vmul.f32 %v1444, %v1289
    %1447 = vrot.lane.b32.xlu0 %v1445, 48
    %v1448 = vpop.permute.xlu0 %1447
    %v1449 = vrot.slane %v1448, 7
    %v1450 = vsel %vm1439, %v1449, %v1448
    %v1452 = vadd.f32 %v1442, %v1450
    %s1453 = sld [smem:[#allocation3 + $0x25]]
    %v1454 = vstv %s1453
    %v1455 = vmul.f32 %v1454, %v1300
    %1457 = vrot.lane.b32.xlu0 %v1455, 48
    %v1458 = vpop.permute.xlu0 %1457
    %v1459 = vrot.slane %v1458, 7
    %v1460 = vsel %vm1439, %v1459, %v1458
    %v1462 = vadd.f32 %v1452, %v1460
    %s1463 = sld [smem:[#allocation3 + $0x26]]
    %v1464 = vstv %s1463
    %v1465 = vmul.f32 %v1464, %v1311
    %1467 = vrot.lane.b32.xlu0 %v1465, 48
    %v1468 = vpop.permute.xlu0 %1467
    %v1469 = vrot.slane %v1468, 7
    %v1470 = vsel %vm1439, %v1469, %v1468
    %v1472 = vadd.f32 %v1462, %v1470
    %s1473 = sld [smem:[#allocation3 + $0x27]]
    %v1474 = vstv %s1473
    %v1475 = vmul.f32 %v1474, %v1322
    %1477 = vrot.lane.b32.xlu0 %v1475, 48
    %v1478 = vpop.permute.xlu0 %1477
    %v1479 = vrot.slane %v1478, 7
    %v1480 = vsel %vm1439, %v1479, %v1478
    %v1482 = vadd.f32 %v1472, %v1480
    %s1483 = sld [smem:[#allocation3 + $0x28]]
    %v1484 = vstv %s1483
    %v1485 = vmul.f32 %v1484, %v1333
    %1487 = vrot.lane.b32.xlu0 %v1485, 48
    %v1488 = vpop.permute.xlu0 %1487
    %v1489 = vrot.slane %v1488, 7
    %v1490 = vsel %vm1439, %v1489, %v1488
    %v1492 = vadd.f32 %v1482, %v1490
    %s1493 = sld [smem:[#allocation3 + $0x29]]
    %v1494 = vstv %s1493
    %v1495 = vmul.f32 %v1494, %v1344
    %1497 = vrot.lane.b32.xlu0 %v1495, 48
    %v1498 = vpop.permute.xlu0 %1497
    %v1499 = vrot.slane %v1498, 7
    %v1500 = vsel %vm1439, %v1499, %v1498
    %v1502 = vadd.f32 %v1492, %v1500
    %s1503 = sld [smem:[#allocation3 + $0x54]]
    %v1504 = vstv %s1503
    %v1505 = vmul.f32 %v1504, %v1355
    %1507 = vrot.lane.b32.xlu0 %v1505, 48
    %v1508 = vpop.permute.xlu0 %1507
    %v1509 = vrot.slane %v1508, 7
    %v1510 = vsel %vm1439, %v1509, %v1508
    %v1512 = vadd.f32 %v1502, %v1510
    %s1513 = sld [smem:[#allocation3 + $0x55]]
    %v1514 = vstv %s1513
    %v1515 = vmul.f32 %v1514, %v1366
    %1517 = vrot.lane.b32.xlu0 %v1515, 48
    %v1518 = vpop.permute.xlu0 %1517
    %v1519 = vrot.slane %v1518, 7
    %v1520 = vsel %vm1439, %v1519, %v1518
    %v1522 = vadd.f32 %v1512, %v1520
    %s1523 = sld [smem:[#allocation3 + $0x56]]
    %v1524 = vstv %s1523
    %v1525 = vmul.f32 %v1524, %v1377
    %1527 = vrot.lane.b32.xlu0 %v1525, 48
    %v1528 = vpop.permute.xlu0 %1527
    %v1529 = vrot.slane %v1528, 7
    %v1530 = vsel %vm1439, %v1529, %v1528
    %v1532 = vadd.f32 %v1522, %v1530
    %s1533 = sld [smem:[#allocation3 + $0x57]]
    %v1534 = vstv %s1533
    %v1535 = vmul.f32 %v1534, %v1388
    %1537 = vrot.lane.b32.xlu0 %v1535, 48
    %v1538 = vpop.permute.xlu0 %1537
    %v1539 = vrot.slane %v1538, 7
    %v1540 = vsel %vm1439, %v1539, %v1538
    %v1542 = vadd.f32 %v1532, %v1540
    %s1543 = sld [smem:[#allocation3 + $0x58]]
    %v1544 = vstv %s1543
    %v1545 = vmul.f32 %v1544, %v1399
    %1547 = vrot.lane.b32.xlu0 %v1545, 48
    %v1548 = vpop.permute.xlu0 %1547
    %v1549 = vrot.slane %v1548, 7
    %v1550 = vsel %vm1439, %v1549, %v1548
    %v1552 = vadd.f32 %v1542, %v1550
    %s1553 = sld [smem:[#allocation3 + $0x59]]
    %v1554 = vstv %s1553
    %v1555 = vmul.f32 %v1554, %v1410
    %1557 = vrot.lane.b32.xlu0 %v1555, 48
    %v1558 = vpop.permute.xlu0 %1557
    %v1559 = vrot.slane %v1558, 7
    %v1560 = vsel %vm1439, %v1559, %v1558
    %v1562 = vadd.f32 %v1552, %v1560
    %s1563 = sld [smem:[#allocation3 + $0x5a]]
    %v1564 = vstv %s1563
    %v1565 = vmul.f32 %v1564, %v1421
    %1567 = vrot.lane.b32.xlu0 %v1565, 48
    %v1568 = vpop.permute.xlu0 %1567
    %v1569 = vrot.slane %v1568, 7
    %v1570 = vsel %vm1439, %v1569, %v1568
    %v1572 = vadd.f32 %v1562, %v1570
    %s1573 = sld [smem:[#allocation3 + $0x2a]]
    %v1574 = vstv %s1573
    %v1575 = vmul.f32 %v1574, %v1277
    %1577 = vrot.lane.b32.xlu0 %v1575, 32
    %v1578 = vpop.permute.xlu0 %1577
    %v1579 = vrot.slane %v1578, 7
    %vm1580 = vcmask 261120
    %v1581 = vsel %vm1580, %v1579, %v1578
    %v1583 = vadd.f32 %v1572, %v1581
    %s1584 = sld [smem:[#allocation3 + $0x2b]]
    %v1585 = vstv %s1584
    %v1586 = vmul.f32 %v1585, %v1289
    %1588 = vrot.lane.b32.xlu0 %v1586, 32
    %v1589 = vpop.permute.xlu0 %1588
    %v1590 = vrot.slane %v1589, 7
    %v1591 = vsel %vm1580, %v1590, %v1589
    %v1593 = vadd.f32 %v1583, %v1591
    %s1594 = sld [smem:[#allocation3 + $0x2c]]
    %v1595 = vstv %s1594
    %v1596 = vmul.f32 %v1595, %v1300
    %1598 = vrot.lane.b32.xlu0 %v1596, 32
    %v1599 = vpop.permute.xlu0 %1598
    %v1600 = vrot.slane %v1599, 7
    %v1601 = vsel %vm1580, %v1600, %v1599
    %v1603 = vadd.f32 %v1593, %v1601
    %s1604 = sld [smem:[#allocation3 + $0x2d]]
    %v1605 = vstv %s1604
    %v1606 = vmul.f32 %v1605, %v1311
    %1608 = vrot.lane.b32.xlu0 %v1606, 32
    %v1609 = vpop.permute.xlu0 %1608
    %v1610 = vrot.slane %v1609, 7
    %v1611 = vsel %vm1580, %v1610, %v1609
    %v1613 = vadd.f32 %v1603, %v1611
    %s1614 = sld [smem:[#allocation3 + $0x2e]]
    %v1615 = vstv %s1614
    %v1616 = vmul.f32 %v1615, %v1322
    %1618 = vrot.lane.b32.xlu0 %v1616, 32
    %v1619 = vpop.permute.xlu0 %1618
    %v1620 = vrot.slane %v1619, 7
    %v1621 = vsel %vm1580, %v1620, %v1619
    %v1623 = vadd.f32 %v1613, %v1621
    %s1624 = sld [smem:[#allocation3 + $0x2f]]
    %v1625 = vstv %s1624
    %v1626 = vmul.f32 %v1625, %v1333
    %1628 = vrot.lane.b32.xlu0 %v1626, 32
    %v1629 = vpop.permute.xlu0 %1628
    %v1630 = vrot.slane %v1629, 7
    %v1631 = vsel %vm1580, %v1630, %v1629
    %v1633 = vadd.f32 %v1623, %v1631
    %s1634 = sld [smem:[#allocation3 + $0x30]]
    %v1635 = vstv %s1634
    %v1636 = vmul.f32 %v1635, %v1344
    %1638 = vrot.lane.b32.xlu0 %v1636, 32
    %v1639 = vpop.permute.xlu0 %1638
    %v1640 = vrot.slane %v1639, 7
    %v1641 = vsel %vm1580, %v1640, %v1639
    %v1643 = vadd.f32 %v1633, %v1641
    %s1644 = sld [smem:[#allocation3 + $0x5b]]
    %v1645 = vstv %s1644
    %v1646 = vmul.f32 %v1645, %v1355
    %1648 = vrot.lane.b32.xlu0 %v1646, 32
    %v1649 = vpop.permute.xlu0 %1648
    %v1650 = vrot.slane %v1649, 7
    %v1651 = vsel %vm1580, %v1650, %v1649
    %v1653 = vadd.f32 %v1643, %v1651
    %s1654 = sld [smem:[#allocation3 + $0x5c]]
    %v1655 = vstv %s1654
    %v1656 = vmul.f32 %v1655, %v1366
    %1658 = vrot.lane.b32.xlu0 %v1656, 32
    %v1659 = vpop.permute.xlu0 %1658
    %v1660 = vrot.slane %v1659, 7
    %v1661 = vsel %vm1580, %v1660, %v1659
    %v1663 = vadd.f32 %v1653, %v1661
    %s1664 = sld [smem:[#allocation3 + $0x5d]]
    %v1665 = vstv %s1664
    %v1666 = vmul.f32 %v1665, %v1377
    %1668 = vrot.lane.b32.xlu0 %v1666, 32
    %v1669 = vpop.permute.xlu0 %1668
    %v1670 = vrot.slane %v1669, 7
    %v1671 = vsel %vm1580, %v1670, %v1669
    %v1673 = vadd.f32 %v1663, %v1671
    %s1674 = sld [smem:[#allocation3 + $0x5e]]
    %v1675 = vstv %s1674
    %v1676 = vmul.f32 %v1675, %v1388
    %1678 = vrot.lane.b32.xlu0 %v1676, 32
    %v1679 = vpop.permute.xlu0 %1678
    %v1680 = vrot.slane %v1679, 7
    %v1681 = vsel %vm1580, %v1680, %v1679
    %v1683 = vadd.f32 %v1673, %v1681
    %s1684 = sld [smem:[#allocation3 + $0x5f]]
    %v1685 = vstv %s1684
    %v1686 = vmul.f32 %v1685, %v1399
    %1688 = vrot.lane.b32.xlu0 %v1686, 32
    %v1689 = vpop.permute.xlu0 %1688
    %v1690 = vrot.slane %v1689, 7
    %v1691 = vsel %vm1580, %v1690, %v1689
    %v1693 = vadd.f32 %v1683, %v1691
    %s1694 = sld [smem:[#allocation3 + $0x60]]
    %v1695 = vstv %s1694
    %v1696 = vmul.f32 %v1695, %v1410
    %1698 = vrot.lane.b32.xlu0 %v1696, 32
    %v1699 = vpop.permute.xlu0 %1698
    %v1700 = vrot.slane %v1699, 7
    %v1701 = vsel %vm1580, %v1700, %v1699
    %v1703 = vadd.f32 %v1693, %v1701
    %s1704 = sld [smem:[#allocation3 + $0x61]]
    %v1705 = vstv %s1704
    %v1706 = vmul.f32 %v1705, %v1421
    %1708 = vrot.lane.b32.xlu0 %v1706, 32
    %v1709 = vpop.permute.xlu0 %1708
    %v1710 = vrot.slane %v1709, 7
    %v1711 = vsel %vm1580, %v1710, %v1709
    %v1713 = vadd.f32 %v1703, %v1711
    %v1714 = vxor.u32 %v1713, 2147483648
    %v1715 = vmul.f32 %v1714, 1.442695
    %v1716 = vpow.pop %v1715
    %v1717 = vadd.f32 %v1716, 1.0
    %v1718 = vrcp.pop %v1717
    %v1719 = vmul.f32 1.0, %v1718
    %v1721 = vlaneseq
    %v1722 = vshrl.u32 %v1721, 7
    %v1723 = vsub.s32 0, %v1722
    %v1724 = vrot.slane %v1719, %v1723
    %v1725 = vlaneseq
    %v1726 = vshrl.u32 %v1725, 7
    %v1727 = vsub.s32 1, %v1726
    %v1728 = vrot.slane %v1719, %v1727
    %v1729 = vlaneseq
    %v1730 = vshrl.u32 %v1729, 7
    %v1731 = vsub.s32 2, %v1730
    %v1732 = vrot.slane %v1719, %v1731
    %v1733 = vld [vmem:[#allocation7] sm:$0xff]
    %v1734 = vcombine.low %v1724, %v1728
    %1735 = vrot.lane.b32.xlu0 %v1734, 48
    %v1736 = vpop.permute.xlu0 %1735
    %1737 = vrot.lane.b32.xlu0 %v1732, 48
    %v1738 = vpop.permute.xlu0 %1737
    %v1739 = vrot.slane %v1736, 4
    %v1740 = vrot.slane %v1738, 4
    %v1741 = vsel %vm72, %v1739, %v1740
    %v1742 = vsel %vm1439, %v1736, %v1741
    %v1744 = vmul.f32 %v1733, %v1742
    %1745 = vst [vmem:[#allocation8] sm:$0xff] %v1744
    %s1746 = scalar_lea.vmem [#allocation7], 8
    %v1747 = vld [vmem:[%s1746] sm:$0xff]
    %v1749 = vcombine.high %v1747, %v1747
    %v1751 = vsel %vm72, %v1747, 0.0
    %v1752 = vrot.slane %v1751, 4
    %v1753 = vadd.f32 %v1751, %v1752
    %v1754 = vrot.slane %v1753, 2
    %v1755 = vadd.f32 %v1753, %v1754
    %v1756 = vrot.slane %v1755, 1
    %v1757 = vadd.f32 %v1755, %v1756
    %v1758 = vsel %vm72, %v1749, 0.0
    %v1759 = vrot.slane %v1758, 4
    %v1760 = vadd.f32 %v1758, %v1759
    %v1761 = vrot.slane %v1760, 2
    %v1762 = vadd.f32 %v1760, %v1761
    %v1763 = vrot.slane %v1762, 1
    %v1764 = vadd.f32 %v1762, %v1763
    %v1765 = vadd.f32 %v1757, 0.0
    %v1766 = vadd.f32 %v1764, 0.0
    %v1767 = vsel %vm72, %v1747, -inf
    %v1768 = vrot.slane %v1767, 4
    %v1769 = vmax.f32 %v1767, %v1768
    %v1770 = vrot.slane %v1769, 2
    %v1771 = vmax.f32 %v1769, %v1770
    %v1772 = vrot.slane %v1771, 1
    %v1773 = vmax.f32 %v1771, %v1772
    %v1774 = vsel %vm72, %v1749, -inf
    %v1775 = vrot.slane %v1774, 4
    %v1776 = vmax.f32 %v1774, %v1775
    %v1777 = vrot.slane %v1776, 2
    %v1778 = vmax.f32 %v1776, %v1777
    %v1779 = vrot.slane %v1778, 1
    %v1780 = vmax.f32 %v1778, %v1779
    %v1781 = vmul.f32 %v1765, 0.25
    %v1782 = vmul.f32 %v1766, 0.25
    %v1785 = vcombine.low %v1781, %v1782
    %v1787 = vunpack.c.l.s4 1966171168
    %v1788 = vunpack.c.0.s8 %v1787
    %v1789 = vlaneseq
    %v1790 = vshrl.u32 %v1789, 7
    %v1791 = vsub.s32 %v1788, %v1790
    %v1792 = vrot.slane %v1785, %v1791
    %v1794 = vunpack.c.l.s4 1966171168
    %v1795 = vunpack.c.0.s8 %v1794
    %v1796 = vlaneseq
    %v1797 = vshrl.u32 %v1796, 7
    %v1798 = vsub.s32 %v1795, %v1797
    %v1799 = vrot.slane %v1792, %v1798
    %1801 = vst.msk [vmem:[%s127] ss:$8 sm:$0x3] %vm126, %v1799
    %1802 = vst.msk [vmem:[%s127] ss:$8 sm:$0x0] %vm126, %v1799
    %v1805 = vcombine.low %v1773, %v1780
    %v1807 = vunpack.c.l.s4 1966171168
    %v1808 = vunpack.c.0.s8 %v1807
    %v1809 = vlaneseq
    %v1810 = vshrl.u32 %v1809, 7
    %v1811 = vsub.s32 %v1808, %v1810
    %v1812 = vrot.slane %v1805, %v1811
    %v1814 = vunpack.c.l.s4 1966171168
    %v1815 = vunpack.c.0.s8 %v1814
    %v1816 = vlaneseq
    %v1817 = vshrl.u32 %v1816, 7
    %v1818 = vsub.s32 %v1815, %v1817
    %v1819 = vrot.slane %v1812, %v1818
    %1821 = vst.msk [vmem:[%s148] ss:$8 sm:$0x3] %vm126, %v1819
    %1822 = vst.msk [vmem:[%s148] ss:$8 sm:$0x0] %vm126, %v1819
    %v1823 = vld [vmem:[%s157] ss:$8 sm:$0x7]
    %v1825 = vlaneseq
    %v1826 = vshrl.u32 %v1825, 7
    %v1827 = vsub.s32 0, %v1826
    %v1828 = vrot.slane %v1823, %v1827
    %v1829 = vlaneseq
    %v1830 = vshrl.u32 %v1829, 7
    %v1831 = vsub.s32 1, %v1830
    %v1832 = vrot.slane %v1823, %v1831
    %v1833 = vlaneseq
    %v1834 = vshrl.u32 %v1833, 7
    %v1835 = vsub.s32 2, %v1834
    %v1836 = vrot.slane %v1823, %v1835
    %1837 = vrot.lane.b32.xlu0 %v1828, 3
    %v1838 = vpop.permute.xlu0 %1837
    %1839 = vrot.lane.b32.xlu0 %v1832, 3
    %v1840 = vpop.permute.xlu0 %1839
    %1841 = vrot.lane.b32.xlu0 %v1836, 3
    %v1842 = vpop.permute.xlu0 %1841
    %v1843 = vsel %vm178, %v1838, %v1840
    %v1844 = vsel %vm178, %v1840, %v1842
    %v1847 = vsel %vm155, %v1843, 0.0
    %v1848 = vsel %vm156, %v1844, 0.0
    %v1851 = vcombine.low %v1847, %v1848
    %v1853 = vunpack.c.l.s4 1966171168
    %v1854 = vunpack.c.0.s8 %v1853
    %v1855 = vlaneseq
    %v1856 = vshrl.u32 %v1855, 7
    %v1857 = vsub.s32 %v1854, %v1856
    %v1858 = vrot.slane %v1851, %v1857
    %v1860 = vunpack.c.l.s4 1966171168
    %v1861 = vunpack.c.0.s8 %v1860
    %v1862 = vlaneseq
    %v1863 = vshrl.u32 %v1862, 7
    %v1864 = vsub.s32 %v1861, %v1863
    %v1865 = vrot.slane %v1858, %v1864
    %1867 = vst.msk [vmem:[%s203] ss:$8 sm:$0x3] %vm126, %v1865
    %1868 = vst.msk [vmem:[%s203] ss:$8 sm:$0x0] %vm126, %v1865
    %v1869 = vld [vmem:[%s206] ss:$8 sm:$0x7]
    %v1871 = vlaneseq
    %v1872 = vshrl.u32 %v1871, 7
    %v1873 = vsub.s32 0, %v1872
    %v1874 = vrot.slane %v1869, %v1873
    %v1875 = vlaneseq
    %v1876 = vshrl.u32 %v1875, 7
    %v1877 = vsub.s32 1, %v1876
    %v1878 = vrot.slane %v1869, %v1877
    %v1879 = vlaneseq
    %v1880 = vshrl.u32 %v1879, 7
    %v1881 = vsub.s32 2, %v1880
    %v1882 = vrot.slane %v1869, %v1881
    %1883 = vrot.lane.b32.xlu0 %v1874, 3
    %v1884 = vpop.permute.xlu0 %1883
    %1885 = vrot.lane.b32.xlu0 %v1878, 3
    %v1886 = vpop.permute.xlu0 %1885
    %1887 = vrot.lane.b32.xlu0 %v1882, 3
    %v1888 = vpop.permute.xlu0 %1887
    %v1889 = vsel %vm178, %v1884, %v1886
    %v1890 = vsel %vm178, %v1886, %v1888
    %v1893 = vsel %vm155, %v1889, 0.0
    %v1894 = vsel %vm156, %v1890, 0.0
    %v1897 = vcombine.low %v1893, %v1894
    %v1899 = vunpack.c.l.s4 1966171168
    %v1900 = vunpack.c.0.s8 %v1899
    %v1901 = vlaneseq
    %v1902 = vshrl.u32 %v1901, 7
    %v1903 = vsub.s32 %v1900, %v1902
    %v1904 = vrot.slane %v1897, %v1903
    %v1906 = vunpack.c.l.s4 1966171168
    %v1907 = vunpack.c.0.s8 %v1906
    %v1908 = vlaneseq
    %v1909 = vshrl.u32 %v1908, 7
    %v1910 = vsub.s32 %v1907, %v1909
    %v1911 = vrot.slane %v1904, %v1910
    %1913 = vst.msk [vmem:[%s251] ss:$8 sm:$0x3] %vm126, %v1911
    %1914 = vst.msk [vmem:[%s251] ss:$8 sm:$0x0] %vm126, %v1911
    %v1915 = vld [vmem:[%s157] ss:$8 sm:$0x7]
    %v1917 = vlaneseq
    %v1918 = vshrl.u32 %v1917, 7
    %v1919 = vsub.s32 0, %v1918
    %v1920 = vrot.slane %v1915, %v1919
    %v1921 = vlaneseq
    %v1922 = vshrl.u32 %v1921, 7
    %v1923 = vsub.s32 1, %v1922
    %v1924 = vrot.slane %v1915, %v1923
    %v1925 = vlaneseq
    %v1926 = vshrl.u32 %v1925, 7
    %v1927 = vsub.s32 2, %v1926
    %v1928 = vrot.slane %v1915, %v1927
    %1929 = vrot.lane.b32.xlu0 %v1920, 2
    %v1930 = vpop.permute.xlu0 %1929
    %1931 = vrot.lane.b32.xlu0 %v1924, 2
    %v1932 = vpop.permute.xlu0 %1931
    %1933 = vrot.lane.b32.xlu0 %v1928, 2
    %v1934 = vpop.permute.xlu0 %1933
    %v1935 = vsel %vm280, %v1930, %v1932
    %v1936 = vsel %vm280, %v1932, %v1934
    %v1939 = vsel %vm258, %v1935, 0.0
    %v1940 = vsel %vm259, %v1936, 0.0
    %v1943 = vcombine.low %v1939, %v1940
    %v1945 = vunpack.c.l.s4 1966171168
    %v1946 = vunpack.c.0.s8 %v1945
    %v1947 = vlaneseq
    %v1948 = vshrl.u32 %v1947, 7
    %v1949 = vsub.s32 %v1946, %v1948
    %v1950 = vrot.slane %v1943, %v1949
    %v1952 = vunpack.c.l.s4 1966171168
    %v1953 = vunpack.c.0.s8 %v1952
    %v1954 = vlaneseq
    %v1955 = vshrl.u32 %v1954, 7
    %v1956 = vsub.s32 %v1953, %v1955
    %v1957 = vrot.slane %v1950, %v1956
    %1959 = vst.msk [vmem:[%s305] ss:$8 sm:$0x3] %vm126, %v1957
    %1960 = vst.msk [vmem:[%s305] ss:$8 sm:$0x0] %vm126, %v1957
    %v1961 = vld [vmem:[%s206] ss:$8 sm:$0x7]
    %v1963 = vlaneseq
    %v1964 = vshrl.u32 %v1963, 7
    %v1965 = vsub.s32 0, %v1964
    %v1966 = vrot.slane %v1961, %v1965
    %v1967 = vlaneseq
    %v1968 = vshrl.u32 %v1967, 7
    %v1969 = vsub.s32 1, %v1968
    %v1970 = vrot.slane %v1961, %v1969
    %v1971 = vlaneseq
    %v1972 = vshrl.u32 %v1971, 7
    %v1973 = vsub.s32 2, %v1972
    %v1974 = vrot.slane %v1961, %v1973
    %1975 = vrot.lane.b32.xlu0 %v1966, 2
    %v1976 = vpop.permute.xlu0 %1975
    %1977 = vrot.lane.b32.xlu0 %v1970, 2
    %v1978 = vpop.permute.xlu0 %1977
    %1979 = vrot.lane.b32.xlu0 %v1974, 2
    %v1980 = vpop.permute.xlu0 %1979
    %v1981 = vsel %vm280, %v1976, %v1978
    %v1982 = vsel %vm280, %v1978, %v1980
    %v1985 = vsel %vm258, %v1981, 0.0
    %v1986 = vsel %vm259, %v1982, 0.0
    %v1989 = vcombine.low %v1985, %v1986
    %v1991 = vunpack.c.l.s4 1966171168
    %v1992 = vunpack.c.0.s8 %v1991
    %v1993 = vlaneseq
    %v1994 = vshrl.u32 %v1993, 7
    %v1995 = vsub.s32 %v1992, %v1994
    %v1996 = vrot.slane %v1989, %v1995
    %v1998 = vunpack.c.l.s4 1966171168
    %v1999 = vunpack.c.0.s8 %v1998
    %v2000 = vlaneseq
    %v2001 = vshrl.u32 %v2000, 7
    %v2002 = vsub.s32 %v1999, %v2001
    %v2003 = vrot.slane %v1996, %v2002
    %2005 = vst.msk [vmem:[%s352] ss:$8 sm:$0x3] %vm126, %v2003
    %2006 = vst.msk [vmem:[%s352] ss:$8 sm:$0x0] %vm126, %v2003
    %v2007 = vld [vmem:[%s157] ss:$8 sm:$0x7]
    %v2009 = vlaneseq
    %v2010 = vshrl.u32 %v2009, 7
    %v2011 = vsub.s32 0, %v2010
    %v2012 = vrot.slane %v2007, %v2011
    %v2013 = vlaneseq
    %v2014 = vshrl.u32 %v2013, 7
    %v2015 = vsub.s32 1, %v2014
    %v2016 = vrot.slane %v2007, %v2015
    %v2017 = vlaneseq
    %v2018 = vshrl.u32 %v2017, 7
    %v2019 = vsub.s32 2, %v2018
    %v2020 = vrot.slane %v2007, %v2019
    %2021 = vrot.lane.b32.xlu0 %v2012, 1
    %v2022 = vpop.permute.xlu0 %2021
    %2023 = vrot.lane.b32.xlu0 %v2016, 1
    %v2024 = vpop.permute.xlu0 %2023
    %2025 = vrot.lane.b32.xlu0 %v2020, 1
    %v2026 = vpop.permute.xlu0 %2025
    %v2027 = vsel %vm381, %v2022, %v2024
    %v2028 = vsel %vm381, %v2024, %v2026
    %v2031 = vsel %vm359, %v2027, 0.0
    %v2032 = vsel %vm360, %v2028, 0.0
    %v2035 = vcombine.low %v2031, %v2032
    %v2037 = vunpack.c.l.s4 1966171168
    %v2038 = vunpack.c.0.s8 %v2037
    %v2039 = vlaneseq
    %v2040 = vshrl.u32 %v2039, 7
    %v2041 = vsub.s32 %v2038, %v2040
    %v2042 = vrot.slane %v2035, %v2041
    %v2044 = vunpack.c.l.s4 1966171168
    %v2045 = vunpack.c.0.s8 %v2044
    %v2046 = vlaneseq
    %v2047 = vshrl.u32 %v2046, 7
    %v2048 = vsub.s32 %v2045, %v2047
    %v2049 = vrot.slane %v2042, %v2048
    %2051 = vst.msk [vmem:[%s406] ss:$8 sm:$0x3] %vm126, %v2049
    %2052 = vst.msk [vmem:[%s406] ss:$8 sm:$0x0] %vm126, %v2049
    %v2053 = vld [vmem:[%s206] ss:$8 sm:$0x7]
    %v2055 = vlaneseq
    %v2056 = vshrl.u32 %v2055, 7
    %v2057 = vsub.s32 0, %v2056
    %v2058 = vrot.slane %v2053, %v2057
    %v2059 = vlaneseq
    %v2060 = vshrl.u32 %v2059, 7
    %v2061 = vsub.s32 1, %v2060
    %v2062 = vrot.slane %v2053, %v2061
    %v2063 = vlaneseq
    %v2064 = vshrl.u32 %v2063, 7
    %v2065 = vsub.s32 2, %v2064
    %v2066 = vrot.slane %v2053, %v2065
    %2067 = vrot.lane.b32.xlu0 %v2058, 1
    %v2068 = vpop.permute.xlu0 %2067
    %2069 = vrot.lane.b32.xlu0 %v2062, 1
    %v2070 = vpop.permute.xlu0 %2069
    %2071 = vrot.lane.b32.xlu0 %v2066, 1
    %v2072 = vpop.permute.xlu0 %2071
    %v2073 = vsel %vm381, %v2068, %v2070
    %v2074 = vsel %vm381, %v2070, %v2072
    %v2077 = vsel %vm359, %v2073, 0.0
    %v2078 = vsel %vm360, %v2074, 0.0
    %v2081 = vcombine.low %v2077, %v2078
    %v2083 = vunpack.c.l.s4 1966171168
    %v2084 = vunpack.c.0.s8 %v2083
    %v2085 = vlaneseq
    %v2086 = vshrl.u32 %v2085, 7
    %v2087 = vsub.s32 %v2084, %v2086
    %v2088 = vrot.slane %v2081, %v2087
    %v2090 = vunpack.c.l.s4 1966171168
    %v2091 = vunpack.c.0.s8 %v2090
    %v2092 = vlaneseq
    %v2093 = vshrl.u32 %v2092, 7
    %v2094 = vsub.s32 %v2091, %v2093
    %v2095 = vrot.slane %v2088, %v2094
    %2097 = vst.msk [vmem:[%s453] ss:$8 sm:$0x3] %vm126, %v2095
    %2098 = vst.msk [vmem:[%s453] ss:$8 sm:$0x0] %vm126, %v2095
    %v2099 = vld [vmem:[%s127] ss:$8 sm:$0x7]
    %v2101 = vlaneseq
    %v2102 = vshrl.u32 %v2101, 7
    %v2103 = vsub.s32 0, %v2102
    %v2104 = vrot.slane %v2099, %v2103
    %v2105 = vlaneseq
    %v2106 = vshrl.u32 %v2105, 7
    %v2107 = vsub.s32 1, %v2106
    %v2108 = vrot.slane %v2099, %v2107
    %v2109 = vlaneseq
    %v2110 = vshrl.u32 %v2109, 7
    %v2111 = vsub.s32 2, %v2110
    %v2112 = vrot.slane %v2099, %v2111
    %2113 = vrot.lane.b32.xlu0 %v2104, 127
    %v2114 = vpop.permute.xlu0 %2113
    %2115 = vrot.lane.b32.xlu0 %v2108, 127
    %v2116 = vpop.permute.xlu0 %2115
    %2117 = vrot.lane.b32.xlu0 %v2112, 127
    %v2118 = vpop.permute.xlu0 %2117
    %v2119 = vsel %vm482, %v2114, %v2116
    %v2120 = vsel %vm482, %v2116, %v2118
    %v2123 = vsel %vm460, %v2119, 0.0
    %v2124 = vsel %vm461, %v2120, 0.0
    %v2127 = vcombine.low %v2123, %v2124
    %v2129 = vunpack.c.l.s4 1966171168
    %v2130 = vunpack.c.0.s8 %v2129
    %v2131 = vlaneseq
    %v2132 = vshrl.u32 %v2131, 7
    %v2133 = vsub.s32 %v2130, %v2132
    %v2134 = vrot.slane %v2127, %v2133
    %v2136 = vunpack.c.l.s4 1966171168
    %v2137 = vunpack.c.0.s8 %v2136
    %v2138 = vlaneseq
    %v2139 = vshrl.u32 %v2138, 7
    %v2140 = vsub.s32 %v2137, %v2139
    %v2141 = vrot.slane %v2134, %v2140
    %2143 = vst.msk [vmem:[%s507] ss:$8 sm:$0x3] %vm126, %v2141
    %2144 = vst.msk [vmem:[%s507] ss:$8 sm:$0x0] %vm126, %v2141
    %v2145 = vld [vmem:[%s148] ss:$8 sm:$0x7]
    %v2147 = vlaneseq
    %v2148 = vshrl.u32 %v2147, 7
    %v2149 = vsub.s32 0, %v2148
    %v2150 = vrot.slane %v2145, %v2149
    %v2151 = vlaneseq
    %v2152 = vshrl.u32 %v2151, 7
    %v2153 = vsub.s32 1, %v2152
    %v2154 = vrot.slane %v2145, %v2153
    %v2155 = vlaneseq
    %v2156 = vshrl.u32 %v2155, 7
    %v2157 = vsub.s32 2, %v2156
    %v2158 = vrot.slane %v2145, %v2157
    %2159 = vrot.lane.b32.xlu0 %v2150, 127
    %v2160 = vpop.permute.xlu0 %2159
    %2161 = vrot.lane.b32.xlu0 %v2154, 127
    %v2162 = vpop.permute.xlu0 %2161
    %2163 = vrot.lane.b32.xlu0 %v2158, 127
    %v2164 = vpop.permute.xlu0 %2163
    %v2165 = vsel %vm482, %v2160, %v2162
    %v2166 = vsel %vm482, %v2162, %v2164
    %v2169 = vsel %vm460, %v2165, 0.0
    %v2170 = vsel %vm461, %v2166, 0.0
    %v2173 = vcombine.low %v2169, %v2170
    %v2175 = vunpack.c.l.s4 1966171168
    %v2176 = vunpack.c.0.s8 %v2175
    %v2177 = vlaneseq
    %v2178 = vshrl.u32 %v2177, 7
    %v2179 = vsub.s32 %v2176, %v2178
    %v2180 = vrot.slane %v2173, %v2179
    %v2182 = vunpack.c.l.s4 1966171168
    %v2183 = vunpack.c.0.s8 %v2182
    %v2184 = vlaneseq
    %v2185 = vshrl.u32 %v2184, 7
    %v2186 = vsub.s32 %v2183, %v2185
    %v2187 = vrot.slane %v2180, %v2186
    %2189 = vst.msk [vmem:[%s554] ss:$8 sm:$0x3] %vm126, %v2187
    %2190 = vst.msk [vmem:[%s554] ss:$8 sm:$0x0] %vm126, %v2187
    %v2191 = vld [vmem:[%s127] ss:$8 sm:$0x7]
    %v2193 = vlaneseq
    %v2194 = vshrl.u32 %v2193, 7
    %v2195 = vsub.s32 0, %v2194
    %v2196 = vrot.slane %v2191, %v2195
    %v2197 = vlaneseq
    %v2198 = vshrl.u32 %v2197, 7
    %v2199 = vsub.s32 1, %v2198
    %v2200 = vrot.slane %v2191, %v2199
    %v2201 = vlaneseq
    %v2202 = vshrl.u32 %v2201, 7
    %v2203 = vsub.s32 2, %v2202
    %v2204 = vrot.slane %v2191, %v2203
    %2205 = vrot.lane.b32.xlu0 %v2196, 126
    %v2206 = vpop.permute.xlu0 %2205
    %2207 = vrot.lane.b32.xlu0 %v2200, 126
    %v2208 = vpop.permute.xlu0 %2207
    %2209 = vrot.lane.b32.xlu0 %v2204, 126
    %v2210 = vpop.permute.xlu0 %2209
    %v2211 = vsel %vm583, %v2206, %v2208
    %v2212 = vsel %vm583, %v2208, %v2210
    %v2215 = vsel %vm561, %v2211, 0.0
    %v2216 = vsel %vm562, %v2212, 0.0
    %v2219 = vcombine.low %v2215, %v2216
    %v2221 = vunpack.c.l.s4 1966171168
    %v2222 = vunpack.c.0.s8 %v2221
    %v2223 = vlaneseq
    %v2224 = vshrl.u32 %v2223, 7
    %v2225 = vsub.s32 %v2222, %v2224
    %v2226 = vrot.slane %v2219, %v2225
    %v2228 = vunpack.c.l.s4 1966171168
    %v2229 = vunpack.c.0.s8 %v2228
    %v2230 = vlaneseq
    %v2231 = vshrl.u32 %v2230, 7
    %v2232 = vsub.s32 %v2229, %v2231
    %v2233 = vrot.slane %v2226, %v2232
    %2235 = vst.msk [vmem:[%s608] ss:$8 sm:$0x3] %vm126, %v2233
    %2236 = vst.msk [vmem:[%s608] ss:$8 sm:$0x0] %vm126, %v2233
    %v2237 = vld [vmem:[%s148] ss:$8 sm:$0x7]
    %v2239 = vlaneseq
    %v2240 = vshrl.u32 %v2239, 7
    %v2241 = vsub.s32 0, %v2240
    %v2242 = vrot.slane %v2237, %v2241
    %v2243 = vlaneseq
    %v2244 = vshrl.u32 %v2243, 7
    %v2245 = vsub.s32 1, %v2244
    %v2246 = vrot.slane %v2237, %v2245
    %v2247 = vlaneseq
    %v2248 = vshrl.u32 %v2247, 7
    %v2249 = vsub.s32 2, %v2248
    %v2250 = vrot.slane %v2237, %v2249
    %2251 = vrot.lane.b32.xlu0 %v2242, 126
    %v2252 = vpop.permute.xlu0 %2251
    %2253 = vrot.lane.b32.xlu0 %v2246, 126
    %v2254 = vpop.permute.xlu0 %2253
    %2255 = vrot.lane.b32.xlu0 %v2250, 126
    %v2256 = vpop.permute.xlu0 %2255
    %v2257 = vsel %vm583, %v2252, %v2254
    %v2258 = vsel %vm583, %v2254, %v2256
    %v2261 = vsel %vm561, %v2257, 0.0
    %v2262 = vsel %vm562, %v2258, 0.0
    %v2265 = vcombine.low %v2261, %v2262
    %v2267 = vunpack.c.l.s4 1966171168
    %v2268 = vunpack.c.0.s8 %v2267
    %v2269 = vlaneseq
    %v2270 = vshrl.u32 %v2269, 7
    %v2271 = vsub.s32 %v2268, %v2270
    %v2272 = vrot.slane %v2265, %v2271
    %v2274 = vunpack.c.l.s4 1966171168
    %v2275 = vunpack.c.0.s8 %v2274
    %v2276 = vlaneseq
    %v2277 = vshrl.u32 %v2276, 7
    %v2278 = vsub.s32 %v2275, %v2277
    %v2279 = vrot.slane %v2272, %v2278
    %2281 = vst.msk [vmem:[%s655] ss:$8 sm:$0x3] %vm126, %v2279
    %2282 = vst.msk [vmem:[%s655] ss:$8 sm:$0x0] %vm126, %v2279
    %v2283 = vld [vmem:[%s127] ss:$8 sm:$0x7]
    %v2285 = vlaneseq
    %v2286 = vshrl.u32 %v2285, 7
    %v2287 = vsub.s32 0, %v2286
    %v2288 = vrot.slane %v2283, %v2287
    %v2289 = vlaneseq
    %v2290 = vshrl.u32 %v2289, 7
    %v2291 = vsub.s32 1, %v2290
    %v2292 = vrot.slane %v2283, %v2291
    %v2293 = vlaneseq
    %v2294 = vshrl.u32 %v2293, 7
    %v2295 = vsub.s32 2, %v2294
    %v2296 = vrot.slane %v2283, %v2295
    %2297 = vrot.lane.b32.xlu0 %v2288, 125
    %v2298 = vpop.permute.xlu0 %2297
    %2299 = vrot.lane.b32.xlu0 %v2292, 125
    %v2300 = vpop.permute.xlu0 %2299
    %2301 = vrot.lane.b32.xlu0 %v2296, 125
    %v2302 = vpop.permute.xlu0 %2301
    %v2303 = vsel %vm684, %v2298, %v2300
    %v2304 = vsel %vm684, %v2300, %v2302
    %v2307 = vsel %vm662, %v2303, 0.0
    %v2308 = vsel %vm663, %v2304, 0.0
    %v2311 = vcombine.low %v2307, %v2308
    %v2313 = vunpack.c.l.s4 1966171168
    %v2314 = vunpack.c.0.s8 %v2313
    %v2315 = vlaneseq
    %v2316 = vshrl.u32 %v2315, 7
    %v2317 = vsub.s32 %v2314, %v2316
    %v2318 = vrot.slane %v2311, %v2317
    %v2320 = vunpack.c.l.s4 1966171168
    %v2321 = vunpack.c.0.s8 %v2320
    %v2322 = vlaneseq
    %v2323 = vshrl.u32 %v2322, 7
    %v2324 = vsub.s32 %v2321, %v2323
    %v2325 = vrot.slane %v2318, %v2324
    %2327 = vst.msk [vmem:[%s709] ss:$8 sm:$0x3] %vm126, %v2325
    %2328 = vst.msk [vmem:[%s709] ss:$8 sm:$0x0] %vm126, %v2325
    %v2329 = vld [vmem:[%s148] ss:$8 sm:$0x7]
    %v2331 = vlaneseq
    %v2332 = vshrl.u32 %v2331, 7
    %v2333 = vsub.s32 0, %v2332
    %v2334 = vrot.slane %v2329, %v2333
    %v2335 = vlaneseq
    %v2336 = vshrl.u32 %v2335, 7
    %v2337 = vsub.s32 1, %v2336
    %v2338 = vrot.slane %v2329, %v2337
    %v2339 = vlaneseq
    %v2340 = vshrl.u32 %v2339, 7
    %v2341 = vsub.s32 2, %v2340
    %v2342 = vrot.slane %v2329, %v2341
    %2343 = vrot.lane.b32.xlu0 %v2334, 125
    %v2344 = vpop.permute.xlu0 %2343
    %2345 = vrot.lane.b32.xlu0 %v2338, 125
    %v2346 = vpop.permute.xlu0 %2345
    %2347 = vrot.lane.b32.xlu0 %v2342, 125
    %v2348 = vpop.permute.xlu0 %2347
    %v2349 = vsel %vm684, %v2344, %v2346
    %v2350 = vsel %vm684, %v2346, %v2348
    %v2353 = vsel %vm662, %v2349, 0.0
    %v2354 = vsel %vm663, %v2350, 0.0
    %v2357 = vcombine.low %v2353, %v2354
    %v2359 = vunpack.c.l.s4 1966171168
    %v2360 = vunpack.c.0.s8 %v2359
    %v2361 = vlaneseq
    %v2362 = vshrl.u32 %v2361, 7
    %v2363 = vsub.s32 %v2360, %v2362
    %v2364 = vrot.slane %v2357, %v2363
    %v2366 = vunpack.c.l.s4 1966171168
    %v2367 = vunpack.c.0.s8 %v2366
    %v2368 = vlaneseq
    %v2369 = vshrl.u32 %v2368, 7
    %v2370 = vsub.s32 %v2367, %v2369
    %v2371 = vrot.slane %v2364, %v2370
    %2373 = vst.msk [vmem:[%s756] ss:$8 sm:$0x3] %vm126, %v2371
    %2374 = vst.msk [vmem:[%s756] ss:$8 sm:$0x0] %vm126, %v2371
    %v2375 = vld [vmem:[#allocation2] ss:$8 sm:$0x7]
    %s2376 = sld [smem:[#allocation3]]
    %v2377 = vstv %s2376
    %v2378 = vmul.f32 %v2377, %v2375
    %v2379 = vadd.f32 %v2378, 0.0
    %v2380 = vld [vmem:[%s764] ss:$8 sm:$0x7]
    %s2381 = sld [smem:[#allocation3 + $0x1]]
    %v2382 = vstv %s2381
    %v2383 = vmul.f32 %v2382, %v2380
    %v2384 = vadd.f32 %v2379, %v2383
    %v2385 = vld [vmem:[%s770] ss:$8 sm:$0x7]
    %s2386 = sld [smem:[#allocation3 + $0x2]]
    %v2387 = vstv %s2386
    %v2388 = vmul.f32 %v2387, %v2385
    %v2389 = vadd.f32 %v2384, %v2388
    %v2390 = vld [vmem:[%s157] ss:$8 sm:$0x7]
    %s2391 = sld [smem:[#allocation3 + $0x3]]
    %v2392 = vstv %s2391
    %v2393 = vmul.f32 %v2392, %v2390
    %v2394 = vadd.f32 %v2389, %v2393
    %v2395 = vld [vmem:[%s781] ss:$8 sm:$0x7]
    %s2396 = sld [smem:[#allocation3 + $0x4]]
    %v2397 = vstv %s2396
    %v2398 = vmul.f32 %v2397, %v2395
    %v2399 = vadd.f32 %v2394, %v2398
    %v2400 = vld [vmem:[%s787] ss:$8 sm:$0x7]
    %s2401 = sld [smem:[#allocation3 + $0x5]]
    %v2402 = vstv %s2401
    %v2403 = vmul.f32 %v2402, %v2400
    %v2404 = vadd.f32 %v2399, %v2403
    %v2405 = vld [vmem:[%s793] ss:$8 sm:$0x7]
    %s2406 = sld [smem:[#allocation3 + $0x6]]
    %v2407 = vstv %s2406
    %v2408 = vmul.f32 %v2407, %v2405
    %v2409 = vadd.f32 %v2404, %v2408
    %v2410 = vld [vmem:[%s799] ss:$8 sm:$0x7]
    %s2411 = sld [smem:[#allocation3 + $0x31]]
    %v2412 = vstv %s2411
    %v2413 = vmul.f32 %v2412, %v2410
    %v2414 = vadd.f32 %v2409, %v2413
    %v2415 = vld [vmem:[%s805] ss:$8 sm:$0x7]
    %s2416 = sld [smem:[#allocation3 + $0x32]]
    %v2417 = vstv %s2416
    %v2418 = vmul.f32 %v2417, %v2415
    %v2419 = vadd.f32 %v2414, %v2418
    %v2420 = vld [vmem:[%s811] ss:$8 sm:$0x7]
    %s2421 = sld [smem:[#allocation3 + $0x33]]
    %v2422 = vstv %s2421
    %v2423 = vmul.f32 %v2422, %v2420
    %v2424 = vadd.f32 %v2419, %v2423
    %v2425 = vld [vmem:[%s206] ss:$8 sm:$0x7]
    %s2426 = sld [smem:[#allocation3 + $0x34]]
    %v2427 = vstv %s2426
    %v2428 = vmul.f32 %v2427, %v2425
    %v2429 = vadd.f32 %v2424, %v2428
    %v2430 = vld [vmem:[%s822] ss:$8 sm:$0x7]
    %s2431 = sld [smem:[#allocation3 + $0x35]]
    %v2432 = vstv %s2431
    %v2433 = vmul.f32 %v2432, %v2430
    %v2434 = vadd.f32 %v2429, %v2433
    %v2435 = vld [vmem:[%s828] ss:$8 sm:$0x7]
    %s2436 = sld [smem:[#allocation3 + $0x36]]
    %v2437 = vstv %s2436
    %v2438 = vmul.f32 %v2437, %v2435
    %v2439 = vadd.f32 %v2434, %v2438
    %v2440 = vld [vmem:[%s834] ss:$8 sm:$0x7]
    %s2441 = sld [smem:[#allocation3 + $0x37]]
    %v2442 = vstv %s2441
    %v2443 = vmul.f32 %v2442, %v2440
    %v2444 = vadd.f32 %v2439, %v2443
    %s2445 = sld [smem:[#allocation3 + $0x7]]
    %v2446 = vstv %s2445
    %v2447 = vmul.f32 %v2446, %v2375
    %2449 = vrot.lane.b32.xlu0 %v2447, 112
    %v2450 = vpop.permute.xlu0 %2449
    %v2451 = vrot.slane %v2450, 1
    %v2452 = vsel %vm847, %v2450, %v2451
    %v2454 = vadd.f32 %v2444, %v2452
    %s2455 = sld [smem:[#allocation3 + $0x8]]
    %v2456 = vstv %s2455
    %v2457 = vmul.f32 %v2456, %v2380
    %2459 = vrot.lane.b32.xlu0 %v2457, 112
    %v2460 = vpop.permute.xlu0 %2459
    %v2461 = vrot.slane %v2460, 1
    %v2462 = vsel %vm847, %v2460, %v2461
    %v2464 = vadd.f32 %v2454, %v2462
    %s2465 = sld [smem:[#allocation3 + $0x9]]
    %v2466 = vstv %s2465
    %v2467 = vmul.f32 %v2466, %v2385
    %2469 = vrot.lane.b32.xlu0 %v2467, 112
    %v2470 = vpop.permute.xlu0 %2469
    %v2471 = vrot.slane %v2470, 1
    %v2472 = vsel %vm847, %v2470, %v2471
    %v2474 = vadd.f32 %v2464, %v2472
    %s2475 = sld [smem:[#allocation3 + $0xa]]
    %v2476 = vstv %s2475
    %v2477 = vmul.f32 %v2476, %v2390
    %2479 = vrot.lane.b32.xlu0 %v2477, 112
    %v2480 = vpop.permute.xlu0 %2479
    %v2481 = vrot.slane %v2480, 1
    %v2482 = vsel %vm847, %v2480, %v2481
    %v2484 = vadd.f32 %v2474, %v2482
    %s2485 = sld [smem:[#allocation3 + $0xb]]
    %v2486 = vstv %s2485
    %v2487 = vmul.f32 %v2486, %v2395
    %2489 = vrot.lane.b32.xlu0 %v2487, 112
    %v2490 = vpop.permute.xlu0 %2489
    %v2491 = vrot.slane %v2490, 1
    %v2492 = vsel %vm847, %v2490, %v2491
    %v2494 = vadd.f32 %v2484, %v2492
    %s2495 = sld [smem:[#allocation3 + $0xc]]
    %v2496 = vstv %s2495
    %v2497 = vmul.f32 %v2496, %v2400
    %2499 = vrot.lane.b32.xlu0 %v2497, 112
    %v2500 = vpop.permute.xlu0 %2499
    %v2501 = vrot.slane %v2500, 1
    %v2502 = vsel %vm847, %v2500, %v2501
    %v2504 = vadd.f32 %v2494, %v2502
    %s2505 = sld [smem:[#allocation3 + $0xd]]
    %v2506 = vstv %s2505
    %v2507 = vmul.f32 %v2506, %v2405
    %2509 = vrot.lane.b32.xlu0 %v2507, 112
    %v2510 = vpop.permute.xlu0 %2509
    %v2511 = vrot.slane %v2510, 1
    %v2512 = vsel %vm847, %v2510, %v2511
    %v2514 = vadd.f32 %v2504, %v2512
    %s2515 = sld [smem:[#allocation3 + $0x38]]
    %v2516 = vstv %s2515
    %v2517 = vmul.f32 %v2516, %v2410
    %2519 = vrot.lane.b32.xlu0 %v2517, 112
    %v2520 = vpop.permute.xlu0 %2519
    %v2521 = vrot.slane %v2520, 1
    %v2522 = vsel %vm847, %v2520, %v2521
    %v2524 = vadd.f32 %v2514, %v2522
    %s2525 = sld [smem:[#allocation3 + $0x39]]
    %v2526 = vstv %s2525
    %v2527 = vmul.f32 %v2526, %v2415
    %2529 = vrot.lane.b32.xlu0 %v2527, 112
    %v2530 = vpop.permute.xlu0 %2529
    %v2531 = vrot.slane %v2530, 1
    %v2532 = vsel %vm847, %v2530, %v2531
    %v2534 = vadd.f32 %v2524, %v2532
    %s2535 = sld [smem:[#allocation3 + $0x3a]]
    %v2536 = vstv %s2535
    %v2537 = vmul.f32 %v2536, %v2420
    %2539 = vrot.lane.b32.xlu0 %v2537, 112
    %v2540 = vpop.permute.xlu0 %2539
    %v2541 = vrot.slane %v2540, 1
    %v2542 = vsel %vm847, %v2540, %v2541
    %v2544 = vadd.f32 %v2534, %v2542
    %s2545 = sld [smem:[#allocation3 + $0x3b]]
    %v2546 = vstv %s2545
    %v2547 = vmul.f32 %v2546, %v2425
    %2549 = vrot.lane.b32.xlu0 %v2547, 112
    %v2550 = vpop.permute.xlu0 %2549
    %v2551 = vrot.slane %v2550, 1
    %v2552 = vsel %vm847, %v2550, %v2551
    %v2554 = vadd.f32 %v2544, %v2552
    %s2555 = sld [smem:[#allocation3 + $0x3c]]
    %v2556 = vstv %s2555
    %v2557 = vmul.f32 %v2556, %v2430
    %2559 = vrot.lane.b32.xlu0 %v2557, 112
    %v2560 = vpop.permute.xlu0 %2559
    %v2561 = vrot.slane %v2560, 1
    %v2562 = vsel %vm847, %v2560, %v2561
    %v2564 = vadd.f32 %v2554, %v2562
    %s2565 = sld [smem:[#allocation3 + $0x3d]]
    %v2566 = vstv %s2565
    %v2567 = vmul.f32 %v2566, %v2435
    %2569 = vrot.lane.b32.xlu0 %v2567, 112
    %v2570 = vpop.permute.xlu0 %2569
    %v2571 = vrot.slane %v2570, 1
    %v2572 = vsel %vm847, %v2570, %v2571
    %v2574 = vadd.f32 %v2564, %v2572
    %s2575 = sld [smem:[#allocation3 + $0x3e]]
    %v2576 = vstv %s2575
    %v2577 = vmul.f32 %v2576, %v2440
    %2579 = vrot.lane.b32.xlu0 %v2577, 112
    %v2580 = vpop.permute.xlu0 %2579
    %v2581 = vrot.slane %v2580, 1
    %v2582 = vsel %vm847, %v2580, %v2581
    %v2584 = vadd.f32 %v2574, %v2582
    %s2585 = sld [smem:[#allocation3 + $0xe]]
    %v2586 = vstv %s2585
    %v2587 = vmul.f32 %v2586, %v2375
    %2589 = vrot.lane.b32.xlu0 %v2587, 96
    %v2590 = vpop.permute.xlu0 %2589
    %v2591 = vrot.slane %v2590, 1
    %v2592 = vsel %vm988, %v2590, %v2591
    %v2594 = vadd.f32 %v2584, %v2592
    %s2595 = sld [smem:[#allocation3 + $0xf]]
    %v2596 = vstv %s2595
    %v2597 = vmul.f32 %v2596, %v2380
    %2599 = vrot.lane.b32.xlu0 %v2597, 96
    %v2600 = vpop.permute.xlu0 %2599
    %v2601 = vrot.slane %v2600, 1
    %v2602 = vsel %vm988, %v2600, %v2601
    %v2604 = vadd.f32 %v2594, %v2602
    %s2605 = sld [smem:[#allocation3 + $0x10]]
    %v2606 = vstv %s2605
    %v2607 = vmul.f32 %v2606, %v2385
    %2609 = vrot.lane.b32.xlu0 %v2607, 96
    %v2610 = vpop.permute.xlu0 %2609
    %v2611 = vrot.slane %v2610, 1
    %v2612 = vsel %vm988, %v2610, %v2611
    %v2614 = vadd.f32 %v2604, %v2612
    %s2615 = sld [smem:[#allocation3 + $0x11]]
    %v2616 = vstv %s2615
    %v2617 = vmul.f32 %v2616, %v2390
    %2619 = vrot.lane.b32.xlu0 %v2617, 96
    %v2620 = vpop.permute.xlu0 %2619
    %v2621 = vrot.slane %v2620, 1
    %v2622 = vsel %vm988, %v2620, %v2621
    %v2624 = vadd.f32 %v2614, %v2622
    %s2625 = sld [smem:[#allocation3 + $0x12]]
    %v2626 = vstv %s2625
    %v2627 = vmul.f32 %v2626, %v2395
    %2629 = vrot.lane.b32.xlu0 %v2627, 96
    %v2630 = vpop.permute.xlu0 %2629
    %v2631 = vrot.slane %v2630, 1
    %v2632 = vsel %vm988, %v2630, %v2631
    %v2634 = vadd.f32 %v2624, %v2632
    %s2635 = sld [smem:[#allocation3 + $0x13]]
    %v2636 = vstv %s2635
    %v2637 = vmul.f32 %v2636, %v2400
    %2639 = vrot.lane.b32.xlu0 %v2637, 96
    %v2640 = vpop.permute.xlu0 %2639
    %v2641 = vrot.slane %v2640, 1
    %v2642 = vsel %vm988, %v2640, %v2641
    %v2644 = vadd.f32 %v2634, %v2642
    %s2645 = sld [smem:[#allocation3 + $0x14]]
    %v2646 = vstv %s2645
    %v2647 = vmul.f32 %v2646, %v2405
    %2649 = vrot.lane.b32.xlu0 %v2647, 96
    %v2650 = vpop.permute.xlu0 %2649
    %v2651 = vrot.slane %v2650, 1
    %v2652 = vsel %vm988, %v2650, %v2651
    %v2654 = vadd.f32 %v2644, %v2652
    %s2655 = sld [smem:[#allocation3 + $0x3f]]
    %v2656 = vstv %s2655
    %v2657 = vmul.f32 %v2656, %v2410
    %2659 = vrot.lane.b32.xlu0 %v2657, 96
    %v2660 = vpop.permute.xlu0 %2659
    %v2661 = vrot.slane %v2660, 1
    %v2662 = vsel %vm988, %v2660, %v2661
    %v2664 = vadd.f32 %v2654, %v2662
    %s2665 = sld [smem:[#allocation3 + $0x40]]
    %v2666 = vstv %s2665
    %v2667 = vmul.f32 %v2666, %v2415
    %2669 = vrot.lane.b32.xlu0 %v2667, 96
    %v2670 = vpop.permute.xlu0 %2669
    %v2671 = vrot.slane %v2670, 1
    %v2672 = vsel %vm988, %v2670, %v2671
    %v2674 = vadd.f32 %v2664, %v2672
    %s2675 = sld [smem:[#allocation3 + $0x41]]
    %v2676 = vstv %s2675
    %v2677 = vmul.f32 %v2676, %v2420
    %2679 = vrot.lane.b32.xlu0 %v2677, 96
    %v2680 = vpop.permute.xlu0 %2679
    %v2681 = vrot.slane %v2680, 1
    %v2682 = vsel %vm988, %v2680, %v2681
    %v2684 = vadd.f32 %v2674, %v2682
    %s2685 = sld [smem:[#allocation3 + $0x42]]
    %v2686 = vstv %s2685
    %v2687 = vmul.f32 %v2686, %v2425
    %2689 = vrot.lane.b32.xlu0 %v2687, 96
    %v2690 = vpop.permute.xlu0 %2689
    %v2691 = vrot.slane %v2690, 1
    %v2692 = vsel %vm988, %v2690, %v2691
    %v2694 = vadd.f32 %v2684, %v2692
    %s2695 = sld [smem:[#allocation3 + $0x43]]
    %v2696 = vstv %s2695
    %v2697 = vmul.f32 %v2696, %v2430
    %2699 = vrot.lane.b32.xlu0 %v2697, 96
    %v2700 = vpop.permute.xlu0 %2699
    %v2701 = vrot.slane %v2700, 1
    %v2702 = vsel %vm988, %v2700, %v2701
    %v2704 = vadd.f32 %v2694, %v2702
    %s2705 = sld [smem:[#allocation3 + $0x44]]
    %v2706 = vstv %s2705
    %v2707 = vmul.f32 %v2706, %v2435
    %2709 = vrot.lane.b32.xlu0 %v2707, 96
    %v2710 = vpop.permute.xlu0 %2709
    %v2711 = vrot.slane %v2710, 1
    %v2712 = vsel %vm988, %v2710, %v2711
    %v2714 = vadd.f32 %v2704, %v2712
    %s2715 = sld [smem:[#allocation3 + $0x45]]
    %v2716 = vstv %s2715
    %v2717 = vmul.f32 %v2716, %v2440
    %2719 = vrot.lane.b32.xlu0 %v2717, 96
    %v2720 = vpop.permute.xlu0 %2719
    %v2721 = vrot.slane %v2720, 1
    %v2722 = vsel %vm988, %v2720, %v2721
    %v2724 = vadd.f32 %v2714, %v2722
    %v2725 = vld [vmem:[%s203] ss:$8 sm:$0x3]
    %s2726 = sld [smem:[#allocation3 + $0x15]]
    %v2727 = vstv %s2726
    %v2728 = vmul.f32 %v2727, %v2725
    %2730 = vrot.lane.b32.xlu0 %v2728, 80
    %v2731 = vpop.permute.xlu0 %2730
    %v2732 = vrot.slane %v2731, 7
    %v2733 = vsel %vm1130, %v2732, %v2731
    %v2735 = vadd.f32 %v2724, %v2733
    %v2736 = vld [vmem:[%s305] ss:$8 sm:$0x3]
    %s2737 = sld [smem:[#allocation3 + $0x16]]
    %v2738 = vstv %s2737
    %v2739 = vmul.f32 %v2738, %v2736
    %2741 = vrot.lane.b32.xlu0 %v2739, 80
    %v2742 = vpop.permute.xlu0 %2741
    %v2743 = vrot.slane %v2742, 7
    %v2744 = vsel %vm1130, %v2743, %v2742
    %v2746 = vadd.f32 %v2735, %v2744
    %v2747 = vld [vmem:[%s406] ss:$8 sm:$0x3]
    %s2748 = sld [smem:[#allocation3 + $0x17]]
    %v2749 = vstv %s2748
    %v2750 = vmul.f32 %v2749, %v2747
    %2752 = vrot.lane.b32.xlu0 %v2750, 80
    %v2753 = vpop.permute.xlu0 %2752
    %v2754 = vrot.slane %v2753, 7
    %v2755 = vsel %vm1130, %v2754, %v2753
    %v2757 = vadd.f32 %v2746, %v2755
    %v2758 = vld [vmem:[%s127] ss:$8 sm:$0x3]
    %s2759 = sld [smem:[#allocation3 + $0x18]]
    %v2760 = vstv %s2759
    %v2761 = vmul.f32 %v2760, %v2758
    %2763 = vrot.lane.b32.xlu0 %v2761, 80
    %v2764 = vpop.permute.xlu0 %2763
    %v2765 = vrot.slane %v2764, 7
    %v2766 = vsel %vm1130, %v2765, %v2764
    %v2768 = vadd.f32 %v2757, %v2766
    %v2769 = vld [vmem:[%s507] ss:$8 sm:$0x3]
    %s2770 = sld [smem:[#allocation3 + $0x19]]
    %v2771 = vstv %s2770
    %v2772 = vmul.f32 %v2771, %v2769
    %2774 = vrot.lane.b32.xlu0 %v2772, 80
    %v2775 = vpop.permute.xlu0 %2774
    %v2776 = vrot.slane %v2775, 7
    %v2777 = vsel %vm1130, %v2776, %v2775
    %v2779 = vadd.f32 %v2768, %v2777
    %v2780 = vld [vmem:[%s608] ss:$8 sm:$0x3]
    %s2781 = sld [smem:[#allocation3 + $0x1a]]
    %v2782 = vstv %s2781
    %v2783 = vmul.f32 %v2782, %v2780
    %2785 = vrot.lane.b32.xlu0 %v2783, 80
    %v2786 = vpop.permute.xlu0 %2785
    %v2787 = vrot.slane %v2786, 7
    %v2788 = vsel %vm1130, %v2787, %v2786
    %v2790 = vadd.f32 %v2779, %v2788
    %v2791 = vld [vmem:[%s709] ss:$8 sm:$0x3]
    %s2792 = sld [smem:[#allocation3 + $0x1b]]
    %v2793 = vstv %s2792
    %v2794 = vmul.f32 %v2793, %v2791
    %2796 = vrot.lane.b32.xlu0 %v2794, 80
    %v2797 = vpop.permute.xlu0 %2796
    %v2798 = vrot.slane %v2797, 7
    %v2799 = vsel %vm1130, %v2798, %v2797
    %v2801 = vadd.f32 %v2790, %v2799
    %v2802 = vld [vmem:[%s251] ss:$8 sm:$0x3]
    %s2803 = sld [smem:[#allocation3 + $0x46]]
    %v2804 = vstv %s2803
    %v2805 = vmul.f32 %v2804, %v2802
    %2807 = vrot.lane.b32.xlu0 %v2805, 80
    %v2808 = vpop.permute.xlu0 %2807
    %v2809 = vrot.slane %v2808, 7
    %v2810 = vsel %vm1130, %v2809, %v2808
    %v2812 = vadd.f32 %v2801, %v2810
    %v2813 = vld [vmem:[%s352] ss:$8 sm:$0x3]
    %s2814 = sld [smem:[#allocation3 + $0x47]]
    %v2815 = vstv %s2814
    %v2816 = vmul.f32 %v2815, %v2813
    %2818 = vrot.lane.b32.xlu0 %v2816, 80
    %v2819 = vpop.permute.xlu0 %2818
    %v2820 = vrot.slane %v2819, 7
    %v2821 = vsel %vm1130, %v2820, %v2819
    %v2823 = vadd.f32 %v2812, %v2821
    %v2824 = vld [vmem:[%s453] ss:$8 sm:$0x3]
    %s2825 = sld [smem:[#allocation3 + $0x48]]
    %v2826 = vstv %s2825
    %v2827 = vmul.f32 %v2826, %v2824
    %2829 = vrot.lane.b32.xlu0 %v2827, 80
    %v2830 = vpop.permute.xlu0 %2829
    %v2831 = vrot.slane %v2830, 7
    %v2832 = vsel %vm1130, %v2831, %v2830
    %v2834 = vadd.f32 %v2823, %v2832
    %v2835 = vld [vmem:[%s148] ss:$8 sm:$0x3]
    %s2836 = sld [smem:[#allocation3 + $0x49]]
    %v2837 = vstv %s2836
    %v2838 = vmul.f32 %v2837, %v2835
    %2840 = vrot.lane.b32.xlu0 %v2838, 80
    %v2841 = vpop.permute.xlu0 %2840
    %v2842 = vrot.slane %v2841, 7
    %v2843 = vsel %vm1130, %v2842, %v2841
    %v2845 = vadd.f32 %v2834, %v2843
    %v2846 = vld [vmem:[%s554] ss:$8 sm:$0x3]
    %s2847 = sld [smem:[#allocation3 + $0x4a]]
    %v2848 = vstv %s2847
    %v2849 = vmul.f32 %v2848, %v2846
    %2851 = vrot.lane.b32.xlu0 %v2849, 80
    %v2852 = vpop.permute.xlu0 %2851
    %v2853 = vrot.slane %v2852, 7
    %v2854 = vsel %vm1130, %v2853, %v2852
    %v2856 = vadd.f32 %v2845, %v2854
    %v2857 = vld [vmem:[%s655] ss:$8 sm:$0x3]
    %s2858 = sld [smem:[#allocation3 + $0x4b]]
    %v2859 = vstv %s2858
    %v2860 = vmul.f32 %v2859, %v2857
    %2862 = vrot.lane.b32.xlu0 %v2860, 80
    %v2863 = vpop.permute.xlu0 %2862
    %v2864 = vrot.slane %v2863, 7
    %v2865 = vsel %vm1130, %v2864, %v2863
    %v2867 = vadd.f32 %v2856, %v2865
    %v2868 = vld [vmem:[%s756] ss:$8 sm:$0x3]
    %s2869 = sld [smem:[#allocation3 + $0x4c]]
    %v2870 = vstv %s2869
    %v2871 = vmul.f32 %v2870, %v2868
    %2873 = vrot.lane.b32.xlu0 %v2871, 80
    %v2874 = vpop.permute.xlu0 %2873
    %v2875 = vrot.slane %v2874, 7
    %v2876 = vsel %vm1130, %v2875, %v2874
    %v2878 = vadd.f32 %v2867, %v2876
    %v2879 = vld [vmem:[%s203] ss:$8 sm:$0x7]
    %s2880 = sld [smem:[#allocation3 + $0x1c]]
    %v2881 = vstv %s2880
    %v2882 = vmul.f32 %v2881, %v2879
    %2884 = vrot.lane.b32.xlu0 %v2882, 64
    %v2885 = vpop.permute.xlu0 %2884
    %v2886 = vrot.slane %v2885, 7
    %v2887 = vsel %vm1285, %v2886, %v2885
    %v2889 = vadd.f32 %v2878, %v2887
    %v2890 = vld [vmem:[%s305] ss:$8 sm:$0x7]
    %s2891 = sld [smem:[#allocation3 + $0x1d]]
    %v2892 = vstv %s2891
    %v2893 = vmul.f32 %v2892, %v2890
    %2895 = vrot.lane.b32.xlu0 %v2893, 64
    %v2896 = vpop.permute.xlu0 %2895
    %v2897 = vrot.slane %v2896, 7
    %v2898 = vsel %vm1285, %v2897, %v2896
    %v2900 = vadd.f32 %v2889, %v2898
    %v2901 = vld [vmem:[%s406] ss:$8 sm:$0x7]
    %s2902 = sld [smem:[#allocation3 + $0x1e]]
    %v2903 = vstv %s2902
    %v2904 = vmul.f32 %v2903, %v2901
    %2906 = vrot.lane.b32.xlu0 %v2904, 64
    %v2907 = vpop.permute.xlu0 %2906
    %v2908 = vrot.slane %v2907, 7
    %v2909 = vsel %vm1285, %v2908, %v2907
    %v2911 = vadd.f32 %v2900, %v2909
    %v2912 = vld [vmem:[%s127] ss:$8 sm:$0x7]
    %s2913 = sld [smem:[#allocation3 + $0x1f]]
    %v2914 = vstv %s2913
    %v2915 = vmul.f32 %v2914, %v2912
    %2917 = vrot.lane.b32.xlu0 %v2915, 64
    %v2918 = vpop.permute.xlu0 %2917
    %v2919 = vrot.slane %v2918, 7
    %v2920 = vsel %vm1285, %v2919, %v2918
    %v2922 = vadd.f32 %v2911, %v2920
    %v2923 = vld [vmem:[%s507] ss:$8 sm:$0x7]
    %s2924 = sld [smem:[#allocation3 + $0x20]]
    %v2925 = vstv %s2924
    %v2926 = vmul.f32 %v2925, %v2923
    %2928 = vrot.lane.b32.xlu0 %v2926, 64
    %v2929 = vpop.permute.xlu0 %2928
    %v2930 = vrot.slane %v2929, 7
    %v2931 = vsel %vm1285, %v2930, %v2929
    %v2933 = vadd.f32 %v2922, %v2931
    %v2934 = vld [vmem:[%s608] ss:$8 sm:$0x7]
    %s2935 = sld [smem:[#allocation3 + $0x21]]
    %v2936 = vstv %s2935
    %v2937 = vmul.f32 %v2936, %v2934
    %2939 = vrot.lane.b32.xlu0 %v2937, 64
    %v2940 = vpop.permute.xlu0 %2939
    %v2941 = vrot.slane %v2940, 7
    %v2942 = vsel %vm1285, %v2941, %v2940
    %v2944 = vadd.f32 %v2933, %v2942
    %v2945 = vld [vmem:[%s709] ss:$8 sm:$0x7]
    %s2946 = sld [smem:[#allocation3 + $0x22]]
    %v2947 = vstv %s2946
    %v2948 = vmul.f32 %v2947, %v2945
    %2950 = vrot.lane.b32.xlu0 %v2948, 64
    %v2951 = vpop.permute.xlu0 %2950
    %v2952 = vrot.slane %v2951, 7
    %v2953 = vsel %vm1285, %v2952, %v2951
    %v2955 = vadd.f32 %v2944, %v2953
    %v2956 = vld [vmem:[%s251] ss:$8 sm:$0x7]
    %s2957 = sld [smem:[#allocation3 + $0x4d]]
    %v2958 = vstv %s2957
    %v2959 = vmul.f32 %v2958, %v2956
    %2961 = vrot.lane.b32.xlu0 %v2959, 64
    %v2962 = vpop.permute.xlu0 %2961
    %v2963 = vrot.slane %v2962, 7
    %v2964 = vsel %vm1285, %v2963, %v2962
    %v2966 = vadd.f32 %v2955, %v2964
    %v2967 = vld [vmem:[%s352] ss:$8 sm:$0x7]
    %s2968 = sld [smem:[#allocation3 + $0x4e]]
    %v2969 = vstv %s2968
    %v2970 = vmul.f32 %v2969, %v2967
    %2972 = vrot.lane.b32.xlu0 %v2970, 64
    %v2973 = vpop.permute.xlu0 %2972
    %v2974 = vrot.slane %v2973, 7
    %v2975 = vsel %vm1285, %v2974, %v2973
    %v2977 = vadd.f32 %v2966, %v2975
    %v2978 = vld [vmem:[%s453] ss:$8 sm:$0x7]
    %s2979 = sld [smem:[#allocation3 + $0x4f]]
    %v2980 = vstv %s2979
    %v2981 = vmul.f32 %v2980, %v2978
    %2983 = vrot.lane.b32.xlu0 %v2981, 64
    %v2984 = vpop.permute.xlu0 %2983
    %v2985 = vrot.slane %v2984, 7
    %v2986 = vsel %vm1285, %v2985, %v2984
    %v2988 = vadd.f32 %v2977, %v2986
    %v2989 = vld [vmem:[%s148] ss:$8 sm:$0x7]
    %s2990 = sld [smem:[#allocation3 + $0x50]]
    %v2991 = vstv %s2990
    %v2992 = vmul.f32 %v2991, %v2989
    %2994 = vrot.lane.b32.xlu0 %v2992, 64
    %v2995 = vpop.permute.xlu0 %2994
    %v2996 = vrot.slane %v2995, 7
    %v2997 = vsel %vm1285, %v2996, %v2995
    %v2999 = vadd.f32 %v2988, %v2997
    %v3000 = vld [vmem:[%s554] ss:$8 sm:$0x7]
    %s3001 = sld [smem:[#allocation3 + $0x51]]
    %v3002 = vstv %s3001
    %v3003 = vmul.f32 %v3002, %v3000
    %3005 = vrot.lane.b32.xlu0 %v3003, 64
    %v3006 = vpop.permute.xlu0 %3005
    %v3007 = vrot.slane %v3006, 7
    %v3008 = vsel %vm1285, %v3007, %v3006
    %v3010 = vadd.f32 %v2999, %v3008
    %v3011 = vld [vmem:[%s655] ss:$8 sm:$0x7]
    %s3012 = sld [smem:[#allocation3 + $0x52]]
    %v3013 = vstv %s3012
    %v3014 = vmul.f32 %v3013, %v3011
    %3016 = vrot.lane.b32.xlu0 %v3014, 64
    %v3017 = vpop.permute.xlu0 %3016
    %v3018 = vrot.slane %v3017, 7
    %v3019 = vsel %vm1285, %v3018, %v3017
    %v3021 = vadd.f32 %v3010, %v3019
    %v3022 = vld [vmem:[%s756] ss:$8 sm:$0x7]
    %s3023 = sld [smem:[#allocation3 + $0x53]]
    %v3024 = vstv %s3023
    %v3025 = vmul.f32 %v3024, %v3022
    %3027 = vrot.lane.b32.xlu0 %v3025, 64
    %v3028 = vpop.permute.xlu0 %3027
    %v3029 = vrot.slane %v3028, 7
    %v3030 = vsel %vm1285, %v3029, %v3028
    %v3032 = vadd.f32 %v3021, %v3030
    %s3033 = sld [smem:[#allocation3 + $0x23]]
    %v3034 = vstv %s3033
    %v3035 = vmul.f32 %v3034, %v2879
    %3037 = vrot.lane.b32.xlu0 %v3035, 48
    %v3038 = vpop.permute.xlu0 %3037
    %v3039 = vrot.slane %v3038, 7
    %v3040 = vsel %vm1439, %v3039, %v3038
    %v3042 = vadd.f32 %v3032, %v3040
    %s3043 = sld [smem:[#allocation3 + $0x24]]
    %v3044 = vstv %s3043
    %v3045 = vmul.f32 %v3044, %v2890
    %3047 = vrot.lane.b32.xlu0 %v3045, 48
    %v3048 = vpop.permute.xlu0 %3047
    %v3049 = vrot.slane %v3048, 7
    %v3050 = vsel %vm1439, %v3049, %v3048
    %v3052 = vadd.f32 %v3042, %v3050
    %s3053 = sld [smem:[#allocation3 + $0x25]]
    %v3054 = vstv %s3053
    %v3055 = vmul.f32 %v3054, %v2901
    %3057 = vrot.lane.b32.xlu0 %v3055, 48
    %v3058 = vpop.permute.xlu0 %3057
    %v3059 = vrot.slane %v3058, 7
    %v3060 = vsel %vm1439, %v3059, %v3058
    %v3062 = vadd.f32 %v3052, %v3060
    %s3063 = sld [smem:[#allocation3 + $0x26]]
    %v3064 = vstv %s3063
    %v3065 = vmul.f32 %v3064, %v2912
    %3067 = vrot.lane.b32.xlu0 %v3065, 48
    %v3068 = vpop.permute.xlu0 %3067
    %v3069 = vrot.slane %v3068, 7
    %v3070 = vsel %vm1439, %v3069, %v3068
    %v3072 = vadd.f32 %v3062, %v3070
    %s3073 = sld [smem:[#allocation3 + $0x27]]
    %v3074 = vstv %s3073
    %v3075 = vmul.f32 %v3074, %v2923
    %3077 = vrot.lane.b32.xlu0 %v3075, 48
    %v3078 = vpop.permute.xlu0 %3077
    %v3079 = vrot.slane %v3078, 7
    %v3080 = vsel %vm1439, %v3079, %v3078
    %v3082 = vadd.f32 %v3072, %v3080
    %s3083 = sld [smem:[#allocation3 + $0x28]]
    %v3084 = vstv %s3083
    %v3085 = vmul.f32 %v3084, %v2934
    %3087 = vrot.lane.b32.xlu0 %v3085, 48
    %v3088 = vpop.permute.xlu0 %3087
    %v3089 = vrot.slane %v3088, 7
    %v3090 = vsel %vm1439, %v3089, %v3088
    %v3092 = vadd.f32 %v3082, %v3090
    %s3093 = sld [smem:[#allocation3 + $0x29]]
    %v3094 = vstv %s3093
    %v3095 = vmul.f32 %v3094, %v2945
    %3097 = vrot.lane.b32.xlu0 %v3095, 48
    %v3098 = vpop.permute.xlu0 %3097
    %v3099 = vrot.slane %v3098, 7
    %v3100 = vsel %vm1439, %v3099, %v3098
    %v3102 = vadd.f32 %v3092, %v3100
    %s3103 = sld [smem:[#allocation3 + $0x54]]
    %v3104 = vstv %s3103
    %v3105 = vmul.f32 %v3104, %v2956
    %3107 = vrot.lane.b32.xlu0 %v3105, 48
    %v3108 = vpop.permute.xlu0 %3107
    %v3109 = vrot.slane %v3108, 7
    %v3110 = vsel %vm1439, %v3109, %v3108
    %v3112 = vadd.f32 %v3102, %v3110
    %s3113 = sld [smem:[#allocation3 + $0x55]]
    %v3114 = vstv %s3113
    %v3115 = vmul.f32 %v3114, %v2967
    %3117 = vrot.lane.b32.xlu0 %v3115, 48
    %v3118 = vpop.permute.xlu0 %3117
    %v3119 = vrot.slane %v3118, 7
    %v3120 = vsel %vm1439, %v3119, %v3118
    %v3122 = vadd.f32 %v3112, %v3120
    %s3123 = sld [smem:[#allocation3 + $0x56]]
    %v3124 = vstv %s3123
    %v3125 = vmul.f32 %v3124, %v2978
    %3127 = vrot.lane.b32.xlu0 %v3125, 48
    %v3128 = vpop.permute.xlu0 %3127
    %v3129 = vrot.slane %v3128, 7
    %v3130 = vsel %vm1439, %v3129, %v3128
    %v3132 = vadd.f32 %v3122, %v3130
    %s3133 = sld [smem:[#allocation3 + $0x57]]
    %v3134 = vstv %s3133
    %v3135 = vmul.f32 %v3134, %v2989
    %3137 = vrot.lane.b32.xlu0 %v3135, 48
    %v3138 = vpop.permute.xlu0 %3137
    %v3139 = vrot.slane %v3138, 7
    %v3140 = vsel %vm1439, %v3139, %v3138
    %v3142 = vadd.f32 %v3132, %v3140
    %s3143 = sld [smem:[#allocation3 + $0x58]]
    %v3144 = vstv %s3143
    %v3145 = vmul.f32 %v3144, %v3000
    %3147 = vrot.lane.b32.xlu0 %v3145, 48
    %v3148 = vpop.permute.xlu0 %3147
    %v3149 = vrot.slane %v3148, 7
    %v3150 = vsel %vm1439, %v3149, %v3148
    %v3152 = vadd.f32 %v3142, %v3150
    %s3153 = sld [smem:[#allocation3 + $0x59]]
    %v3154 = vstv %s3153
    %v3155 = vmul.f32 %v3154, %v3011
    %3157 = vrot.lane.b32.xlu0 %v3155, 48
    %v3158 = vpop.permute.xlu0 %3157
    %v3159 = vrot.slane %v3158, 7
    %v3160 = vsel %vm1439, %v3159, %v3158
    %v3162 = vadd.f32 %v3152, %v3160
    %s3163 = sld [smem:[#allocation3 + $0x5a]]
    %v3164 = vstv %s3163
    %v3165 = vmul.f32 %v3164, %v3022
    %3167 = vrot.lane.b32.xlu0 %v3165, 48
    %v3168 = vpop.permute.xlu0 %3167
    %v3169 = vrot.slane %v3168, 7
    %v3170 = vsel %vm1439, %v3169, %v3168
    %v3172 = vadd.f32 %v3162, %v3170
    %s3173 = sld [smem:[#allocation3 + $0x2a]]
    %v3174 = vstv %s3173
    %v3175 = vmul.f32 %v3174, %v2879
    %3177 = vrot.lane.b32.xlu0 %v3175, 32
    %v3178 = vpop.permute.xlu0 %3177
    %v3179 = vrot.slane %v3178, 7
    %v3180 = vsel %vm1580, %v3179, %v3178
    %v3182 = vadd.f32 %v3172, %v3180
    %s3183 = sld [smem:[#allocation3 + $0x2b]]
    %v3184 = vstv %s3183
    %v3185 = vmul.f32 %v3184, %v2890
    %3187 = vrot.lane.b32.xlu0 %v3185, 32
    %v3188 = vpop.permute.xlu0 %3187
    %v3189 = vrot.slane %v3188, 7
    %v3190 = vsel %vm1580, %v3189, %v3188
    %v3192 = vadd.f32 %v3182, %v3190
    %s3193 = sld [smem:[#allocation3 + $0x2c]]
    %v3194 = vstv %s3193
    %v3195 = vmul.f32 %v3194, %v2901
    %3197 = vrot.lane.b32.xlu0 %v3195, 32
    %v3198 = vpop.permute.xlu0 %3197
    %v3199 = vrot.slane %v3198, 7
    %v3200 = vsel %vm1580, %v3199, %v3198
    %v3202 = vadd.f32 %v3192, %v3200
    %s3203 = sld [smem:[#allocation3 + $0x2d]]
    %v3204 = vstv %s3203
    %v3205 = vmul.f32 %v3204, %v2912
    %3207 = vrot.lane.b32.xlu0 %v3205, 32
    %v3208 = vpop.permute.xlu0 %3207
    %v3209 = vrot.slane %v3208, 7
    %v3210 = vsel %vm1580, %v3209, %v3208
    %v3212 = vadd.f32 %v3202, %v3210
    %s3213 = sld [smem:[#allocation3 + $0x2e]]
    %v3214 = vstv %s3213
    %v3215 = vmul.f32 %v3214, %v2923
    %3217 = vrot.lane.b32.xlu0 %v3215, 32
    %v3218 = vpop.permute.xlu0 %3217
    %v3219 = vrot.slane %v3218, 7
    %v3220 = vsel %vm1580, %v3219, %v3218
    %v3222 = vadd.f32 %v3212, %v3220
    %s3223 = sld [smem:[#allocation3 + $0x2f]]
    %v3224 = vstv %s3223
    %v3225 = vmul.f32 %v3224, %v2934
    %3227 = vrot.lane.b32.xlu0 %v3225, 32
    %v3228 = vpop.permute.xlu0 %3227
    %v3229 = vrot.slane %v3228, 7
    %v3230 = vsel %vm1580, %v3229, %v3228
    %v3232 = vadd.f32 %v3222, %v3230
    %s3233 = sld [smem:[#allocation3 + $0x30]]
    %v3234 = vstv %s3233
    %v3235 = vmul.f32 %v3234, %v2945
    %3237 = vrot.lane.b32.xlu0 %v3235, 32
    %v3238 = vpop.permute.xlu0 %3237
    %v3239 = vrot.slane %v3238, 7
    %v3240 = vsel %vm1580, %v3239, %v3238
    %v3242 = vadd.f32 %v3232, %v3240
    %s3243 = sld [smem:[#allocation3 + $0x5b]]
    %v3244 = vstv %s3243
    %v3245 = vmul.f32 %v3244, %v2956
    %3247 = vrot.lane.b32.xlu0 %v3245, 32
    %v3248 = vpop.permute.xlu0 %3247
    %v3249 = vrot.slane %v3248, 7
    %v3250 = vsel %vm1580, %v3249, %v3248
    %v3252 = vadd.f32 %v3242, %v3250
    %s3253 = sld [smem:[#allocation3 + $0x5c]]
    %v3254 = vstv %s3253
    %v3255 = vmul.f32 %v3254, %v2967
    %3257 = vrot.lane.b32.xlu0 %v3255, 32
    %v3258 = vpop.permute.xlu0 %3257
    %v3259 = vrot.slane %v3258, 7
    %v3260 = vsel %vm1580, %v3259, %v3258
    %v3262 = vadd.f32 %v3252, %v3260
    %s3263 = sld [smem:[#allocation3 + $0x5d]]
    %v3264 = vstv %s3263
    %v3265 = vmul.f32 %v3264, %v2978
    %3267 = vrot.lane.b32.xlu0 %v3265, 32
    %v3268 = vpop.permute.xlu0 %3267
    %v3269 = vrot.slane %v3268, 7
    %v3270 = vsel %vm1580, %v3269, %v3268
    %v3272 = vadd.f32 %v3262, %v3270
    %s3273 = sld [smem:[#allocation3 + $0x5e]]
    %v3274 = vstv %s3273
    %v3275 = vmul.f32 %v3274, %v2989
    %3277 = vrot.lane.b32.xlu0 %v3275, 32
    %v3278 = vpop.permute.xlu0 %3277
    %v3279 = vrot.slane %v3278, 7
    %v3280 = vsel %vm1580, %v3279, %v3278
    %v3282 = vadd.f32 %v3272, %v3280
    %s3283 = sld [smem:[#allocation3 + $0x5f]]
    %v3284 = vstv %s3283
    %v3285 = vmul.f32 %v3284, %v3000
    %3287 = vrot.lane.b32.xlu0 %v3285, 32
    %v3288 = vpop.permute.xlu0 %3287
    %v3289 = vrot.slane %v3288, 7
    %v3290 = vsel %vm1580, %v3289, %v3288
    %v3292 = vadd.f32 %v3282, %v3290
    %s3293 = sld [smem:[#allocation3 + $0x60]]
    %v3294 = vstv %s3293
    %v3295 = vmul.f32 %v3294, %v3011
    %3297 = vrot.lane.b32.xlu0 %v3295, 32
    %v3298 = vpop.permute.xlu0 %3297
    %v3299 = vrot.slane %v3298, 7
    %v3300 = vsel %vm1580, %v3299, %v3298
    %v3302 = vadd.f32 %v3292, %v3300
    %s3303 = sld [smem:[#allocation3 + $0x61]]
    %v3304 = vstv %s3303
    %v3305 = vmul.f32 %v3304, %v3022
    %3307 = vrot.lane.b32.xlu0 %v3305, 32
    %v3308 = vpop.permute.xlu0 %3307
    %v3309 = vrot.slane %v3308, 7
    %v3310 = vsel %vm1580, %v3309, %v3308
    %v3312 = vadd.f32 %v3302, %v3310
    %v3313 = vxor.u32 %v3312, 2147483648
    %v3314 = vmul.f32 %v3313, 1.442695
    %v3315 = vpow.pop %v3314
    %v3316 = vadd.f32 %v3315, 1.0
    %v3317 = vrcp.pop %v3316
    %v3318 = vmul.f32 1.0, %v3317
    %v3320 = vlaneseq
    %v3321 = vshrl.u32 %v3320, 7
    %v3322 = vsub.s32 0, %v3321
    %v3323 = vrot.slane %v3318, %v3322
    %v3324 = vlaneseq
    %v3325 = vshrl.u32 %v3324, 7
    %v3326 = vsub.s32 1, %v3325
    %v3327 = vrot.slane %v3318, %v3326
    %v3328 = vlaneseq
    %v3329 = vshrl.u32 %v3328, 7
    %v3330 = vsub.s32 2, %v3329
    %v3331 = vrot.slane %v3318, %v3330
    %v3332 = vld [vmem:[%s1746] sm:$0xff]
    %v3333 = vcombine.low %v3323, %v3327
    %3334 = vrot.lane.b32.xlu0 %v3333, 48
    %v3335 = vpop.permute.xlu0 %3334
    %3336 = vrot.lane.b32.xlu0 %v3331, 48
    %v3337 = vpop.permute.xlu0 %3336
    %v3338 = vrot.slane %v3335, 4
    %v3339 = vrot.slane %v3337, 4
    %v3340 = vsel %vm72, %v3338, %v3339
    %v3341 = vsel %vm1439, %v3335, %v3340
    %v3343 = vmul.f32 %v3332, %v3341
    %s3344 = scalar_lea.vmem [#allocation8], 8
    %3345 = vst [vmem:[%s3344] sm:$0xff] %v3343
    // Predicated region
    $region18: #{tpu_custom_call.1} parent=1 // pred_check
      _
    $region19: #{tpu_custom_call.1} parent=1 // pred_check_branch
      %3347 = sbr.rel (0) target = $region21
    $region20: #{tpu_custom_call.1} parent=1 // pred_region
      %s3349 = ssub.s32 256, 256
      %3350 = vsyncadd [#allocation5], %s3349
      %s3351 = sshll.u32 [#allocation8], 4
      %s3352 = int_to_ptr.vmem [resolvable:$true] %s3351
      %3357 = dma.vmem_to_hbm [thread:$0]  %s3352, 256, %s2, [#allocation5], 128, 128, 8
    $region21: #{tpu_custom_call.1} parent=1 // pred_fallthru
      _
    // Predicated region
    $region22: #{tpu_custom_call.1} parent=1 // pred_check
      _
    $region23: #{tpu_custom_call.1} parent=1 // pred_check_branch
      %3359 = sbr.rel (0) target = $region25
    $region24: #{tpu_custom_call.1} parent=1 // pred_region
      %3360 = dma.done [#allocation5], 256
    $region25: #{tpu_custom_call.1} parent=1 // pred_fallthru
      _
    %3361 = vsyncpa [#allocation4], 1
    %3362 = vsyncpa [#allocation5], 1
    %3363 = vsyncpa [#allocation6], 1

</llo_original>
